<compile_context>
chip_gen: v6e
topology: v6e:2x2x1
jax: 0.10.0
libtpu: 0.0.40
codegen_flags: <defaults>
</compile_context>

<pallas_src>
import math
import functools

import jax
import jax.numpy as jnp
from jax.experimental import pallas as pl
from jax.experimental.pallas import tpu as pltpu

_LANES = 128
_VMEM_CAP_BYTES = 48 * 1024 * 1024   # headroom under v7x's 64 MiB physical VMEM


def _pad_lanes(d):
    return -(-d // _LANES) * _LANES


def _vmem_bytes_estimate(TB, S, L, n, mm_bytes):
    """Rough per-grid-step VMEM working set (lane-padded, incl. double buffers)."""
    SL = S * L
    f32 = 4
    x_in = 2 * TB * SL * _pad_lanes(n) * f32          # double-buffered input block
    proj = TB * SL * _pad_lanes(2 * n) * f32          # fused q|k activations (f32)
    qkmm = 2 * TB * SL * _pad_lanes(n) * mm_bytes     # q3 / k3 score-matmul operands
    sraw = TB * S * L * _pad_lanes(L) * f32           # batched score-matmul output
    sden = 4 * TB * S * L * L * f32                   # lane-dense softmax/epilogue temps
    outb = 2 * TB * SL * f32                          # double-buffered output block
    return x_in + proj + qkmm + sraw + sden + outb


def _pick_batch_block(B, S, L, n, batch_block, mm_bytes):
    """Choose TB (batch rows per grid step) and the padded batch size."""
    if batch_block is not None:
        TB = max(1, min(int(batch_block), B))
    elif B <= 16:
        TB = B                      # single step, no batch padding
    else:
        # ~64 rows/step amortizes the ~0.35us/step pipeline overhead and makes
        # the input DMA MiB-sized; ceil(B/2) keeps NB >= 2 so v7x's two
        # TensorCores both get work on the "parallel" grid axis.
        TB = min(64, -(-B // 2))
    if TB < B and TB % 8 != 0:      # keep sublane-aligned blocks when NB > 1
        TB = min(B, -(-TB // 8) * 8)
    # Back off if the estimated working set would overflow scoped VMEM
    # (matters on v7x's 64 MiB VMEM and for large TB / f32 matmul inputs).
    while TB > 8 and _vmem_bytes_estimate(TB, S, L, n, mm_bytes) > _VMEM_CAP_BYTES:
        TB = max(8, (TB // 2) // 8 * 8)
    NB = -(-B // TB)
    return TB, NB, NB * TB


def _slice_attention_kernel(x_ref, m_ref, w_ref, b_ref, o_ref, *,
                            TB, S, L, n, scale, mm_dtype, approx_recip):
    # x_ref: (TB, S*L, n)  outer, rows flattened (s major, l minor), f32
    # m_ref: (TB, S)       additive mask values (== mask.transpose(1,3))
    # w_ref: (n, 2n)       [Wq^T | Wk^T] in mm_dtype    b_ref: (1, 2n) f32
    # o_ref: (TB, S*L)     lane-dense output block
    SL = S * L
    x = x_ref[...]                                             # (TB, SL, n) f32

    # ---- fused Q/K projection: one MXU matmul over all TB*S*L rows --------
    x2 = x.reshape(TB * SL, n).astype(mm_dtype)
    proj = jnp.dot(x2, w_ref[...], preferred_element_type=jnp.float32)
    qk = jax.nn.sigmoid(proj + b_ref[...])                     # (TB*SL, 2n) f32
    q3 = qk[:, :n].astype(mm_dtype).reshape(TB * S, L, n)
    k3 = qk[:, n:].astype(mm_dtype).reshape(TB * S, L, n)

    # ---- scores (transposed): sT[b*S+s, j, i] = <q_i, k_j> ----------------
    sT = jax.lax.dot_general(
        k3, q3, dimension_numbers=(((2,), (2,)), ((0,), (0,))),
        preferred_element_type=jnp.float32)                    # (TB*S, L, L)

    # ---- lane-dense softmax over S: pack (L, L) -> L*L lanes once ---------
    # lane index = j*L + i, i.e. s_d[b, s, j*L + i] = s[b, s, i, j]
    s_d = sT.reshape(TB, S, L * L) * scale + m_ref[...][:, :, None]
    mx = jnp.max(s_d, axis=1, keepdims=True)                   # max over sequence S
    e = jnp.exp(s_d - mx)
    den = jnp.sum(e, axis=1, keepdims=True)
    attn = e * pl.reciprocal(den, approx=approx_recip)         # (TB, S, L*L)

    # ---- epilogue: out[b,s,i] = sum_j attn[b,s,i,j] * sum_d x[b,s,j,d] ----
    xsum = jnp.sum(x.reshape(TB, S, L, n), axis=-1)            # (TB, S, L)  index j
    xrep = jnp.broadcast_to(xsum[..., None],
                            (TB, S, L, L)).reshape(TB, S, L * L)
    prod = attn * xrep                                         # lane-dense multiply
    out = jnp.sum(prod.reshape(TB, S, L, L), axis=2)           # sum over j -> (TB,S,L)

    # single full-width lane-dense store (no masked 16-lane partial stores)
    o_ref[...] = out.reshape(TB, SL)


def slice_attention(outer, extended_attention_mask, Wq, bq, Wk, bk, *,
                    batch_block=None, matmul_dtype=None):
    """Pallas TPU implementation of SliceAttention.forward.

    outer:                   (B, S, L, n) float32
    extended_attention_mask: (B, 1, 1, S) float32 (additive, BERT-style)
    Wq, Wk: (n, n)  nn.Linear weights (out x in) for `query` / `slice_linear`
    bq, bk: (n,)
    returns (B, S, L) float32
    """
    B, S, L, n = outer.shape
    SL = S * L

    if matmul_dtype is None:
        # bf16 MXU inputs by default (native MXU dtype on v5e/v6e/v7x); all
        # sigmoid / mask / softmax / epilogue math stays in f32.
        matmul_dtype = jnp.bfloat16
    mm_dtype = jnp.dtype(matmul_dtype)
    approx_recip = bool(mm_dtype != jnp.dtype(jnp.float32))

    TB, NB, B_pad = _pick_batch_block(B, S, L, n, batch_block, mm_dtype.itemsize)

    # ---- layout plumbing on the XLA side (free) ----------------------------
    x = outer.reshape(B, SL, n)                       # rows = (s, l)
    # (B,1,1,S) -> (B,S): exactly the values mask.transpose(1,3) broadcasts.
    mask = extended_attention_mask.reshape(B, S)
    if B_pad != B:
        x = jnp.pad(x, ((0, B_pad - B), (0, 0), (0, 0)))
        mask = jnp.pad(mask, ((0, B_pad - B), (0, 0)))

    # Fused projection: x @ [Wq^T | Wk^T] + [bq | bk] -> [q_pre | k_pre]
    W = jnp.concatenate([Wq.T, Wk.T], axis=1).astype(mm_dtype)   # (n, 2n)
    bias = jnp.concatenate([bq, bk]).reshape(1, 2 * n).astype(jnp.float32)

    scale = 1.0 / math.sqrt(57.0)  # matches the reference (intentionally not sqrt(n))

    kernel = functools.partial(_slice_attention_kernel, TB=TB, S=S, L=L, n=n,
                               scale=scale, mm_dtype=mm_dtype,
                               approx_recip=approx_recip)

    # Explicit scoped-VMEM budget: v5e defaults to only 16 MiB, v6e/v7x to
    # 32 MiB; large TB blocks plus f32 intermediates need the raise.
    vmem_limit = int(min(max(1.5 * _vmem_bytes_estimate(TB, S, L, n,
                                                        mm_dtype.itemsize),
                             32 * 1024 * 1024),
                         _VMEM_CAP_BYTES))

    out = pl.pallas_call(
        kernel,
        out_shape=jax.ShapeDtypeStruct((NB, TB, SL), jnp.float32),
        grid=(NB,),
        in_specs=[
            pl.BlockSpec((TB, SL, n), lambda b: (b, 0, 0)),   # outer rows
            pl.BlockSpec((TB, S), lambda b: (b, 0)),          # additive mask (tiny)
            pl.BlockSpec((n, 2 * n), lambda b: (0, 0)),       # fused W (VMEM-resident)
            pl.BlockSpec((1, 2 * n), lambda b: (0, 0)),       # fused bias (resident)
        ],
        out_specs=pl.BlockSpec((None, TB, SL), lambda b: (b, 0, 0)),  # lane-dense
        compiler_params=pltpu.CompilerParams(
            dimension_semantics=("parallel",),
            vmem_limit_bytes=vmem_limit),
    )(x, mask, W, bias)

    return out.reshape(B_pad, SL)[:B].reshape(B, S, L)


def slice_attention_ref(outer, extended_attention_mask, Wq, bq, Wk, bk):
    """Pure-JAX reference mirroring the PyTorch forward exactly."""
    k = jax.nn.sigmoid(jnp.einsum('bsln,mn->bslm', outer, Wk) + bk)
    k = jnp.swapaxes(k, -1, -2)
    q = jax.nn.sigmoid(jnp.einsum('bsln,mn->bslm', outer, Wq) + bq)
    s = jnp.matmul(q, k) / math.sqrt(57.0)
    s = s + jnp.transpose(extended_attention_mask, (0, 3, 2, 1))
    attn = jax.nn.softmax(s, axis=1)
    output = jnp.matmul(attn, outer)
    return output.sum(-1)


if __name__ == "__main__":
    B, S, L, n = 2, 8, 16, 32  # batch, seq, slices, hidden

    key = jax.random.PRNGKey(0)
    k_outer, k_wq, k_bq, k_wk, k_bk = jax.random.split(key, 5)

    outer = jax.random.normal(k_outer, (B, S, L, n), dtype=jnp.float32)

    # Deterministic nn.Linear-style init: U(-1/sqrt(n), 1/sqrt(n))
    bound = 1.0 / math.sqrt(n)
    Wq = jax.random.uniform(k_wq, (n, n), jnp.float32, -bound, bound)
    bq = jax.random.uniform(k_bq, (n,), jnp.float32, -bound, bound)
    Wk = jax.random.uniform(k_wk, (n, n), jnp.float32, -bound, bound)
    bk = jax.random.uniform(k_bk, (n,), jnp.float32, -bound, bound)

    # BERT-style extended attention mask: 0 for valid, -10000 for padded.
    lengths = jnp.array([S, S - 3], dtype=jnp.int32)
    valid = (jnp.arange(S)[None, :] < lengths[:, None]).astype(jnp.float32)
    extended_attention_mask = ((1.0 - valid) * -10000.0).reshape(B, 1, 1, S)

    ref = slice_attention_ref(outer, extended_attention_mask, Wq, bq, Wk, bk)

    # Strict correctness check on the f32 MXU path (exact reciprocal).
    out_f32 = slice_attention(outer, extended_attention_mask, Wq, bq, Wk, bk,
                              matmul_dtype=jnp.float32)
    out_f32 = jax.block_until_ready(out_f32)
    assert out_f32.shape == (B, S, L), out_f32.shape
    assert jnp.allclose(out_f32, ref, atol=1e-4, rtol=1e-4), \
        float(jnp.max(jnp.abs(out_f32 - ref)))

    # Default path (bf16 MXU inputs + approx reciprocal): sanity check only,
    # since bf16 q/k rounding costs ~3 decimal digits.
    out_def = slice_attention(outer, extended_attention_mask, Wq, bq, Wk, bk)
    out_def = jax.block_until_ready(out_def)
    rel = float(jnp.linalg.norm(out_def - ref) / jnp.linalg.norm(ref))
    assert rel < 0.1, rel

    print("KERNEL_OK")
</pallas_src>

<mosaic_0001>
module attributes {stable_mosaic.version = 11 : i64} {
  func.func @_slice_attention_kernel(%arg0: i32, %arg1: memref<2x128x32xf32, #tpu.memory_space<vmem>>, %arg2: memref<2x8xf32, #tpu.memory_space<vmem>>, %arg3: memref<32x64xf32, #tpu.memory_space<vmem>>, %arg4: memref<1x64xf32, #tpu.memory_space<vmem>>, %arg5: memref<1x2x128xf32, #tpu.memory_space<vmem>>) attributes {dimension_semantics = [#tpu.dimension_semantics<parallel>], iteration_bounds = array<i64: 1>, scalar_prefetch = 0 : i64, scratch_operands = 0 : i64, tpu.core_type = #tpu.core_type<tc>, window_params = [{transform_indices = @transform_0, window_bounds = array<i64: 2, 128, 32>}, {transform_indices = @transform_1, window_bounds = array<i64: 2, 8>}, {pipeline_mode = #tpu.pipeline_mode<synchronous>, transform_indices = @transform_2, window_bounds = array<i64: 32, 64>}, {pipeline_mode = #tpu.pipeline_mode<synchronous>, transform_indices = @transform_3, window_bounds = array<i64: 1, 64>}, {transform_indices = @transform_4, window_bounds = array<i64: 1, 2, 128>}]} {
    %c0 = arith.constant 0 : index
    %c0_0 = arith.constant 0 : index
    %c0_1 = arith.constant 0 : index
    %0 = vector.load %arg1[%c0, %c0_0, %c0_1] : memref<2x128x32xf32, #tpu.memory_space<vmem>>, vector<2x128x32xf32>
    %1 = vector.shape_cast %0 : vector<2x128x32xf32> to vector<256x32xf32>
    %c0_2 = arith.constant 0 : index
    %c0_3 = arith.constant 0 : index
    %2 = vector.load %arg3[%c0_2, %c0_3] : memref<32x64xf32, #tpu.memory_space<vmem>>, vector<32x64xf32>
    %cst = arith.constant dense<0.000000e+00> : vector<256x64xf32>
    %3 = tpu.matmul %1, %2, %cst {dimension_numbers = #tpu.dot_dimension_numbers<[1], [0], [0], [1], [0, 0, 1, 1], [], []>} : vector<256x32xf32>, vector<32x64xf32>, vector<256x64xf32> -> vector<256x64xf32>
    %c0_4 = arith.constant 0 : index
    %c0_5 = arith.constant 0 : index
    %4 = vector.load %arg4[%c0_4, %c0_5] : memref<1x64xf32, #tpu.memory_space<vmem>>, vector<1x64xf32>
    %5 = vector.broadcast %4 : vector<1x64xf32> to vector<256x64xf32>
    %6 = arith.addf %3, %5 : vector<256x64xf32>
    %7 = arith.negf %6 : vector<256x64xf32>
    %8 = math.exp %7 : vector<256x64xf32>
    %cst_6 = arith.constant 1.000000e+00 : f32
    %9 = vector.broadcast %cst_6 : f32 to vector<256x64xf32>
    %10 = arith.addf %9, %8 : vector<256x64xf32>
    %11 = arith.divf %9, %10 : vector<256x64xf32>
    %12 = vector.extract_strided_slice %11 {offsets = [0, 0], sizes = [256, 32], strides = [1, 1]} : vector<256x64xf32> to vector<256x32xf32>
    %13 = vector.shape_cast %12 : vector<256x32xf32> to vector<16x16x32xf32>
    %14 = vector.extract_strided_slice %11 {offsets = [0, 32], sizes = [256, 32], strides = [1, 1]} : vector<256x64xf32> to vector<256x32xf32>
    %15 = vector.shape_cast %14 : vector<256x32xf32> to vector<16x16x32xf32>
    %cst_7 = arith.constant dense<0.000000e+00> : vector<16x16x16xf32>
    %16 = tpu.matmul %15, %13, %cst_7 {dimension_numbers = #tpu.dot_dimension_numbers<[2], [2], [1], [1], [0, 0, 0, 1, 1, 1], [0], [0]>} : vector<16x16x32xf32>, vector<16x16x32xf32>, vector<16x16x16xf32> -> vector<16x16x16xf32>
    %17 = vector.shape_cast %16 : vector<16x16x16xf32> to vector<2x8x256xf32>
    %cst_8 = arith.constant 0.132453233 : f32
    %18 = vector.broadcast %cst_8 : f32 to vector<2x8x256xf32>
    %19 = arith.mulf %17, %18 : vector<2x8x256xf32>
    %c0_9 = arith.constant 0 : index
    %c0_10 = arith.constant 0 : index
    %20 = vector.load %arg2[%c0_9, %c0_10] : memref<2x8xf32, #tpu.memory_space<vmem>>, vector<2x8xf32>
    %21 = vector.shape_cast %20 : vector<2x8xf32> to vector<2x8x1xf32>
    %22 = vector.broadcast %21 : vector<2x8x1xf32> to vector<2x8x256xf32>
    %23 = arith.addf %19, %22 : vector<2x8x256xf32>
    %cst_11 = arith.constant dense<0xFF800000> : vector<2x256xf32>
    %24 = vector.multi_reduction <maximumf>, %23, %cst_11 [1] : vector<2x8x256xf32> to vector<2x256xf32>
    %25 = vector.shape_cast %24 : vector<2x256xf32> to vector<2x1x256xf32>
    %26 = vector.broadcast %25 : vector<2x1x256xf32> to vector<2x8x256xf32>
    %27 = arith.subf %23, %26 : vector<2x8x256xf32>
    %28 = math.exp %27 : vector<2x8x256xf32>
    %cst_12 = arith.constant dense<0.000000e+00> : vector<2x256xf32>
    %29 = vector.multi_reduction <add>, %28, %cst_12 [1] : vector<2x8x256xf32> to vector<2x256xf32>
    %30 = vector.shape_cast %29 : vector<2x256xf32> to vector<2x1x256xf32>
    %31 = tpu.reciprocal %30 : vector<2x1x256xf32> -> vector<2x1x256xf32>
    %32 = vector.broadcast %31 : vector<2x1x256xf32> to vector<2x8x256xf32>
    %33 = arith.mulf %28, %32 : vector<2x8x256xf32>
    %34 = vector.shape_cast %0 : vector<2x128x32xf32> to vector<2x8x16x32xf32>
    %cst_13 = arith.constant dense<0.000000e+00> : vector<2x8x16xf32>
    %35 = vector.multi_reduction <add>, %34, %cst_13 [3] : vector<2x8x16x32xf32> to vector<2x8x16xf32>
    %36 = vector.shape_cast %35 : vector<2x8x16xf32> to vector<2x8x16x1xf32>
    %37 = vector.shape_cast %36 : vector<2x8x16x1xf32> to vector<2x8x16x1xf32>
    %38 = vector.broadcast %37 : vector<2x8x16x1xf32> to vector<2x8x16x16xf32>
    %39 = vector.shape_cast %38 : vector<2x8x16x16xf32> to vector<2x8x256xf32>
    %40 = arith.mulf %33, %39 : vector<2x8x256xf32>
    %41 = vector.shape_cast %40 : vector<2x8x256xf32> to vector<2x8x16x16xf32>
    %cst_14 = arith.constant dense<0.000000e+00> : vector<2x8x16xf32>
    %42 = vector.multi_reduction <add>, %41, %cst_14 [2] : vector<2x8x16x16xf32> to vector<2x8x16xf32>
    %43 = vector.shape_cast %42 : vector<2x8x16xf32> to vector<2x128xf32>
    %c0_15 = arith.constant 0 : index
    %c0_16 = arith.constant 0 : index
    %c0_17 = arith.constant 0 : index
    %44 = vector.load %arg5[%c0_15, %c0_16, %c0_17] : memref<1x2x128xf32, #tpu.memory_space<vmem>>, vector<1x2x128xf32>
    %45 = vector.shape_cast %44 : vector<1x2x128xf32> to vector<2x128xf32>
    %46 = vector.shape_cast %43 : vector<2x128xf32> to vector<1x2x128xf32>
    tpu.vector_store %arg5[%c0_15, %c0_16, %c0_17], %46 {strides = array<i32>} : memref<1x2x128xf32, #tpu.memory_space<vmem>>, vector<1x2x128xf32>,
    return
  }
  func.func @transform_0(%arg0: i32) -> (i32, i32, i32) {
    %c0_i32 = arith.constant 0 : i32
    %c0_i32_0 = arith.constant 0 : i32
    %c0_i32_1 = arith.constant 0 : i32
    return %arg0, %c0_i32, %c0_i32_0 : i32, i32, i32
  }
  func.func @transform_1(%arg0: i32) -> (i32, i32) {
    %c0_i32 = arith.constant 0 : i32
    %c0_i32_0 = arith.constant 0 : i32
    return %arg0, %c0_i32 : i32, i32
  }
  func.func @transform_2(%arg0: i32) -> (i32, i32) {
    %c0_i32 = arith.constant 0 : i32
    %c0_i32_0 = arith.constant 0 : i32
    %c0_i32_1 = arith.constant 0 : i32
    return %c0_i32, %c0_i32_0 : i32, i32
  }
  func.func @transform_3(%arg0: i32) -> (i32, i32) {
    %c0_i32 = arith.constant 0 : i32
    %c0_i32_0 = arith.constant 0 : i32
    %c0_i32_1 = arith.constant 0 : i32
    return %c0_i32, %c0_i32_0 : i32, i32
  }
  func.func @transform_4(%arg0: i32) -> (i32, i32, i32) {
    %c0_i32 = arith.constant 0 : i32
    %c0_i32_0 = arith.constant 0 : i32
    %c0_i32_1 = arith.constant 0 : i32
    return %arg0, %c0_i32, %c0_i32_0 : i32, i32, i32
  }
}

</mosaic_0001>

<llo_original>
// kernel: tpu_custom_call.1
$region0: #{tpu_custom_call.1}
  #allocation0 [shape = 'u32[]', space=smem, size = 0x4, offset = 0x4, fixed_abs, tag = 'smem constant byte address 0x4 - core index']
  #allocation1 [shape = 'u32[144,128]{1,0:T(1,128)}', space=vmem, size = 0x12000, scoped, tag = 'internal scratch']
  %s0 = inlined_call_operand.vmem [shape: f32[2,128,32], index: 0, kind: input, shape index: {}]
  %s1 = inlined_call_operand.vmem [shape: f32[2,8], index: 1, kind: input, shape index: {}]
  %s2 = inlined_call_operand.vmem [shape: f32[32,64], index: 2, kind: input, shape index: {}]
  %s3 = inlined_call_operand.vmem [shape: f32[1,64], index: 3, kind: input, shape index: {}]
  %s4 = inlined_call_operand.hbm [shape: f32[1,2,128], index: 4, kind: output, shape index: {}]
  %s5 = sld [smem:[#allocation0]]
  $region26: #{tpu_custom_call.1} parent=0
    _
  %s7 = ssub.s32 1, %s5
  %s8 = scalar_select 0, %s7, %s5
  $region1: #{tpu_custom_call.1} parent=0
    #allocation2 [shape = 'u8[1024]{0}', space=vmem, size = 0x400, scoped, tag = 'output window, operand 0, single buffered']
    #allocation3 [shape = 's32[1]{0}', space=sflag, size = 0x4, scoped, tag = 'scoped memory for tpu_custom_call.1']
    %9 = vsyncpa [#allocation3], 0
    // Predicated region
    $region2: #{tpu_custom_call.1} parent=1 // pred_check
      _
    $region3: #{tpu_custom_call.1} parent=1 // pred_check_branch
      %11 = sbr.rel (0) target = $region5
    $region4: #{tpu_custom_call.1} parent=1 // pred_region
      _
    $region5: #{tpu_custom_call.1} parent=1 // pred_fallthru
      _
    // Predicated region
    $region6: #{tpu_custom_call.1} parent=1 // pred_check
      _
    $region7: #{tpu_custom_call.1} parent=1 // pred_check_branch
      %13 = sbr.rel (0) target = $region9
    $region8: #{tpu_custom_call.1} parent=1 // pred_region
      _
    $region9: #{tpu_custom_call.1} parent=1 // pred_fallthru
      _
    // Predicated region
    $region10: #{tpu_custom_call.1} parent=1 // pred_check
      _
    $region11: #{tpu_custom_call.1} parent=1 // pred_check_branch
      %15 = sbr.rel (0) target = $region13
    $region12: #{tpu_custom_call.1} parent=1 // pred_region
      _
    $region13: #{tpu_custom_call.1} parent=1 // pred_fallthru
      _
    // Predicated region
    $region14: #{tpu_custom_call.1} parent=1 // pred_check
      _
    $region15: #{tpu_custom_call.1} parent=1 // pred_check_branch
      %17 = sbr.rel (0) target = $region17
    $region16: #{tpu_custom_call.1} parent=1 // pred_region
      _
    $region17: #{tpu_custom_call.1} parent=1 // pred_fallthru
      _
    %v18 = vld [vmem:[%s0] sm:$0xff]
    %v19 = vld [vmem:[%s0 + $0x8] sm:$0xff]
    %v20 = vld [vmem:[%s0 + $0x10] sm:$0xff]
    %v21 = vld [vmem:[%s0 + $0x18] sm:$0xff]
    %v22 = vld [vmem:[%s0 + $0x20] sm:$0xff]
    %v23 = vld [vmem:[%s0 + $0x28] sm:$0xff]
    %v24 = vld [vmem:[%s0 + $0x30] sm:$0xff]
    %v25 = vld [vmem:[%s0 + $0x38] sm:$0xff]
    %v26 = vld [vmem:[%s0 + $0x40] sm:$0xff]
    %v27 = vld [vmem:[%s0 + $0x48] sm:$0xff]
    %v28 = vld [vmem:[%s0 + $0x50] sm:$0xff]
    %v29 = vld [vmem:[%s0 + $0x58] sm:$0xff]
    %v30 = vld [vmem:[%s0 + $0x60] sm:$0xff]
    %v31 = vld [vmem:[%s0 + $0x68] sm:$0xff]
    %v32 = vld [vmem:[%s0 + $0x70] sm:$0xff]
    %v33 = vld [vmem:[%s0 + $0x78] sm:$0xff]
    %v34 = vld [vmem:[%s0 + $0x80] sm:$0xff]
    %v35 = vld [vmem:[%s0 + $0x88] sm:$0xff]
    %v36 = vld [vmem:[%s0 + $0x90] sm:$0xff]
    %v37 = vld [vmem:[%s0 + $0x98] sm:$0xff]
    %v38 = vld [vmem:[%s0 + $0xa0] sm:$0xff]
    %v39 = vld [vmem:[%s0 + $0xa8] sm:$0xff]
    %v40 = vld [vmem:[%s0 + $0xb0] sm:$0xff]
    %v41 = vld [vmem:[%s0 + $0xb8] sm:$0xff]
    %v42 = vld [vmem:[%s0 + $0xc0] sm:$0xff]
    %v43 = vld [vmem:[%s0 + $0xc8] sm:$0xff]
    %v44 = vld [vmem:[%s0 + $0xd0] sm:$0xff]
    %v45 = vld [vmem:[%s0 + $0xd8] sm:$0xff]
    %v46 = vld [vmem:[%s0 + $0xe0] sm:$0xff]
    %v47 = vld [vmem:[%s0 + $0xe8] sm:$0xff]
    %v48 = vld [vmem:[%s0 + $0xf0] sm:$0xff]
    %v49 = vld [vmem:[%s0 + $0xf8] sm:$0xff]
    %v50 = vld [vmem:[%s2] sm:$0xff]
    %v51 = vld [vmem:[%s2 + $0x8] sm:$0xff]
    %v52 = vld [vmem:[%s2 + $0x10] sm:$0xff]
    %v53 = vld [vmem:[%s2 + $0x18] sm:$0xff]
    %v54 = vld [vmem:[%s3] sm:$0x1]
    %v56 = vlaneseq
    %v57 = vshrl.u32 %v56, 7
    %v58 = vsub.s32 0, %v57
    %v59 = vrot.slane %v54, %v58
    %vm61 = vcmask 261120
    %v63 = vsel %vm61, %v18, 0
    %v66 = vsel %vm61, %v19, 0
    %v69 = vsel %vm61, %v20, 0
    %v72 = vsel %vm61, %v21, 0
    %v75 = vsel %vm61, %v22, 0
    %v78 = vsel %vm61, %v23, 0
    %v81 = vsel %vm61, %v24, 0
    %v84 = vsel %vm61, %v25, 0
    %v87 = vsel %vm61, %v26, 0
    %v90 = vsel %vm61, %v27, 0
    %v93 = vsel %vm61, %v28, 0
    %v96 = vsel %vm61, %v29, 0
    %v99 = vsel %vm61, %v30, 0
    %v102 = vsel %vm61, %v31, 0
    %v105 = vsel %vm61, %v32, 0
    %v108 = vsel %vm61, %v33, 0
    %v111 = vsel %vm61, %v34, 0
    %v114 = vsel %vm61, %v35, 0
    %v117 = vsel %vm61, %v36, 0
    %v120 = vsel %vm61, %v37, 0
    %v123 = vsel %vm61, %v38, 0
    %v126 = vsel %vm61, %v39, 0
    %v129 = vsel %vm61, %v40, 0
    %v132 = vsel %vm61, %v41, 0
    %v135 = vsel %vm61, %v42, 0
    %v138 = vsel %vm61, %v43, 0
    %v141 = vsel %vm61, %v44, 0
    %v144 = vsel %vm61, %v45, 0
    %v147 = vsel %vm61, %v46, 0
    %v150 = vsel %vm61, %v47, 0
    %v153 = vsel %vm61, %v48, 0
    %v156 = vsel %vm61, %v49, 0
    %158 = vmatprep.subr.mxu0 0.0
    %159 = vmatpush1.msra.mxu0 0.0
    %160 = vmatprep.subr.mxu0 0.0
    %161 = vmatpush1.msra.mxu0 0.0
    %162 = vmatprep.subr.mxu0 0.0
    %163 = vmatpush1.msra.mxu0 0.0
    %164 = vmatprep.subr.mxu0 0.0
    %165 = vmatpush1.msra.mxu0 0.0
    %166 = vmatprep.subr.mxu0 0.0
    %167 = vmatpush1.msra.mxu0 0.0
    %168 = vmatprep.subr.mxu0 0.0
    %169 = vmatpush1.msra.mxu0 0.0
    %170 = vmatprep.subr.mxu0 0.0
    %171 = vmatpush1.msra.mxu0 0.0
    %172 = vmatprep.subr.mxu0 0.0
    %173 = vmatpush1.msra.mxu0 0.0
    %174 = vmatprep.subr.mxu0 0.0
    %175 = vmatpush1.msra.mxu0 0.0
    %176 = vmatprep.subr.mxu0 0.0
    %177 = vmatpush1.msra.mxu0 0.0
    %178 = vmatprep.subr.mxu0 0.0
    %179 = vmatpush1.msra.mxu0 0.0
    %180 = vmatprep.subr.mxu0 0.0
    %181 = vmatpush1.msra.mxu0 0.0
    %182 = vmatprep.subr.mxu0 0.0
    %183 = vmatpush1.msra.mxu0 %v53
    %184 = vmatprep.subr.mxu0 0.0
    %185 = vmatpush1.msra.mxu0 %v52
    %186 = vmatprep.subr.mxu0 0.0
    %187 = vmatpush1.msra.mxu0 %v51
    %188 = vmatprep.subr.mxu0 0.0
    %189 = vmatpush1.msra.mxu0 %v50
    %190 = vmatprep.subr.mxu0 0.0
    %191 = vmatpush2.msra.mxu0 0.0
    %192 = vmatprep.subr.mxu0 0.0
    %193 = vmatpush2.msra.mxu0 0.0
    %194 = vmatprep.subr.mxu0 0.0
    %195 = vmatpush2.msra.mxu0 0.0
    %196 = vmatprep.subr.mxu0 0.0
    %197 = vmatpush2.msra.mxu0 0.0
    %198 = vmatprep.subr.mxu0 0.0
    %199 = vmatpush2.msra.mxu0 0.0
    %200 = vmatprep.subr.mxu0 0.0
    %201 = vmatpush2.msra.mxu0 0.0
    %202 = vmatprep.subr.mxu0 0.0
    %203 = vmatpush2.msra.mxu0 0.0
    %204 = vmatprep.subr.mxu0 0.0
    %205 = vmatpush2.msra.mxu0 0.0
    %206 = vmatprep.subr.mxu0 0.0
    %207 = vmatpush2.msra.mxu0 0.0
    %208 = vmatprep.subr.mxu0 0.0
    %209 = vmatpush2.msra.mxu0 0.0
    %210 = vmatprep.subr.mxu0 0.0
    %211 = vmatpush2.msra.mxu0 0.0
    %212 = vmatprep.subr.mxu0 0.0
    %213 = vmatpush2.msra.mxu0 0.0
    %214 = vmatprep.subr.mxu0 0.0
    %215 = vmatpush2.msra.mxu0 0.0
    %216 = vmatprep.subr.mxu0 0.0
    %217 = vmatpush2.msra.mxu0 0.0
    %218 = vmatprep.subr.mxu0 0.0
    %219 = vmatpush2.msra.mxu0 0.0
    %220 = vmatprep.subr.mxu0 0.0
    %221 = vmatpush2.msra.mxu0 0.0
    %222 = vmatprep.mubr.f32.mxu0 0.0
    %223 = vmatmul.mubr.f32.gmra.mxu0 %v63
    %v224 = vpop.f32.mrf.mxu0
    %v225 = vadd.f32 %v59, %v224
    %v226 = vpop.f32.mrf.mxu0
    %227 = vmatprep.mubr.f32.mxu0 0.0
    %228 = vmatmul.mubr.f32.gmra.mxu0 %v66
    %v229 = vpop.f32.mrf.mxu0
    %v230 = vadd.f32 %v59, %v229
    %v231 = vpop.f32.mrf.mxu0
    %232 = vmatprep.mubr.f32.mxu0 0.0
    %233 = vmatmul.mubr.f32.gmra.mxu0 %v69
    %v234 = vpop.f32.mrf.mxu0
    %v235 = vadd.f32 %v59, %v234
    %v236 = vpop.f32.mrf.mxu0
    %237 = vmatprep.mubr.f32.mxu0 0.0
    %238 = vmatmul.mubr.f32.gmra.mxu0 %v72
    %v239 = vpop.f32.mrf.mxu0
    %v240 = vadd.f32 %v59, %v239
    %v241 = vpop.f32.mrf.mxu0
    %242 = vmatprep.mubr.f32.mxu0 0.0
    %243 = vmatmul.mubr.f32.gmra.mxu0 %v75
    %v244 = vpop.f32.mrf.mxu0
    %v245 = vadd.f32 %v59, %v244
    %v246 = vpop.f32.mrf.mxu0
    %247 = vmatprep.mubr.f32.mxu0 0.0
    %248 = vmatmul.mubr.f32.gmra.mxu0 %v78
    %v249 = vpop.f32.mrf.mxu0
    %v250 = vadd.f32 %v59, %v249
    %v251 = vpop.f32.mrf.mxu0
    %252 = vmatprep.mubr.f32.mxu0 0.0
    %253 = vmatmul.mubr.f32.gmra.mxu0 %v81
    %v254 = vpop.f32.mrf.mxu0
    %v255 = vadd.f32 %v59, %v254
    %v256 = vpop.f32.mrf.mxu0
    %257 = vmatprep.mubr.f32.mxu0 0.0
    %258 = vmatmul.mubr.f32.gmra.mxu0 %v84
    %v259 = vpop.f32.mrf.mxu0
    %v260 = vadd.f32 %v59, %v259
    %v261 = vpop.f32.mrf.mxu0
    %262 = vmatprep.mubr.f32.mxu0 0.0
    %263 = vmatmul.mubr.f32.gmra.mxu0 %v87
    %v264 = vpop.f32.mrf.mxu0
    %v265 = vadd.f32 %v59, %v264
    %v266 = vpop.f32.mrf.mxu0
    %267 = vmatprep.mubr.f32.mxu0 0.0
    %268 = vmatmul.mubr.f32.gmra.mxu0 %v90
    %v269 = vpop.f32.mrf.mxu0
    %v270 = vadd.f32 %v59, %v269
    %v271 = vpop.f32.mrf.mxu0
    %272 = vmatprep.mubr.f32.mxu0 0.0
    %273 = vmatmul.mubr.f32.gmra.mxu0 %v93
    %v274 = vpop.f32.mrf.mxu0
    %v275 = vadd.f32 %v59, %v274
    %v276 = vpop.f32.mrf.mxu0
    %277 = vmatprep.mubr.f32.mxu0 0.0
    %278 = vmatmul.mubr.f32.gmra.mxu0 %v96
    %v279 = vpop.f32.mrf.mxu0
    %v280 = vadd.f32 %v59, %v279
    %v281 = vpop.f32.mrf.mxu0
    %282 = vmatprep.mubr.f32.mxu0 0.0
    %283 = vmatmul.mubr.f32.gmra.mxu0 %v99
    %v284 = vpop.f32.mrf.mxu0
    %v285 = vadd.f32 %v59, %v284
    %v286 = vpop.f32.mrf.mxu0
    %287 = vmatprep.mubr.f32.mxu0 0.0
    %288 = vmatmul.mubr.f32.gmra.mxu0 %v102
    %v289 = vpop.f32.mrf.mxu0
    %v290 = vadd.f32 %v59, %v289
    %v291 = vpop.f32.mrf.mxu0
    %292 = vmatprep.mubr.f32.mxu0 0.0
    %293 = vmatmul.mubr.f32.gmra.mxu0 %v105
    %v294 = vpop.f32.mrf.mxu0
    %v295 = vadd.f32 %v59, %v294
    %v296 = vpop.f32.mrf.mxu0
    %297 = vmatprep.mubr.f32.mxu0 0.0
    %298 = vmatmul.mubr.f32.gmra.mxu0 %v108
    %v299 = vpop.f32.mrf.mxu0
    %v300 = vadd.f32 %v59, %v299
    %v301 = vpop.f32.mrf.mxu0
    %302 = vmatprep.mubr.f32.mxu0 0.0
    %303 = vmatmul.mubr.f32.gmra.mxu0 %v111
    %v304 = vpop.f32.mrf.mxu0
    %v305 = vadd.f32 %v59, %v304
    %v306 = vpop.f32.mrf.mxu0
    %307 = vmatprep.mubr.f32.mxu0 0.0
    %308 = vmatmul.mubr.f32.gmra.mxu0 %v114
    %v309 = vpop.f32.mrf.mxu0
    %v310 = vadd.f32 %v59, %v309
    %v311 = vpop.f32.mrf.mxu0
    %312 = vmatprep.mubr.f32.mxu0 0.0
    %313 = vmatmul.mubr.f32.gmra.mxu0 %v117
    %v314 = vpop.f32.mrf.mxu0
    %v315 = vadd.f32 %v59, %v314
    %v316 = vpop.f32.mrf.mxu0
    %317 = vmatprep.mubr.f32.mxu0 0.0
    %318 = vmatmul.mubr.f32.gmra.mxu0 %v120
    %v319 = vpop.f32.mrf.mxu0
    %v320 = vadd.f32 %v59, %v319
    %v321 = vpop.f32.mrf.mxu0
    %322 = vmatprep.mubr.f32.mxu0 0.0
    %323 = vmatmul.mubr.f32.gmra.mxu0 %v123
    %v324 = vpop.f32.mrf.mxu0
    %v325 = vadd.f32 %v59, %v324
    %v326 = vpop.f32.mrf.mxu0
    %327 = vmatprep.mubr.f32.mxu0 0.0
    %328 = vmatmul.mubr.f32.gmra.mxu0 %v126
    %v329 = vpop.f32.mrf.mxu0
    %v330 = vadd.f32 %v59, %v329
    %v331 = vpop.f32.mrf.mxu0
    %332 = vmatprep.mubr.f32.mxu0 0.0
    %333 = vmatmul.mubr.f32.gmra.mxu0 %v129
    %v334 = vpop.f32.mrf.mxu0
    %v335 = vadd.f32 %v59, %v334
    %v336 = vpop.f32.mrf.mxu0
    %337 = vmatprep.mubr.f32.mxu0 0.0
    %338 = vmatmul.mubr.f32.gmra.mxu0 %v132
    %v339 = vpop.f32.mrf.mxu0
    %v340 = vadd.f32 %v59, %v339
    %v341 = vpop.f32.mrf.mxu0
    %342 = vmatprep.mubr.f32.mxu0 0.0
    %343 = vmatmul.mubr.f32.gmra.mxu0 %v135
    %v344 = vpop.f32.mrf.mxu0
    %v345 = vadd.f32 %v59, %v344
    %v346 = vpop.f32.mrf.mxu0
    %347 = vmatprep.mubr.f32.mxu0 0.0
    %348 = vmatmul.mubr.f32.gmra.mxu0 %v138
    %v349 = vpop.f32.mrf.mxu0
    %v350 = vadd.f32 %v59, %v349
    %v351 = vpop.f32.mrf.mxu0
    %352 = vmatprep.mubr.f32.mxu0 0.0
    %353 = vmatmul.mubr.f32.gmra.mxu0 %v141
    %v354 = vpop.f32.mrf.mxu0
    %v355 = vadd.f32 %v59, %v354
    %v356 = vpop.f32.mrf.mxu0
    %357 = vmatprep.mubr.f32.mxu0 0.0
    %358 = vmatmul.mubr.f32.gmra.mxu0 %v144
    %v359 = vpop.f32.mrf.mxu0
    %v360 = vadd.f32 %v59, %v359
    %v361 = vpop.f32.mrf.mxu0
    %362 = vmatprep.mubr.f32.mxu0 0.0
    %363 = vmatmul.mubr.f32.gmra.mxu0 %v147
    %v364 = vpop.f32.mrf.mxu0
    %v365 = vadd.f32 %v59, %v364
    %v366 = vpop.f32.mrf.mxu0
    %367 = vmatprep.mubr.f32.mxu0 0.0
    %368 = vmatmul.mubr.f32.gmra.mxu0 %v150
    %v369 = vpop.f32.mrf.mxu0
    %v370 = vadd.f32 %v59, %v369
    %v371 = vpop.f32.mrf.mxu0
    %372 = vmatprep.mubr.f32.mxu0 0.0
    %373 = vmatmul.mubr.f32.gmra.mxu0 %v153
    %v374 = vpop.f32.mrf.mxu0
    %v375 = vadd.f32 %v59, %v374
    %v376 = vpop.f32.mrf.mxu0
    %377 = vmatprep.mubr.f32.mxu0 0.0
    %378 = vmatmul.mubr.f32.gmra.mxu0 %v156
    %v379 = vpop.f32.mrf.mxu0
    %v380 = vadd.f32 %v59, %v379
    %v381 = vpop.f32.mrf.mxu0
    %382 = vdwg.mxu0
    %v383 = vxor.u32 %v225, 2147483648
    %v384 = vxor.u32 %v230, 2147483648
    %v385 = vxor.u32 %v235, 2147483648
    %v386 = vxor.u32 %v240, 2147483648
    %v387 = vxor.u32 %v245, 2147483648
    %v388 = vxor.u32 %v250, 2147483648
    %v389 = vxor.u32 %v255, 2147483648
    %v390 = vxor.u32 %v260, 2147483648
    %v391 = vxor.u32 %v265, 2147483648
    %v392 = vxor.u32 %v270, 2147483648
    %v393 = vxor.u32 %v275, 2147483648
    %v394 = vxor.u32 %v280, 2147483648
    %v395 = vxor.u32 %v285, 2147483648
    %v396 = vxor.u32 %v290, 2147483648
    %v397 = vxor.u32 %v295, 2147483648
    %v398 = vxor.u32 %v300, 2147483648
    %v399 = vxor.u32 %v305, 2147483648
    %v400 = vxor.u32 %v310, 2147483648
    %v401 = vxor.u32 %v315, 2147483648
    %v402 = vxor.u32 %v320, 2147483648
    %v403 = vxor.u32 %v325, 2147483648
    %v404 = vxor.u32 %v330, 2147483648
    %v405 = vxor.u32 %v335, 2147483648
    %v406 = vxor.u32 %v340, 2147483648
    %v407 = vxor.u32 %v345, 2147483648
    %v408 = vxor.u32 %v350, 2147483648
    %v409 = vxor.u32 %v355, 2147483648
    %v410 = vxor.u32 %v360, 2147483648
    %v411 = vxor.u32 %v365, 2147483648
    %v412 = vxor.u32 %v370, 2147483648
    %v413 = vxor.u32 %v375, 2147483648
    %v414 = vxor.u32 %v380, 2147483648
    %v415 = vmul.f32 %v383, 1.442695
    %v416 = vpow.pop %v415
    %v417 = vmul.f32 %v384, 1.442695
    %v418 = vpow.pop %v417
    %v419 = vmul.f32 %v385, 1.442695
    %v420 = vpow.pop %v419
    %v421 = vmul.f32 %v386, 1.442695
    %v422 = vpow.pop %v421
    %v423 = vmul.f32 %v387, 1.442695
    %v424 = vpow.pop %v423
    %v425 = vmul.f32 %v388, 1.442695
    %v426 = vpow.pop %v425
    %v427 = vmul.f32 %v389, 1.442695
    %v428 = vpow.pop %v427
    %v429 = vmul.f32 %v390, 1.442695
    %v430 = vpow.pop %v429
    %v431 = vmul.f32 %v391, 1.442695
    %v432 = vpow.pop %v431
    %v433 = vmul.f32 %v392, 1.442695
    %v434 = vpow.pop %v433
    %v435 = vmul.f32 %v393, 1.442695
    %v436 = vpow.pop %v435
    %v437 = vmul.f32 %v394, 1.442695
    %v438 = vpow.pop %v437
    %v439 = vmul.f32 %v395, 1.442695
    %v440 = vpow.pop %v439
    %v441 = vmul.f32 %v396, 1.442695
    %v442 = vpow.pop %v441
    %v443 = vmul.f32 %v397, 1.442695
    %v444 = vpow.pop %v443
    %v445 = vmul.f32 %v398, 1.442695
    %v446 = vpow.pop %v445
    %v447 = vmul.f32 %v399, 1.442695
    %v448 = vpow.pop %v447
    %v449 = vmul.f32 %v400, 1.442695
    %v450 = vpow.pop %v449
    %v451 = vmul.f32 %v401, 1.442695
    %v452 = vpow.pop %v451
    %v453 = vmul.f32 %v402, 1.442695
    %v454 = vpow.pop %v453
    %v455 = vmul.f32 %v403, 1.442695
    %v456 = vpow.pop %v455
    %v457 = vmul.f32 %v404, 1.442695
    %v458 = vpow.pop %v457
    %v459 = vmul.f32 %v405, 1.442695
    %v460 = vpow.pop %v459
    %v461 = vmul.f32 %v406, 1.442695
    %v462 = vpow.pop %v461
    %v463 = vmul.f32 %v407, 1.442695
    %v464 = vpow.pop %v463
    %v465 = vmul.f32 %v408, 1.442695
    %v466 = vpow.pop %v465
    %v467 = vmul.f32 %v409, 1.442695
    %v468 = vpow.pop %v467
    %v469 = vmul.f32 %v410, 1.442695
    %v470 = vpow.pop %v469
    %v471 = vmul.f32 %v411, 1.442695
    %v472 = vpow.pop %v471
    %v473 = vmul.f32 %v412, 1.442695
    %v474 = vpow.pop %v473
    %v475 = vmul.f32 %v413, 1.442695
    %v476 = vpow.pop %v475
    %v477 = vmul.f32 %v414, 1.442695
    %v478 = vpow.pop %v477
    %v479 = vadd.f32 %v416, 1.0
    %v480 = vadd.f32 %v418, 1.0
    %v481 = vadd.f32 %v420, 1.0
    %v482 = vadd.f32 %v422, 1.0
    %v483 = vadd.f32 %v424, 1.0
    %v484 = vadd.f32 %v426, 1.0
    %v485 = vadd.f32 %v428, 1.0
    %v486 = vadd.f32 %v430, 1.0
    %v487 = vadd.f32 %v432, 1.0
    %v488 = vadd.f32 %v434, 1.0
    %v489 = vadd.f32 %v436, 1.0
    %v490 = vadd.f32 %v438, 1.0
    %v491 = vadd.f32 %v440, 1.0
    %v492 = vadd.f32 %v442, 1.0
    %v493 = vadd.f32 %v444, 1.0
    %v494 = vadd.f32 %v446, 1.0
    %v495 = vadd.f32 %v448, 1.0
    %v496 = vadd.f32 %v450, 1.0
    %v497 = vadd.f32 %v452, 1.0
    %v498 = vadd.f32 %v454, 1.0
    %v499 = vadd.f32 %v456, 1.0
    %v500 = vadd.f32 %v458, 1.0
    %v501 = vadd.f32 %v460, 1.0
    %v502 = vadd.f32 %v462, 1.0
    %v503 = vadd.f32 %v464, 1.0
    %v504 = vadd.f32 %v466, 1.0
    %v505 = vadd.f32 %v468, 1.0
    %v506 = vadd.f32 %v470, 1.0
    %v507 = vadd.f32 %v472, 1.0
    %v508 = vadd.f32 %v474, 1.0
    %v509 = vadd.f32 %v476, 1.0
    %v510 = vadd.f32 %v478, 1.0
    %v511 = vrcp.pop %v479
    %v512 = vmul.f32 1.0, %v511
    %v513 = vrcp.pop %v480
    %v514 = vmul.f32 1.0, %v513
    %v515 = vrcp.pop %v481
    %v516 = vmul.f32 1.0, %v515
    %v517 = vrcp.pop %v482
    %v518 = vmul.f32 1.0, %v517
    %v519 = vrcp.pop %v483
    %v520 = vmul.f32 1.0, %v519
    %v521 = vrcp.pop %v484
    %v522 = vmul.f32 1.0, %v521
    %v523 = vrcp.pop %v485
    %v524 = vmul.f32 1.0, %v523
    %v525 = vrcp.pop %v486
    %v526 = vmul.f32 1.0, %v525
    %v527 = vrcp.pop %v487
    %v528 = vmul.f32 1.0, %v527
    %v529 = vrcp.pop %v488
    %v530 = vmul.f32 1.0, %v529
    %v531 = vrcp.pop %v489
    %v532 = vmul.f32 1.0, %v531
    %v533 = vrcp.pop %v490
    %v534 = vmul.f32 1.0, %v533
    %v535 = vrcp.pop %v491
    %v536 = vmul.f32 1.0, %v535
    %v537 = vrcp.pop %v492
    %v538 = vmul.f32 1.0, %v537
    %v539 = vrcp.pop %v493
    %v540 = vmul.f32 1.0, %v539
    %v541 = vrcp.pop %v494
    %v542 = vmul.f32 1.0, %v541
    %v543 = vrcp.pop %v495
    %v544 = vmul.f32 1.0, %v543
    %v545 = vrcp.pop %v496
    %v546 = vmul.f32 1.0, %v545
    %v547 = vrcp.pop %v497
    %v548 = vmul.f32 1.0, %v547
    %v549 = vrcp.pop %v498
    %v550 = vmul.f32 1.0, %v549
    %v551 = vrcp.pop %v499
    %v552 = vmul.f32 1.0, %v551
    %v553 = vrcp.pop %v500
    %v554 = vmul.f32 1.0, %v553
    %v555 = vrcp.pop %v501
    %v556 = vmul.f32 1.0, %v555
    %v557 = vrcp.pop %v502
    %v558 = vmul.f32 1.0, %v557
    %v559 = vrcp.pop %v503
    %v560 = vmul.f32 1.0, %v559
    %v561 = vrcp.pop %v504
    %v562 = vmul.f32 1.0, %v561
    %v563 = vrcp.pop %v505
    %v564 = vmul.f32 1.0, %v563
    %v565 = vrcp.pop %v506
    %v566 = vmul.f32 1.0, %v565
    %v567 = vrcp.pop %v507
    %v568 = vmul.f32 1.0, %v567
    %v569 = vrcp.pop %v508
    %v570 = vmul.f32 1.0, %v569
    %v571 = vrcp.pop %v509
    %v572 = vmul.f32 1.0, %v571
    %v573 = vrcp.pop %v510
    %v574 = vmul.f32 1.0, %v573
    %577 = vrot.lane.b32.xlu0 %v512, 96
    %v578 = vpop.permute.xlu0 %577
    %579 = vrot.lane.b32.xlu0 %v514, 96
    %v580 = vpop.permute.xlu0 %579
    %v581 = vsel %vm61, %v578, 0
    %v583 = vsel %vm61, %v580, 0
    %v585 = vsel %vm61, %v512, 0
    %v587 = vsel %vm61, %v514, 0
    %589 = vmatprep.subr.mxu0 0.0
    %590 = vmatpush1.xpose.msra.mxu0 0.0
    %591 = vmatprep.subr.mxu0 0.0
    %592 = vmatpush1.xpose.msra.mxu0 0.0
    %593 = vmatprep.subr.mxu0 0.0
    %594 = vmatpush1.xpose.msra.mxu0 0.0
    %595 = vmatprep.subr.mxu0 0.0
    %596 = vmatpush1.xpose.msra.mxu0 0.0
    %597 = vmatprep.subr.mxu0 0.0
    %598 = vmatpush1.xpose.msra.mxu0 0.0
    %599 = vmatprep.subr.mxu0 0.0
    %600 = vmatpush1.xpose.msra.mxu0 0.0
    %601 = vmatprep.subr.mxu0 0.0
    %602 = vmatpush1.xpose.msra.mxu0 0.0
    %603 = vmatprep.subr.mxu0 0.0
    %604 = vmatpush1.xpose.msra.mxu0 0.0
    %605 = vmatprep.subr.mxu0 0.0
    %606 = vmatpush1.xpose.msra.mxu0 0.0
    %607 = vmatprep.subr.mxu0 0.0
    %608 = vmatpush1.xpose.msra.mxu0 0.0
    %609 = vmatprep.subr.mxu0 0.0
    %610 = vmatpush1.xpose.msra.mxu0 0.0
    %611 = vmatprep.subr.mxu0 0.0
    %612 = vmatpush1.xpose.msra.mxu0 0.0
    %613 = vmatprep.subr.mxu0 0.0
    %614 = vmatpush1.xpose.msra.mxu0 0.0
    %615 = vmatprep.subr.mxu0 0.0
    %616 = vmatpush1.xpose.msra.mxu0 0.0
    %617 = vmatprep.subr.mxu0 0.0
    %618 = vmatpush1.xpose.msra.mxu0 %v587
    %619 = vmatprep.subr.mxu0 0.0
    %620 = vmatpush1.xpose.msra.mxu0 %v585
    %621 = vmatprep.subr.mxu0 0.0
    %622 = vmatpush2.xpose.msra.mxu0 0.0
    %623 = vmatprep.subr.mxu0 0.0
    %624 = vmatpush2.xpose.msra.mxu0 0.0
    %625 = vmatprep.subr.mxu0 0.0
    %626 = vmatpush2.xpose.msra.mxu0 0.0
    %627 = vmatprep.subr.mxu0 0.0
    %628 = vmatpush2.xpose.msra.mxu0 0.0
    %629 = vmatprep.subr.mxu0 0.0
    %630 = vmatpush2.xpose.msra.mxu0 0.0
    %631 = vmatprep.subr.mxu0 0.0
    %632 = vmatpush2.xpose.msra.mxu0 0.0
    %633 = vmatprep.subr.mxu0 0.0
    %634 = vmatpush2.xpose.msra.mxu0 0.0
    %635 = vmatprep.subr.mxu0 0.0
    %636 = vmatpush2.xpose.msra.mxu0 0.0
    %637 = vmatprep.subr.mxu0 0.0
    %638 = vmatpush2.xpose.msra.mxu0 0.0
    %639 = vmatprep.subr.mxu0 0.0
    %640 = vmatpush2.xpose.msra.mxu0 0.0
    %641 = vmatprep.subr.mxu0 0.0
    %642 = vmatpush2.xpose.msra.mxu0 0.0
    %643 = vmatprep.subr.mxu0 0.0
    %644 = vmatpush2.xpose.msra.mxu0 0.0
    %645 = vmatprep.subr.mxu0 0.0
    %646 = vmatpush2.xpose.msra.mxu0 0.0
    %647 = vmatprep.subr.mxu0 0.0
    %648 = vmatpush2.xpose.msra.mxu0 0.0
    %649 = vmatprep.subr.mxu0 0.0
    %650 = vmatpush2.xpose.msra.mxu0 0.0
    %651 = vmatprep.subr.mxu0 0.0
    %652 = vmatpush2.xpose.msra.mxu0 0.0
    %653 = vmatprep.mubr.f32.mxu0 0.0
    %654 = vmatmul.mubr.f32.gmra.mxu0 %v581
    %v655 = vpop.f32.mrf.mxu0
    %v656 = vadd.f32 0.0, %v655
    %v657 = vpop.f32.mrf.mxu0
    %658 = vmatprep.mubr.f32.mxu0 0.0
    %659 = vmatmul.mubr.f32.gmra.mxu0 %v583
    %v660 = vpop.f32.mrf.mxu0
    %v661 = vadd.f32 0.0, %v660
    %v662 = vpop.f32.mrf.mxu0
    %663 = vdwg.mxu0
    %666 = vrot.lane.b32.xlu0 %v516, 96
    %v667 = vpop.permute.xlu0 %666
    %668 = vrot.lane.b32.xlu0 %v518, 96
    %v669 = vpop.permute.xlu0 %668
    %v670 = vsel %vm61, %v667, 0
    %v672 = vsel %vm61, %v669, 0
    %v674 = vsel %vm61, %v516, 0
    %v676 = vsel %vm61, %v518, 0
    %678 = vmatprep.subr.mxu0 0.0
    %679 = vmatpush1.xpose.msra.mxu0 0.0
    %680 = vmatprep.subr.mxu0 0.0
    %681 = vmatpush1.xpose.msra.mxu0 0.0
    %682 = vmatprep.subr.mxu0 0.0
    %683 = vmatpush1.xpose.msra.mxu0 0.0
    %684 = vmatprep.subr.mxu0 0.0
    %685 = vmatpush1.xpose.msra.mxu0 0.0
    %686 = vmatprep.subr.mxu0 0.0
    %687 = vmatpush1.xpose.msra.mxu0 0.0
    %688 = vmatprep.subr.mxu0 0.0
    %689 = vmatpush1.xpose.msra.mxu0 0.0
    %690 = vmatprep.subr.mxu0 0.0
    %691 = vmatpush1.xpose.msra.mxu0 0.0
    %692 = vmatprep.subr.mxu0 0.0
    %693 = vmatpush1.xpose.msra.mxu0 0.0
    %694 = vmatprep.subr.mxu0 0.0
    %695 = vmatpush1.xpose.msra.mxu0 0.0
    %696 = vmatprep.subr.mxu0 0.0
    %697 = vmatpush1.xpose.msra.mxu0 0.0
    %698 = vmatprep.subr.mxu0 0.0
    %699 = vmatpush1.xpose.msra.mxu0 0.0
    %700 = vmatprep.subr.mxu0 0.0
    %701 = vmatpush1.xpose.msra.mxu0 0.0
    %702 = vmatprep.subr.mxu0 0.0
    %703 = vmatpush1.xpose.msra.mxu0 0.0
    %704 = vmatprep.subr.mxu0 0.0
    %705 = vmatpush1.xpose.msra.mxu0 0.0
    %706 = vmatprep.subr.mxu0 0.0
    %707 = vmatpush1.xpose.msra.mxu0 %v676
    %708 = vmatprep.subr.mxu0 0.0
    %709 = vmatpush1.xpose.msra.mxu0 %v674
    %710 = vmatprep.subr.mxu0 0.0
    %711 = vmatpush2.xpose.msra.mxu0 0.0
    %712 = vmatprep.subr.mxu0 0.0
    %713 = vmatpush2.xpose.msra.mxu0 0.0
    %714 = vmatprep.subr.mxu0 0.0
    %715 = vmatpush2.xpose.msra.mxu0 0.0
    %716 = vmatprep.subr.mxu0 0.0
    %717 = vmatpush2.xpose.msra.mxu0 0.0
    %718 = vmatprep.subr.mxu0 0.0
    %719 = vmatpush2.xpose.msra.mxu0 0.0
    %720 = vmatprep.subr.mxu0 0.0
    %721 = vmatpush2.xpose.msra.mxu0 0.0
    %722 = vmatprep.subr.mxu0 0.0
    %723 = vmatpush2.xpose.msra.mxu0 0.0
    %724 = vmatprep.subr.mxu0 0.0
    %725 = vmatpush2.xpose.msra.mxu0 0.0
    %726 = vmatprep.subr.mxu0 0.0
    %727 = vmatpush2.xpose.msra.mxu0 0.0
    %728 = vmatprep.subr.mxu0 0.0
    %729 = vmatpush2.xpose.msra.mxu0 0.0
    %730 = vmatprep.subr.mxu0 0.0
    %731 = vmatpush2.xpose.msra.mxu0 0.0
    %732 = vmatprep.subr.mxu0 0.0
    %733 = vmatpush2.xpose.msra.mxu0 0.0
    %734 = vmatprep.subr.mxu0 0.0
    %735 = vmatpush2.xpose.msra.mxu0 0.0
    %736 = vmatprep.subr.mxu0 0.0
    %737 = vmatpush2.xpose.msra.mxu0 0.0
    %738 = vmatprep.subr.mxu0 0.0
    %739 = vmatpush2.xpose.msra.mxu0 0.0
    %740 = vmatprep.subr.mxu0 0.0
    %741 = vmatpush2.xpose.msra.mxu0 0.0
    %742 = vmatprep.mubr.f32.mxu0 0.0
    %743 = vmatmul.mubr.f32.gmra.mxu0 %v670
    %v744 = vpop.f32.mrf.mxu0
    %v745 = vadd.f32 0.0, %v744
    %v746 = vpop.f32.mrf.mxu0
    %747 = vmatprep.mubr.f32.mxu0 0.0
    %748 = vmatmul.mubr.f32.gmra.mxu0 %v672
    %v749 = vpop.f32.mrf.mxu0
    %v750 = vadd.f32 0.0, %v749
    %v751 = vpop.f32.mrf.mxu0
    %752 = vdwg.mxu0
    %755 = vrot.lane.b32.xlu0 %v520, 96
    %v756 = vpop.permute.xlu0 %755
    %757 = vrot.lane.b32.xlu0 %v522, 96
    %v758 = vpop.permute.xlu0 %757
    %v759 = vsel %vm61, %v756, 0
    %v761 = vsel %vm61, %v758, 0
    %v763 = vsel %vm61, %v520, 0
    %v765 = vsel %vm61, %v522, 0
    %767 = vmatprep.subr.mxu0 0.0
    %768 = vmatpush1.xpose.msra.mxu0 0.0
    %769 = vmatprep.subr.mxu0 0.0
    %770 = vmatpush1.xpose.msra.mxu0 0.0
    %771 = vmatprep.subr.mxu0 0.0
    %772 = vmatpush1.xpose.msra.mxu0 0.0
    %773 = vmatprep.subr.mxu0 0.0
    %774 = vmatpush1.xpose.msra.mxu0 0.0
    %775 = vmatprep.subr.mxu0 0.0
    %776 = vmatpush1.xpose.msra.mxu0 0.0
    %777 = vmatprep.subr.mxu0 0.0
    %778 = vmatpush1.xpose.msra.mxu0 0.0
    %779 = vmatprep.subr.mxu0 0.0
    %780 = vmatpush1.xpose.msra.mxu0 0.0
    %781 = vmatprep.subr.mxu0 0.0
    %782 = vmatpush1.xpose.msra.mxu0 0.0
    %783 = vmatprep.subr.mxu0 0.0
    %784 = vmatpush1.xpose.msra.mxu0 0.0
    %785 = vmatprep.subr.mxu0 0.0
    %786 = vmatpush1.xpose.msra.mxu0 0.0
    %787 = vmatprep.subr.mxu0 0.0
    %788 = vmatpush1.xpose.msra.mxu0 0.0
    %789 = vmatprep.subr.mxu0 0.0
    %790 = vmatpush1.xpose.msra.mxu0 0.0
    %791 = vmatprep.subr.mxu0 0.0
    %792 = vmatpush1.xpose.msra.mxu0 0.0
    %793 = vmatprep.subr.mxu0 0.0
    %794 = vmatpush1.xpose.msra.mxu0 0.0
    %795 = vmatprep.subr.mxu0 0.0
    %796 = vmatpush1.xpose.msra.mxu0 %v765
    %797 = vmatprep.subr.mxu0 0.0
    %798 = vmatpush1.xpose.msra.mxu0 %v763
    %799 = vmatprep.subr.mxu0 0.0
    %800 = vmatpush2.xpose.msra.mxu0 0.0
    %801 = vmatprep.subr.mxu0 0.0
    %802 = vmatpush2.xpose.msra.mxu0 0.0
    %803 = vmatprep.subr.mxu0 0.0
    %804 = vmatpush2.xpose.msra.mxu0 0.0
    %805 = vmatprep.subr.mxu0 0.0
    %806 = vmatpush2.xpose.msra.mxu0 0.0
    %807 = vmatprep.subr.mxu0 0.0
    %808 = vmatpush2.xpose.msra.mxu0 0.0
    %809 = vmatprep.subr.mxu0 0.0
    %810 = vmatpush2.xpose.msra.mxu0 0.0
    %811 = vmatprep.subr.mxu0 0.0
    %812 = vmatpush2.xpose.msra.mxu0 0.0
    %813 = vmatprep.subr.mxu0 0.0
    %814 = vmatpush2.xpose.msra.mxu0 0.0
    %815 = vmatprep.subr.mxu0 0.0
    %816 = vmatpush2.xpose.msra.mxu0 0.0
    %817 = vmatprep.subr.mxu0 0.0
    %818 = vmatpush2.xpose.msra.mxu0 0.0
    %819 = vmatprep.subr.mxu0 0.0
    %820 = vmatpush2.xpose.msra.mxu0 0.0
    %821 = vmatprep.subr.mxu0 0.0
    %822 = vmatpush2.xpose.msra.mxu0 0.0
    %823 = vmatprep.subr.mxu0 0.0
    %824 = vmatpush2.xpose.msra.mxu0 0.0
    %825 = vmatprep.subr.mxu0 0.0
    %826 = vmatpush2.xpose.msra.mxu0 0.0
    %827 = vmatprep.subr.mxu0 0.0
    %828 = vmatpush2.xpose.msra.mxu0 0.0
    %829 = vmatprep.subr.mxu0 0.0
    %830 = vmatpush2.xpose.msra.mxu0 0.0
    %831 = vmatprep.mubr.f32.mxu0 0.0
    %832 = vmatmul.mubr.f32.gmra.mxu0 %v759
    %v833 = vpop.f32.mrf.mxu0
    %v834 = vadd.f32 0.0, %v833
    %v835 = vpop.f32.mrf.mxu0
    %836 = vmatprep.mubr.f32.mxu0 0.0
    %837 = vmatmul.mubr.f32.gmra.mxu0 %v761
    %v838 = vpop.f32.mrf.mxu0
    %v839 = vadd.f32 0.0, %v838
    %v840 = vpop.f32.mrf.mxu0
    %841 = vdwg.mxu0
    %844 = vrot.lane.b32.xlu0 %v524, 96
    %v845 = vpop.permute.xlu0 %844
    %846 = vrot.lane.b32.xlu0 %v526, 96
    %v847 = vpop.permute.xlu0 %846
    %v848 = vsel %vm61, %v845, 0
    %v850 = vsel %vm61, %v847, 0
    %v852 = vsel %vm61, %v524, 0
    %v854 = vsel %vm61, %v526, 0
    %856 = vmatprep.subr.mxu0 0.0
    %857 = vmatpush1.xpose.msra.mxu0 0.0
    %858 = vmatprep.subr.mxu0 0.0
    %859 = vmatpush1.xpose.msra.mxu0 0.0
    %860 = vmatprep.subr.mxu0 0.0
    %861 = vmatpush1.xpose.msra.mxu0 0.0
    %862 = vmatprep.subr.mxu0 0.0
    %863 = vmatpush1.xpose.msra.mxu0 0.0
    %864 = vmatprep.subr.mxu0 0.0
    %865 = vmatpush1.xpose.msra.mxu0 0.0
    %866 = vmatprep.subr.mxu0 0.0
    %867 = vmatpush1.xpose.msra.mxu0 0.0
    %868 = vmatprep.subr.mxu0 0.0
    %869 = vmatpush1.xpose.msra.mxu0 0.0
    %870 = vmatprep.subr.mxu0 0.0
    %871 = vmatpush1.xpose.msra.mxu0 0.0
    %872 = vmatprep.subr.mxu0 0.0
    %873 = vmatpush1.xpose.msra.mxu0 0.0
    %874 = vmatprep.subr.mxu0 0.0
    %875 = vmatpush1.xpose.msra.mxu0 0.0
    %876 = vmatprep.subr.mxu0 0.0
    %877 = vmatpush1.xpose.msra.mxu0 0.0
    %878 = vmatprep.subr.mxu0 0.0
    %879 = vmatpush1.xpose.msra.mxu0 0.0
    %880 = vmatprep.subr.mxu0 0.0
    %881 = vmatpush1.xpose.msra.mxu0 0.0
    %882 = vmatprep.subr.mxu0 0.0
    %883 = vmatpush1.xpose.msra.mxu0 0.0
    %884 = vmatprep.subr.mxu0 0.0
    %885 = vmatpush1.xpose.msra.mxu0 %v854
    %886 = vmatprep.subr.mxu0 0.0
    %887 = vmatpush1.xpose.msra.mxu0 %v852
    %888 = vmatprep.subr.mxu0 0.0
    %889 = vmatpush2.xpose.msra.mxu0 0.0
    %890 = vmatprep.subr.mxu0 0.0
    %891 = vmatpush2.xpose.msra.mxu0 0.0
    %892 = vmatprep.subr.mxu0 0.0
    %893 = vmatpush2.xpose.msra.mxu0 0.0
    %894 = vmatprep.subr.mxu0 0.0
    %895 = vmatpush2.xpose.msra.mxu0 0.0
    %896 = vmatprep.subr.mxu0 0.0
    %897 = vmatpush2.xpose.msra.mxu0 0.0
    %898 = vmatprep.subr.mxu0 0.0
    %899 = vmatpush2.xpose.msra.mxu0 0.0
    %900 = vmatprep.subr.mxu0 0.0
    %901 = vmatpush2.xpose.msra.mxu0 0.0
    %902 = vmatprep.subr.mxu0 0.0
    %903 = vmatpush2.xpose.msra.mxu0 0.0
    %904 = vmatprep.subr.mxu0 0.0
    %905 = vmatpush2.xpose.msra.mxu0 0.0
    %906 = vmatprep.subr.mxu0 0.0
    %907 = vmatpush2.xpose.msra.mxu0 0.0
    %908 = vmatprep.subr.mxu0 0.0
    %909 = vmatpush2.xpose.msra.mxu0 0.0
    %910 = vmatprep.subr.mxu0 0.0
    %911 = vmatpush2.xpose.msra.mxu0 0.0
    %912 = vmatprep.subr.mxu0 0.0
    %913 = vmatpush2.xpose.msra.mxu0 0.0
    %914 = vmatprep.subr.mxu0 0.0
    %915 = vmatpush2.xpose.msra.mxu0 0.0
    %916 = vmatprep.subr.mxu0 0.0
    %917 = vmatpush2.xpose.msra.mxu0 0.0
    %918 = vmatprep.subr.mxu0 0.0
    %919 = vmatpush2.xpose.msra.mxu0 0.0
    %920 = vmatprep.mubr.f32.mxu0 0.0
    %921 = vmatmul.mubr.f32.gmra.mxu0 %v848
    %v922 = vpop.f32.mrf.mxu0
    %v923 = vadd.f32 0.0, %v922
    %v924 = vpop.f32.mrf.mxu0
    %925 = vmatprep.mubr.f32.mxu0 0.0
    %926 = vmatmul.mubr.f32.gmra.mxu0 %v850
    %v927 = vpop.f32.mrf.mxu0
    %v928 = vadd.f32 0.0, %v927
    %v929 = vpop.f32.mrf.mxu0
    %930 = vdwg.mxu0
    %933 = vrot.lane.b32.xlu0 %v528, 96
    %v934 = vpop.permute.xlu0 %933
    %935 = vrot.lane.b32.xlu0 %v530, 96
    %v936 = vpop.permute.xlu0 %935
    %v937 = vsel %vm61, %v934, 0
    %v939 = vsel %vm61, %v936, 0
    %v941 = vsel %vm61, %v528, 0
    %v943 = vsel %vm61, %v530, 0
    %945 = vmatprep.subr.mxu0 0.0
    %946 = vmatpush1.xpose.msra.mxu0 0.0
    %947 = vmatprep.subr.mxu0 0.0
    %948 = vmatpush1.xpose.msra.mxu0 0.0
    %949 = vmatprep.subr.mxu0 0.0
    %950 = vmatpush1.xpose.msra.mxu0 0.0
    %951 = vmatprep.subr.mxu0 0.0
    %952 = vmatpush1.xpose.msra.mxu0 0.0
    %953 = vmatprep.subr.mxu0 0.0
    %954 = vmatpush1.xpose.msra.mxu0 0.0
    %955 = vmatprep.subr.mxu0 0.0
    %956 = vmatpush1.xpose.msra.mxu0 0.0
    %957 = vmatprep.subr.mxu0 0.0
    %958 = vmatpush1.xpose.msra.mxu0 0.0
    %959 = vmatprep.subr.mxu0 0.0
    %960 = vmatpush1.xpose.msra.mxu0 0.0
    %961 = vmatprep.subr.mxu0 0.0
    %962 = vmatpush1.xpose.msra.mxu0 0.0
    %963 = vmatprep.subr.mxu0 0.0
    %964 = vmatpush1.xpose.msra.mxu0 0.0
    %965 = vmatprep.subr.mxu0 0.0
    %966 = vmatpush1.xpose.msra.mxu0 0.0
    %967 = vmatprep.subr.mxu0 0.0
    %968 = vmatpush1.xpose.msra.mxu0 0.0
    %969 = vmatprep.subr.mxu0 0.0
    %970 = vmatpush1.xpose.msra.mxu0 0.0
    %971 = vmatprep.subr.mxu0 0.0
    %972 = vmatpush1.xpose.msra.mxu0 0.0
    %973 = vmatprep.subr.mxu0 0.0
    %974 = vmatpush1.xpose.msra.mxu0 %v943
    %975 = vmatprep.subr.mxu0 0.0
    %976 = vmatpush1.xpose.msra.mxu0 %v941
    %977 = vmatprep.subr.mxu0 0.0
    %978 = vmatpush2.xpose.msra.mxu0 0.0
    %979 = vmatprep.subr.mxu0 0.0
    %980 = vmatpush2.xpose.msra.mxu0 0.0
    %981 = vmatprep.subr.mxu0 0.0
    %982 = vmatpush2.xpose.msra.mxu0 0.0
    %983 = vmatprep.subr.mxu0 0.0
    %984 = vmatpush2.xpose.msra.mxu0 0.0
    %985 = vmatprep.subr.mxu0 0.0
    %986 = vmatpush2.xpose.msra.mxu0 0.0
    %987 = vmatprep.subr.mxu0 0.0
    %988 = vmatpush2.xpose.msra.mxu0 0.0
    %989 = vmatprep.subr.mxu0 0.0
    %990 = vmatpush2.xpose.msra.mxu0 0.0
    %991 = vmatprep.subr.mxu0 0.0
    %992 = vmatpush2.xpose.msra.mxu0 0.0
    %993 = vmatprep.subr.mxu0 0.0
    %994 = vmatpush2.xpose.msra.mxu0 0.0
    %995 = vmatprep.subr.mxu0 0.0
    %996 = vmatpush2.xpose.msra.mxu0 0.0
    %997 = vmatprep.subr.mxu0 0.0
    %998 = vmatpush2.xpose.msra.mxu0 0.0
    %999 = vmatprep.subr.mxu0 0.0
    %1000 = vmatpush2.xpose.msra.mxu0 0.0
    %1001 = vmatprep.subr.mxu0 0.0
    %1002 = vmatpush2.xpose.msra.mxu0 0.0
    %1003 = vmatprep.subr.mxu0 0.0
    %1004 = vmatpush2.xpose.msra.mxu0 0.0
    %1005 = vmatprep.subr.mxu0 0.0
    %1006 = vmatpush2.xpose.msra.mxu0 0.0
    %1007 = vmatprep.subr.mxu0 0.0
    %1008 = vmatpush2.xpose.msra.mxu0 0.0
    %1009 = vmatprep.mubr.f32.mxu0 0.0
    %1010 = vmatmul.mubr.f32.gmra.mxu0 %v937
    %v1011 = vpop.f32.mrf.mxu0
    %v1012 = vadd.f32 0.0, %v1011
    %v1013 = vpop.f32.mrf.mxu0
    %1014 = vmatprep.mubr.f32.mxu0 0.0
    %1015 = vmatmul.mubr.f32.gmra.mxu0 %v939
    %v1016 = vpop.f32.mrf.mxu0
    %v1017 = vadd.f32 0.0, %v1016
    %v1018 = vpop.f32.mrf.mxu0
    %1019 = vdwg.mxu0
    %1022 = vrot.lane.b32.xlu0 %v532, 96
    %v1023 = vpop.permute.xlu0 %1022
    %1024 = vrot.lane.b32.xlu0 %v534, 96
    %v1025 = vpop.permute.xlu0 %1024
    %v1026 = vsel %vm61, %v1023, 0
    %v1028 = vsel %vm61, %v1025, 0
    %v1030 = vsel %vm61, %v532, 0
    %v1032 = vsel %vm61, %v534, 0
    %1034 = vmatprep.subr.mxu0 0.0
    %1035 = vmatpush1.xpose.msra.mxu0 0.0
    %1036 = vmatprep.subr.mxu0 0.0
    %1037 = vmatpush1.xpose.msra.mxu0 0.0
    %1038 = vmatprep.subr.mxu0 0.0
    %1039 = vmatpush1.xpose.msra.mxu0 0.0
    %1040 = vmatprep.subr.mxu0 0.0
    %1041 = vmatpush1.xpose.msra.mxu0 0.0
    %1042 = vmatprep.subr.mxu0 0.0
    %1043 = vmatpush1.xpose.msra.mxu0 0.0
    %1044 = vmatprep.subr.mxu0 0.0
    %1045 = vmatpush1.xpose.msra.mxu0 0.0
    %1046 = vmatprep.subr.mxu0 0.0
    %1047 = vmatpush1.xpose.msra.mxu0 0.0
    %1048 = vmatprep.subr.mxu0 0.0
    %1049 = vmatpush1.xpose.msra.mxu0 0.0
    %1050 = vmatprep.subr.mxu0 0.0
    %1051 = vmatpush1.xpose.msra.mxu0 0.0
    %1052 = vmatprep.subr.mxu0 0.0
    %1053 = vmatpush1.xpose.msra.mxu0 0.0
    %1054 = vmatprep.subr.mxu0 0.0
    %1055 = vmatpush1.xpose.msra.mxu0 0.0
    %1056 = vmatprep.subr.mxu0 0.0
    %1057 = vmatpush1.xpose.msra.mxu0 0.0
    %1058 = vmatprep.subr.mxu0 0.0
    %1059 = vmatpush1.xpose.msra.mxu0 0.0
    %1060 = vmatprep.subr.mxu0 0.0
    %1061 = vmatpush1.xpose.msra.mxu0 0.0
    %1062 = vmatprep.subr.mxu0 0.0
    %1063 = vmatpush1.xpose.msra.mxu0 %v1032
    %1064 = vmatprep.subr.mxu0 0.0
    %1065 = vmatpush1.xpose.msra.mxu0 %v1030
    %1066 = vmatprep.subr.mxu0 0.0
    %1067 = vmatpush2.xpose.msra.mxu0 0.0
    %1068 = vmatprep.subr.mxu0 0.0
    %1069 = vmatpush2.xpose.msra.mxu0 0.0
    %1070 = vmatprep.subr.mxu0 0.0
    %1071 = vmatpush2.xpose.msra.mxu0 0.0
    %1072 = vmatprep.subr.mxu0 0.0
    %1073 = vmatpush2.xpose.msra.mxu0 0.0
    %1074 = vmatprep.subr.mxu0 0.0
    %1075 = vmatpush2.xpose.msra.mxu0 0.0
    %1076 = vmatprep.subr.mxu0 0.0
    %1077 = vmatpush2.xpose.msra.mxu0 0.0
    %1078 = vmatprep.subr.mxu0 0.0
    %1079 = vmatpush2.xpose.msra.mxu0 0.0
    %1080 = vmatprep.subr.mxu0 0.0
    %1081 = vmatpush2.xpose.msra.mxu0 0.0
    %1082 = vmatprep.subr.mxu0 0.0
    %1083 = vmatpush2.xpose.msra.mxu0 0.0
    %1084 = vmatprep.subr.mxu0 0.0
    %1085 = vmatpush2.xpose.msra.mxu0 0.0
    %1086 = vmatprep.subr.mxu0 0.0
    %1087 = vmatpush2.xpose.msra.mxu0 0.0
    %1088 = vmatprep.subr.mxu0 0.0
    %1089 = vmatpush2.xpose.msra.mxu0 0.0
    %1090 = vmatprep.subr.mxu0 0.0
    %1091 = vmatpush2.xpose.msra.mxu0 0.0
    %1092 = vmatprep.subr.mxu0 0.0
    %1093 = vmatpush2.xpose.msra.mxu0 0.0
    %1094 = vmatprep.subr.mxu0 0.0
    %1095 = vmatpush2.xpose.msra.mxu0 0.0
    %1096 = vmatprep.subr.mxu0 0.0
    %1097 = vmatpush2.xpose.msra.mxu0 0.0
    %1098 = vmatprep.mubr.f32.mxu0 0.0
    %1099 = vmatmul.mubr.f32.gmra.mxu0 %v1026
    %v1100 = vpop.f32.mrf.mxu0
    %v1101 = vadd.f32 0.0, %v1100
    %v1102 = vpop.f32.mrf.mxu0
    %1103 = vmatprep.mubr.f32.mxu0 0.0
    %1104 = vmatmul.mubr.f32.gmra.mxu0 %v1028
    %v1105 = vpop.f32.mrf.mxu0
    %v1106 = vadd.f32 0.0, %v1105
    %v1107 = vpop.f32.mrf.mxu0
    %1108 = vdwg.mxu0
    %1111 = vrot.lane.b32.xlu0 %v536, 96
    %v1112 = vpop.permute.xlu0 %1111
    %1113 = vrot.lane.b32.xlu0 %v538, 96
    %v1114 = vpop.permute.xlu0 %1113
    %v1115 = vsel %vm61, %v1112, 0
    %v1117 = vsel %vm61, %v1114, 0
    %v1119 = vsel %vm61, %v536, 0
    %v1121 = vsel %vm61, %v538, 0
    %1123 = vmatprep.subr.mxu0 0.0
    %1124 = vmatpush1.xpose.msra.mxu0 0.0
    %1125 = vmatprep.subr.mxu0 0.0
    %1126 = vmatpush1.xpose.msra.mxu0 0.0
    %1127 = vmatprep.subr.mxu0 0.0
    %1128 = vmatpush1.xpose.msra.mxu0 0.0
    %1129 = vmatprep.subr.mxu0 0.0
    %1130 = vmatpush1.xpose.msra.mxu0 0.0
    %1131 = vmatprep.subr.mxu0 0.0
    %1132 = vmatpush1.xpose.msra.mxu0 0.0
    %1133 = vmatprep.subr.mxu0 0.0
    %1134 = vmatpush1.xpose.msra.mxu0 0.0
    %1135 = vmatprep.subr.mxu0 0.0
    %1136 = vmatpush1.xpose.msra.mxu0 0.0
    %1137 = vmatprep.subr.mxu0 0.0
    %1138 = vmatpush1.xpose.msra.mxu0 0.0
    %1139 = vmatprep.subr.mxu0 0.0
    %1140 = vmatpush1.xpose.msra.mxu0 0.0
    %1141 = vmatprep.subr.mxu0 0.0
    %1142 = vmatpush1.xpose.msra.mxu0 0.0
    %1143 = vmatprep.subr.mxu0 0.0
    %1144 = vmatpush1.xpose.msra.mxu0 0.0
    %1145 = vmatprep.subr.mxu0 0.0
    %1146 = vmatpush1.xpose.msra.mxu0 0.0
    %1147 = vmatprep.subr.mxu0 0.0
    %1148 = vmatpush1.xpose.msra.mxu0 0.0
    %1149 = vmatprep.subr.mxu0 0.0
    %1150 = vmatpush1.xpose.msra.mxu0 0.0
    %1151 = vmatprep.subr.mxu0 0.0
    %1152 = vmatpush1.xpose.msra.mxu0 %v1121
    %1153 = vmatprep.subr.mxu0 0.0
    %1154 = vmatpush1.xpose.msra.mxu0 %v1119
    %1155 = vmatprep.subr.mxu0 0.0
    %1156 = vmatpush2.xpose.msra.mxu0 0.0
    %1157 = vmatprep.subr.mxu0 0.0
    %1158 = vmatpush2.xpose.msra.mxu0 0.0
    %1159 = vmatprep.subr.mxu0 0.0
    %1160 = vmatpush2.xpose.msra.mxu0 0.0
    %1161 = vmatprep.subr.mxu0 0.0
    %1162 = vmatpush2.xpose.msra.mxu0 0.0
    %1163 = vmatprep.subr.mxu0 0.0
    %1164 = vmatpush2.xpose.msra.mxu0 0.0
    %1165 = vmatprep.subr.mxu0 0.0
    %1166 = vmatpush2.xpose.msra.mxu0 0.0
    %1167 = vmatprep.subr.mxu0 0.0
    %1168 = vmatpush2.xpose.msra.mxu0 0.0
    %1169 = vmatprep.subr.mxu0 0.0
    %1170 = vmatpush2.xpose.msra.mxu0 0.0
    %1171 = vmatprep.subr.mxu0 0.0
    %1172 = vmatpush2.xpose.msra.mxu0 0.0
    %1173 = vmatprep.subr.mxu0 0.0
    %1174 = vmatpush2.xpose.msra.mxu0 0.0
    %1175 = vmatprep.subr.mxu0 0.0
    %1176 = vmatpush2.xpose.msra.mxu0 0.0
    %1177 = vmatprep.subr.mxu0 0.0
    %1178 = vmatpush2.xpose.msra.mxu0 0.0
    %1179 = vmatprep.subr.mxu0 0.0
    %1180 = vmatpush2.xpose.msra.mxu0 0.0
    %1181 = vmatprep.subr.mxu0 0.0
    %1182 = vmatpush2.xpose.msra.mxu0 0.0
    %1183 = vmatprep.subr.mxu0 0.0
    %1184 = vmatpush2.xpose.msra.mxu0 0.0
    %1185 = vmatprep.subr.mxu0 0.0
    %1186 = vmatpush2.xpose.msra.mxu0 0.0
    %1187 = vmatprep.mubr.f32.mxu0 0.0
    %1188 = vmatmul.mubr.f32.gmra.mxu0 %v1115
    %v1189 = vpop.f32.mrf.mxu0
    %v1190 = vadd.f32 0.0, %v1189
    %v1191 = vpop.f32.mrf.mxu0
    %1192 = vmatprep.mubr.f32.mxu0 0.0
    %1193 = vmatmul.mubr.f32.gmra.mxu0 %v1117
    %v1194 = vpop.f32.mrf.mxu0
    %v1195 = vadd.f32 0.0, %v1194
    %v1196 = vpop.f32.mrf.mxu0
    %1197 = vdwg.mxu0
    %1200 = vrot.lane.b32.xlu0 %v540, 96
    %v1201 = vpop.permute.xlu0 %1200
    %1202 = vrot.lane.b32.xlu0 %v542, 96
    %v1203 = vpop.permute.xlu0 %1202
    %v1204 = vsel %vm61, %v1201, 0
    %v1206 = vsel %vm61, %v1203, 0
    %v1208 = vsel %vm61, %v540, 0
    %v1210 = vsel %vm61, %v542, 0
    %1212 = vmatprep.subr.mxu0 0.0
    %1213 = vmatpush1.xpose.msra.mxu0 0.0
    %1214 = vmatprep.subr.mxu0 0.0
    %1215 = vmatpush1.xpose.msra.mxu0 0.0
    %1216 = vmatprep.subr.mxu0 0.0
    %1217 = vmatpush1.xpose.msra.mxu0 0.0
    %1218 = vmatprep.subr.mxu0 0.0
    %1219 = vmatpush1.xpose.msra.mxu0 0.0
    %1220 = vmatprep.subr.mxu0 0.0
    %1221 = vmatpush1.xpose.msra.mxu0 0.0
    %1222 = vmatprep.subr.mxu0 0.0
    %1223 = vmatpush1.xpose.msra.mxu0 0.0
    %1224 = vmatprep.subr.mxu0 0.0
    %1225 = vmatpush1.xpose.msra.mxu0 0.0
    %1226 = vmatprep.subr.mxu0 0.0
    %1227 = vmatpush1.xpose.msra.mxu0 0.0
    %1228 = vmatprep.subr.mxu0 0.0
    %1229 = vmatpush1.xpose.msra.mxu0 0.0
    %1230 = vmatprep.subr.mxu0 0.0
    %1231 = vmatpush1.xpose.msra.mxu0 0.0
    %1232 = vmatprep.subr.mxu0 0.0
    %1233 = vmatpush1.xpose.msra.mxu0 0.0
    %1234 = vmatprep.subr.mxu0 0.0
    %1235 = vmatpush1.xpose.msra.mxu0 0.0
    %1236 = vmatprep.subr.mxu0 0.0
    %1237 = vmatpush1.xpose.msra.mxu0 0.0
    %1238 = vmatprep.subr.mxu0 0.0
    %1239 = vmatpush1.xpose.msra.mxu0 0.0
    %1240 = vmatprep.subr.mxu0 0.0
    %1241 = vmatpush1.xpose.msra.mxu0 %v1210
    %1242 = vmatprep.subr.mxu0 0.0
    %1243 = vmatpush1.xpose.msra.mxu0 %v1208
    %1244 = vmatprep.subr.mxu0 0.0
    %1245 = vmatpush2.xpose.msra.mxu0 0.0
    %1246 = vmatprep.subr.mxu0 0.0
    %1247 = vmatpush2.xpose.msra.mxu0 0.0
    %1248 = vmatprep.subr.mxu0 0.0
    %1249 = vmatpush2.xpose.msra.mxu0 0.0
    %1250 = vmatprep.subr.mxu0 0.0
    %1251 = vmatpush2.xpose.msra.mxu0 0.0
    %1252 = vmatprep.subr.mxu0 0.0
    %1253 = vmatpush2.xpose.msra.mxu0 0.0
    %1254 = vmatprep.subr.mxu0 0.0
    %1255 = vmatpush2.xpose.msra.mxu0 0.0
    %1256 = vmatprep.subr.mxu0 0.0
    %1257 = vmatpush2.xpose.msra.mxu0 0.0
    %1258 = vmatprep.subr.mxu0 0.0
    %1259 = vmatpush2.xpose.msra.mxu0 0.0
    %1260 = vmatprep.subr.mxu0 0.0
    %1261 = vmatpush2.xpose.msra.mxu0 0.0
    %1262 = vmatprep.subr.mxu0 0.0
    %1263 = vmatpush2.xpose.msra.mxu0 0.0
    %1264 = vmatprep.subr.mxu0 0.0
    %1265 = vmatpush2.xpose.msra.mxu0 0.0
    %1266 = vmatprep.subr.mxu0 0.0
    %1267 = vmatpush2.xpose.msra.mxu0 0.0
    %1268 = vmatprep.subr.mxu0 0.0
    %1269 = vmatpush2.xpose.msra.mxu0 0.0
    %1270 = vmatprep.subr.mxu0 0.0
    %1271 = vmatpush2.xpose.msra.mxu0 0.0
    %1272 = vmatprep.subr.mxu0 0.0
    %1273 = vmatpush2.xpose.msra.mxu0 0.0
    %1274 = vmatprep.subr.mxu0 0.0
    %1275 = vmatpush2.xpose.msra.mxu0 0.0
    %1276 = vmatprep.mubr.f32.mxu0 0.0
    %1277 = vmatmul.mubr.f32.gmra.mxu0 %v1204
    %v1278 = vpop.f32.mrf.mxu0
    %v1279 = vadd.f32 0.0, %v1278
    %v1280 = vpop.f32.mrf.mxu0
    %1281 = vmatprep.mubr.f32.mxu0 0.0
    %1282 = vmatmul.mubr.f32.gmra.mxu0 %v1206
    %v1283 = vpop.f32.mrf.mxu0
    %v1284 = vadd.f32 0.0, %v1283
    %v1285 = vpop.f32.mrf.mxu0
    %1286 = vdwg.mxu0
    %1289 = vrot.lane.b32.xlu0 %v544, 96
    %v1290 = vpop.permute.xlu0 %1289
    %1291 = vrot.lane.b32.xlu0 %v546, 96
    %v1292 = vpop.permute.xlu0 %1291
    %v1293 = vsel %vm61, %v1290, 0
    %v1295 = vsel %vm61, %v1292, 0
    %v1297 = vsel %vm61, %v544, 0
    %v1299 = vsel %vm61, %v546, 0
    %1301 = vmatprep.subr.mxu0 0.0
    %1302 = vmatpush1.xpose.msra.mxu0 0.0
    %1303 = vmatprep.subr.mxu0 0.0
    %1304 = vmatpush1.xpose.msra.mxu0 0.0
    %1305 = vmatprep.subr.mxu0 0.0
    %1306 = vmatpush1.xpose.msra.mxu0 0.0
    %1307 = vmatprep.subr.mxu0 0.0
    %1308 = vmatpush1.xpose.msra.mxu0 0.0
    %1309 = vmatprep.subr.mxu0 0.0
    %1310 = vmatpush1.xpose.msra.mxu0 0.0
    %1311 = vmatprep.subr.mxu0 0.0
    %1312 = vmatpush1.xpose.msra.mxu0 0.0
    %1313 = vmatprep.subr.mxu0 0.0
    %1314 = vmatpush1.xpose.msra.mxu0 0.0
    %1315 = vmatprep.subr.mxu0 0.0
    %1316 = vmatpush1.xpose.msra.mxu0 0.0
    %1317 = vmatprep.subr.mxu0 0.0
    %1318 = vmatpush1.xpose.msra.mxu0 0.0
    %1319 = vmatprep.subr.mxu0 0.0
    %1320 = vmatpush1.xpose.msra.mxu0 0.0
    %1321 = vmatprep.subr.mxu0 0.0
    %1322 = vmatpush1.xpose.msra.mxu0 0.0
    %1323 = vmatprep.subr.mxu0 0.0
    %1324 = vmatpush1.xpose.msra.mxu0 0.0
    %1325 = vmatprep.subr.mxu0 0.0
    %1326 = vmatpush1.xpose.msra.mxu0 0.0
    %1327 = vmatprep.subr.mxu0 0.0
    %1328 = vmatpush1.xpose.msra.mxu0 0.0
    %1329 = vmatprep.subr.mxu0 0.0
    %1330 = vmatpush1.xpose.msra.mxu0 %v1299
    %1331 = vmatprep.subr.mxu0 0.0
    %1332 = vmatpush1.xpose.msra.mxu0 %v1297
    %1333 = vmatprep.subr.mxu0 0.0
    %1334 = vmatpush2.xpose.msra.mxu0 0.0
    %1335 = vmatprep.subr.mxu0 0.0
    %1336 = vmatpush2.xpose.msra.mxu0 0.0
    %1337 = vmatprep.subr.mxu0 0.0
    %1338 = vmatpush2.xpose.msra.mxu0 0.0
    %1339 = vmatprep.subr.mxu0 0.0
    %1340 = vmatpush2.xpose.msra.mxu0 0.0
    %1341 = vmatprep.subr.mxu0 0.0
    %1342 = vmatpush2.xpose.msra.mxu0 0.0
    %1343 = vmatprep.subr.mxu0 0.0
    %1344 = vmatpush2.xpose.msra.mxu0 0.0
    %1345 = vmatprep.subr.mxu0 0.0
    %1346 = vmatpush2.xpose.msra.mxu0 0.0
    %1347 = vmatprep.subr.mxu0 0.0
    %1348 = vmatpush2.xpose.msra.mxu0 0.0
    %1349 = vmatprep.subr.mxu0 0.0
    %1350 = vmatpush2.xpose.msra.mxu0 0.0
    %1351 = vmatprep.subr.mxu0 0.0
    %1352 = vmatpush2.xpose.msra.mxu0 0.0
    %1353 = vmatprep.subr.mxu0 0.0
    %1354 = vmatpush2.xpose.msra.mxu0 0.0
    %1355 = vmatprep.subr.mxu0 0.0
    %1356 = vmatpush2.xpose.msra.mxu0 0.0
    %1357 = vmatprep.subr.mxu0 0.0
    %1358 = vmatpush2.xpose.msra.mxu0 0.0
    %1359 = vmatprep.subr.mxu0 0.0
    %1360 = vmatpush2.xpose.msra.mxu0 0.0
    %1361 = vmatprep.subr.mxu0 0.0
    %1362 = vmatpush2.xpose.msra.mxu0 0.0
    %1363 = vmatprep.subr.mxu0 0.0
    %1364 = vmatpush2.xpose.msra.mxu0 0.0
    %1365 = vmatprep.mubr.f32.mxu0 0.0
    %1366 = vmatmul.mubr.f32.gmra.mxu0 %v1293
    %v1367 = vpop.f32.mrf.mxu0
    %v1368 = vadd.f32 0.0, %v1367
    %v1369 = vpop.f32.mrf.mxu0
    %1370 = vmatprep.mubr.f32.mxu0 0.0
    %1371 = vmatmul.mubr.f32.gmra.mxu0 %v1295
    %v1372 = vpop.f32.mrf.mxu0
    %v1373 = vadd.f32 0.0, %v1372
    %v1374 = vpop.f32.mrf.mxu0
    %1375 = vdwg.mxu0
    %1378 = vrot.lane.b32.xlu0 %v548, 96
    %v1379 = vpop.permute.xlu0 %1378
    %1380 = vrot.lane.b32.xlu0 %v550, 96
    %v1381 = vpop.permute.xlu0 %1380
    %v1382 = vsel %vm61, %v1379, 0
    %v1384 = vsel %vm61, %v1381, 0
    %v1386 = vsel %vm61, %v548, 0
    %v1388 = vsel %vm61, %v550, 0
    %1390 = vmatprep.subr.mxu0 0.0
    %1391 = vmatpush1.xpose.msra.mxu0 0.0
    %1392 = vmatprep.subr.mxu0 0.0
    %1393 = vmatpush1.xpose.msra.mxu0 0.0
    %1394 = vmatprep.subr.mxu0 0.0
    %1395 = vmatpush1.xpose.msra.mxu0 0.0
    %1396 = vmatprep.subr.mxu0 0.0
    %1397 = vmatpush1.xpose.msra.mxu0 0.0
    %1398 = vmatprep.subr.mxu0 0.0
    %1399 = vmatpush1.xpose.msra.mxu0 0.0
    %1400 = vmatprep.subr.mxu0 0.0
    %1401 = vmatpush1.xpose.msra.mxu0 0.0
    %1402 = vmatprep.subr.mxu0 0.0
    %1403 = vmatpush1.xpose.msra.mxu0 0.0
    %1404 = vmatprep.subr.mxu0 0.0
    %1405 = vmatpush1.xpose.msra.mxu0 0.0
    %1406 = vmatprep.subr.mxu0 0.0
    %1407 = vmatpush1.xpose.msra.mxu0 0.0
    %1408 = vmatprep.subr.mxu0 0.0
    %1409 = vmatpush1.xpose.msra.mxu0 0.0
    %1410 = vmatprep.subr.mxu0 0.0
    %1411 = vmatpush1.xpose.msra.mxu0 0.0
    %1412 = vmatprep.subr.mxu0 0.0
    %1413 = vmatpush1.xpose.msra.mxu0 0.0
    %1414 = vmatprep.subr.mxu0 0.0
    %1415 = vmatpush1.xpose.msra.mxu0 0.0
    %1416 = vmatprep.subr.mxu0 0.0
    %1417 = vmatpush1.xpose.msra.mxu0 0.0
    %1418 = vmatprep.subr.mxu0 0.0
    %1419 = vmatpush1.xpose.msra.mxu0 %v1388
    %1420 = vmatprep.subr.mxu0 0.0
    %1421 = vmatpush1.xpose.msra.mxu0 %v1386
    %1422 = vmatprep.subr.mxu0 0.0
    %1423 = vmatpush2.xpose.msra.mxu0 0.0
    %1424 = vmatprep.subr.mxu0 0.0
    %1425 = vmatpush2.xpose.msra.mxu0 0.0
    %1426 = vmatprep.subr.mxu0 0.0
    %1427 = vmatpush2.xpose.msra.mxu0 0.0
    %1428 = vmatprep.subr.mxu0 0.0
    %1429 = vmatpush2.xpose.msra.mxu0 0.0
    %1430 = vmatprep.subr.mxu0 0.0
    %1431 = vmatpush2.xpose.msra.mxu0 0.0
    %1432 = vmatprep.subr.mxu0 0.0
    %1433 = vmatpush2.xpose.msra.mxu0 0.0
    %1434 = vmatprep.subr.mxu0 0.0
    %1435 = vmatpush2.xpose.msra.mxu0 0.0
    %1436 = vmatprep.subr.mxu0 0.0
    %1437 = vmatpush2.xpose.msra.mxu0 0.0
    %1438 = vmatprep.subr.mxu0 0.0
    %1439 = vmatpush2.xpose.msra.mxu0 0.0
    %1440 = vmatprep.subr.mxu0 0.0
    %1441 = vmatpush2.xpose.msra.mxu0 0.0
    %1442 = vmatprep.subr.mxu0 0.0
    %1443 = vmatpush2.xpose.msra.mxu0 0.0
    %1444 = vmatprep.subr.mxu0 0.0
    %1445 = vmatpush2.xpose.msra.mxu0 0.0
    %1446 = vmatprep.subr.mxu0 0.0
    %1447 = vmatpush2.xpose.msra.mxu0 0.0
    %1448 = vmatprep.subr.mxu0 0.0
    %1449 = vmatpush2.xpose.msra.mxu0 0.0
    %1450 = vmatprep.subr.mxu0 0.0
    %1451 = vmatpush2.xpose.msra.mxu0 0.0
    %1452 = vmatprep.subr.mxu0 0.0
    %1453 = vmatpush2.xpose.msra.mxu0 0.0
    %1454 = vmatprep.mubr.f32.mxu0 0.0
    %1455 = vmatmul.mubr.f32.gmra.mxu0 %v1382
    %v1456 = vpop.f32.mrf.mxu0
    %v1457 = vadd.f32 0.0, %v1456
    %v1458 = vpop.f32.mrf.mxu0
    %1459 = vmatprep.mubr.f32.mxu0 0.0
    %1460 = vmatmul.mubr.f32.gmra.mxu0 %v1384
    %v1461 = vpop.f32.mrf.mxu0
    %v1462 = vadd.f32 0.0, %v1461
    %v1463 = vpop.f32.mrf.mxu0
    %1464 = vdwg.mxu0
    %1467 = vrot.lane.b32.xlu0 %v552, 96
    %v1468 = vpop.permute.xlu0 %1467
    %1469 = vrot.lane.b32.xlu0 %v554, 96
    %v1470 = vpop.permute.xlu0 %1469
    %v1471 = vsel %vm61, %v1468, 0
    %v1473 = vsel %vm61, %v1470, 0
    %v1475 = vsel %vm61, %v552, 0
    %v1477 = vsel %vm61, %v554, 0
    %1479 = vmatprep.subr.mxu0 0.0
    %1480 = vmatpush1.xpose.msra.mxu0 0.0
    %1481 = vmatprep.subr.mxu0 0.0
    %1482 = vmatpush1.xpose.msra.mxu0 0.0
    %1483 = vmatprep.subr.mxu0 0.0
    %1484 = vmatpush1.xpose.msra.mxu0 0.0
    %1485 = vmatprep.subr.mxu0 0.0
    %1486 = vmatpush1.xpose.msra.mxu0 0.0
    %1487 = vmatprep.subr.mxu0 0.0
    %1488 = vmatpush1.xpose.msra.mxu0 0.0
    %1489 = vmatprep.subr.mxu0 0.0
    %1490 = vmatpush1.xpose.msra.mxu0 0.0
    %1491 = vmatprep.subr.mxu0 0.0
    %1492 = vmatpush1.xpose.msra.mxu0 0.0
    %1493 = vmatprep.subr.mxu0 0.0
    %1494 = vmatpush1.xpose.msra.mxu0 0.0
    %1495 = vmatprep.subr.mxu0 0.0
    %1496 = vmatpush1.xpose.msra.mxu0 0.0
    %1497 = vmatprep.subr.mxu0 0.0
    %1498 = vmatpush1.xpose.msra.mxu0 0.0
    %1499 = vmatprep.subr.mxu0 0.0
    %1500 = vmatpush1.xpose.msra.mxu0 0.0
    %1501 = vmatprep.subr.mxu0 0.0
    %1502 = vmatpush1.xpose.msra.mxu0 0.0
    %1503 = vmatprep.subr.mxu0 0.0
    %1504 = vmatpush1.xpose.msra.mxu0 0.0
    %1505 = vmatprep.subr.mxu0 0.0
    %1506 = vmatpush1.xpose.msra.mxu0 0.0
    %1507 = vmatprep.subr.mxu0 0.0
    %1508 = vmatpush1.xpose.msra.mxu0 %v1477
    %1509 = vmatprep.subr.mxu0 0.0
    %1510 = vmatpush1.xpose.msra.mxu0 %v1475
    %1511 = vmatprep.subr.mxu0 0.0
    %1512 = vmatpush2.xpose.msra.mxu0 0.0
    %1513 = vmatprep.subr.mxu0 0.0
    %1514 = vmatpush2.xpose.msra.mxu0 0.0
    %1515 = vmatprep.subr.mxu0 0.0
    %1516 = vmatpush2.xpose.msra.mxu0 0.0
    %1517 = vmatprep.subr.mxu0 0.0
    %1518 = vmatpush2.xpose.msra.mxu0 0.0
    %1519 = vmatprep.subr.mxu0 0.0
    %1520 = vmatpush2.xpose.msra.mxu0 0.0
    %1521 = vmatprep.subr.mxu0 0.0
    %1522 = vmatpush2.xpose.msra.mxu0 0.0
    %1523 = vmatprep.subr.mxu0 0.0
    %1524 = vmatpush2.xpose.msra.mxu0 0.0
    %1525 = vmatprep.subr.mxu0 0.0
    %1526 = vmatpush2.xpose.msra.mxu0 0.0
    %1527 = vmatprep.subr.mxu0 0.0
    %1528 = vmatpush2.xpose.msra.mxu0 0.0
    %1529 = vmatprep.subr.mxu0 0.0
    %1530 = vmatpush2.xpose.msra.mxu0 0.0
    %1531 = vmatprep.subr.mxu0 0.0
    %1532 = vmatpush2.xpose.msra.mxu0 0.0
    %1533 = vmatprep.subr.mxu0 0.0
    %1534 = vmatpush2.xpose.msra.mxu0 0.0
    %1535 = vmatprep.subr.mxu0 0.0
    %1536 = vmatpush2.xpose.msra.mxu0 0.0
    %1537 = vmatprep.subr.mxu0 0.0
    %1538 = vmatpush2.xpose.msra.mxu0 0.0
    %1539 = vmatprep.subr.mxu0 0.0
    %1540 = vmatpush2.xpose.msra.mxu0 0.0
    %1541 = vmatprep.subr.mxu0 0.0
    %1542 = vmatpush2.xpose.msra.mxu0 0.0
    %1543 = vmatprep.mubr.f32.mxu0 0.0
    %1544 = vmatmul.mubr.f32.gmra.mxu0 %v1471
    %v1545 = vpop.f32.mrf.mxu0
    %v1546 = vadd.f32 0.0, %v1545
    %v1547 = vpop.f32.mrf.mxu0
    %1548 = vmatprep.mubr.f32.mxu0 0.0
    %1549 = vmatmul.mubr.f32.gmra.mxu0 %v1473
    %v1550 = vpop.f32.mrf.mxu0
    %v1551 = vadd.f32 0.0, %v1550
    %v1552 = vpop.f32.mrf.mxu0
    %1553 = vdwg.mxu0
    %1556 = vrot.lane.b32.xlu0 %v556, 96
    %v1557 = vpop.permute.xlu0 %1556
    %1558 = vrot.lane.b32.xlu0 %v558, 96
    %v1559 = vpop.permute.xlu0 %1558
    %v1560 = vsel %vm61, %v1557, 0
    %v1562 = vsel %vm61, %v1559, 0
    %v1564 = vsel %vm61, %v556, 0
    %v1566 = vsel %vm61, %v558, 0
    %1568 = vmatprep.subr.mxu0 0.0
    %1569 = vmatpush1.xpose.msra.mxu0 0.0
    %1570 = vmatprep.subr.mxu0 0.0
    %1571 = vmatpush1.xpose.msra.mxu0 0.0
    %1572 = vmatprep.subr.mxu0 0.0
    %1573 = vmatpush1.xpose.msra.mxu0 0.0
    %1574 = vmatprep.subr.mxu0 0.0
    %1575 = vmatpush1.xpose.msra.mxu0 0.0
    %1576 = vmatprep.subr.mxu0 0.0
    %1577 = vmatpush1.xpose.msra.mxu0 0.0
    %1578 = vmatprep.subr.mxu0 0.0
    %1579 = vmatpush1.xpose.msra.mxu0 0.0
    %1580 = vmatprep.subr.mxu0 0.0
    %1581 = vmatpush1.xpose.msra.mxu0 0.0
    %1582 = vmatprep.subr.mxu0 0.0
    %1583 = vmatpush1.xpose.msra.mxu0 0.0
    %1584 = vmatprep.subr.mxu0 0.0
    %1585 = vmatpush1.xpose.msra.mxu0 0.0
    %1586 = vmatprep.subr.mxu0 0.0
    %1587 = vmatpush1.xpose.msra.mxu0 0.0
    %1588 = vmatprep.subr.mxu0 0.0
    %1589 = vmatpush1.xpose.msra.mxu0 0.0
    %1590 = vmatprep.subr.mxu0 0.0
    %1591 = vmatpush1.xpose.msra.mxu0 0.0
    %1592 = vmatprep.subr.mxu0 0.0
    %1593 = vmatpush1.xpose.msra.mxu0 0.0
    %1594 = vmatprep.subr.mxu0 0.0
    %1595 = vmatpush1.xpose.msra.mxu0 0.0
    %1596 = vmatprep.subr.mxu0 0.0
    %1597 = vmatpush1.xpose.msra.mxu0 %v1566
    %1598 = vmatprep.subr.mxu0 0.0
    %1599 = vmatpush1.xpose.msra.mxu0 %v1564
    %1600 = vmatprep.subr.mxu0 0.0
    %1601 = vmatpush2.xpose.msra.mxu0 0.0
    %1602 = vmatprep.subr.mxu0 0.0
    %1603 = vmatpush2.xpose.msra.mxu0 0.0
    %1604 = vmatprep.subr.mxu0 0.0
    %1605 = vmatpush2.xpose.msra.mxu0 0.0
    %1606 = vmatprep.subr.mxu0 0.0
    %1607 = vmatpush2.xpose.msra.mxu0 0.0
    %1608 = vmatprep.subr.mxu0 0.0
    %1609 = vmatpush2.xpose.msra.mxu0 0.0
    %1610 = vmatprep.subr.mxu0 0.0
    %1611 = vmatpush2.xpose.msra.mxu0 0.0
    %1612 = vmatprep.subr.mxu0 0.0
    %1613 = vmatpush2.xpose.msra.mxu0 0.0
    %1614 = vmatprep.subr.mxu0 0.0
    %1615 = vmatpush2.xpose.msra.mxu0 0.0
    %1616 = vmatprep.subr.mxu0 0.0
    %1617 = vmatpush2.xpose.msra.mxu0 0.0
    %1618 = vmatprep.subr.mxu0 0.0
    %1619 = vmatpush2.xpose.msra.mxu0 0.0
    %1620 = vmatprep.subr.mxu0 0.0
    %1621 = vmatpush2.xpose.msra.mxu0 0.0
    %1622 = vmatprep.subr.mxu0 0.0
    %1623 = vmatpush2.xpose.msra.mxu0 0.0
    %1624 = vmatprep.subr.mxu0 0.0
    %1625 = vmatpush2.xpose.msra.mxu0 0.0
    %1626 = vmatprep.subr.mxu0 0.0
    %1627 = vmatpush2.xpose.msra.mxu0 0.0
    %1628 = vmatprep.subr.mxu0 0.0
    %1629 = vmatpush2.xpose.msra.mxu0 0.0
    %1630 = vmatprep.subr.mxu0 0.0
    %1631 = vmatpush2.xpose.msra.mxu0 0.0
    %1632 = vmatprep.mubr.f32.mxu0 0.0
    %1633 = vmatmul.mubr.f32.gmra.mxu0 %v1560
    %v1634 = vpop.f32.mrf.mxu0
    %v1635 = vadd.f32 0.0, %v1634
    %v1636 = vpop.f32.mrf.mxu0
    %1637 = vmatprep.mubr.f32.mxu0 0.0
    %1638 = vmatmul.mubr.f32.gmra.mxu0 %v1562
    %v1639 = vpop.f32.mrf.mxu0
    %v1640 = vadd.f32 0.0, %v1639
    %v1641 = vpop.f32.mrf.mxu0
    %1642 = vdwg.mxu0
    %1645 = vrot.lane.b32.xlu0 %v560, 96
    %v1646 = vpop.permute.xlu0 %1645
    %1647 = vrot.lane.b32.xlu0 %v562, 96
    %v1648 = vpop.permute.xlu0 %1647
    %v1649 = vsel %vm61, %v1646, 0
    %v1651 = vsel %vm61, %v1648, 0
    %v1653 = vsel %vm61, %v560, 0
    %v1655 = vsel %vm61, %v562, 0
    %1657 = vmatprep.subr.mxu0 0.0
    %1658 = vmatpush1.xpose.msra.mxu0 0.0
    %1659 = vmatprep.subr.mxu0 0.0
    %1660 = vmatpush1.xpose.msra.mxu0 0.0
    %1661 = vmatprep.subr.mxu0 0.0
    %1662 = vmatpush1.xpose.msra.mxu0 0.0
    %1663 = vmatprep.subr.mxu0 0.0
    %1664 = vmatpush1.xpose.msra.mxu0 0.0
    %1665 = vmatprep.subr.mxu0 0.0
    %1666 = vmatpush1.xpose.msra.mxu0 0.0
    %1667 = vmatprep.subr.mxu0 0.0
    %1668 = vmatpush1.xpose.msra.mxu0 0.0
    %1669 = vmatprep.subr.mxu0 0.0
    %1670 = vmatpush1.xpose.msra.mxu0 0.0
    %1671 = vmatprep.subr.mxu0 0.0
    %1672 = vmatpush1.xpose.msra.mxu0 0.0
    %1673 = vmatprep.subr.mxu0 0.0
    %1674 = vmatpush1.xpose.msra.mxu0 0.0
    %1675 = vmatprep.subr.mxu0 0.0
    %1676 = vmatpush1.xpose.msra.mxu0 0.0
    %1677 = vmatprep.subr.mxu0 0.0
    %1678 = vmatpush1.xpose.msra.mxu0 0.0
    %1679 = vmatprep.subr.mxu0 0.0
    %1680 = vmatpush1.xpose.msra.mxu0 0.0
    %1681 = vmatprep.subr.mxu0 0.0
    %1682 = vmatpush1.xpose.msra.mxu0 0.0
    %1683 = vmatprep.subr.mxu0 0.0
    %1684 = vmatpush1.xpose.msra.mxu0 0.0
    %1685 = vmatprep.subr.mxu0 0.0
    %1686 = vmatpush1.xpose.msra.mxu0 %v1655
    %1687 = vmatprep.subr.mxu0 0.0
    %1688 = vmatpush1.xpose.msra.mxu0 %v1653
    %1689 = vmatprep.subr.mxu0 0.0
    %1690 = vmatpush2.xpose.msra.mxu0 0.0
    %1691 = vmatprep.subr.mxu0 0.0
    %1692 = vmatpush2.xpose.msra.mxu0 0.0
    %1693 = vmatprep.subr.mxu0 0.0
    %1694 = vmatpush2.xpose.msra.mxu0 0.0
    %1695 = vmatprep.subr.mxu0 0.0
    %1696 = vmatpush2.xpose.msra.mxu0 0.0
    %1697 = vmatprep.subr.mxu0 0.0
    %1698 = vmatpush2.xpose.msra.mxu0 0.0
    %1699 = vmatprep.subr.mxu0 0.0
    %1700 = vmatpush2.xpose.msra.mxu0 0.0
    %1701 = vmatprep.subr.mxu0 0.0
    %1702 = vmatpush2.xpose.msra.mxu0 0.0
    %1703 = vmatprep.subr.mxu0 0.0
    %1704 = vmatpush2.xpose.msra.mxu0 0.0
    %1705 = vmatprep.subr.mxu0 0.0
    %1706 = vmatpush2.xpose.msra.mxu0 0.0
    %1707 = vmatprep.subr.mxu0 0.0
    %1708 = vmatpush2.xpose.msra.mxu0 0.0
    %1709 = vmatprep.subr.mxu0 0.0
    %1710 = vmatpush2.xpose.msra.mxu0 0.0
    %1711 = vmatprep.subr.mxu0 0.0
    %1712 = vmatpush2.xpose.msra.mxu0 0.0
    %1713 = vmatprep.subr.mxu0 0.0
    %1714 = vmatpush2.xpose.msra.mxu0 0.0
    %1715 = vmatprep.subr.mxu0 0.0
    %1716 = vmatpush2.xpose.msra.mxu0 0.0
    %1717 = vmatprep.subr.mxu0 0.0
    %1718 = vmatpush2.xpose.msra.mxu0 0.0
    %1719 = vmatprep.subr.mxu0 0.0
    %1720 = vmatpush2.xpose.msra.mxu0 0.0
    %1721 = vmatprep.mubr.f32.mxu0 0.0
    %1722 = vmatmul.mubr.f32.gmra.mxu0 %v1649
    %v1723 = vpop.f32.mrf.mxu0
    %v1724 = vadd.f32 0.0, %v1723
    %v1725 = vpop.f32.mrf.mxu0
    %1726 = vmatprep.mubr.f32.mxu0 0.0
    %1727 = vmatmul.mubr.f32.gmra.mxu0 %v1651
    %v1728 = vpop.f32.mrf.mxu0
    %v1729 = vadd.f32 0.0, %v1728
    %v1730 = vpop.f32.mrf.mxu0
    %1731 = vdwg.mxu0
    %1734 = vrot.lane.b32.xlu0 %v564, 96
    %v1735 = vpop.permute.xlu0 %1734
    %1736 = vrot.lane.b32.xlu0 %v566, 96
    %v1737 = vpop.permute.xlu0 %1736
    %v1738 = vsel %vm61, %v1735, 0
    %v1740 = vsel %vm61, %v1737, 0
    %v1742 = vsel %vm61, %v564, 0
    %v1744 = vsel %vm61, %v566, 0
    %1746 = vmatprep.subr.mxu0 0.0
    %1747 = vmatpush1.xpose.msra.mxu0 0.0
    %1748 = vmatprep.subr.mxu0 0.0
    %1749 = vmatpush1.xpose.msra.mxu0 0.0
    %1750 = vmatprep.subr.mxu0 0.0
    %1751 = vmatpush1.xpose.msra.mxu0 0.0
    %1752 = vmatprep.subr.mxu0 0.0
    %1753 = vmatpush1.xpose.msra.mxu0 0.0
    %1754 = vmatprep.subr.mxu0 0.0
    %1755 = vmatpush1.xpose.msra.mxu0 0.0
    %1756 = vmatprep.subr.mxu0 0.0
    %1757 = vmatpush1.xpose.msra.mxu0 0.0
    %1758 = vmatprep.subr.mxu0 0.0
    %1759 = vmatpush1.xpose.msra.mxu0 0.0
    %1760 = vmatprep.subr.mxu0 0.0
    %1761 = vmatpush1.xpose.msra.mxu0 0.0
    %1762 = vmatprep.subr.mxu0 0.0
    %1763 = vmatpush1.xpose.msra.mxu0 0.0
    %1764 = vmatprep.subr.mxu0 0.0
    %1765 = vmatpush1.xpose.msra.mxu0 0.0
    %1766 = vmatprep.subr.mxu0 0.0
    %1767 = vmatpush1.xpose.msra.mxu0 0.0
    %1768 = vmatprep.subr.mxu0 0.0
    %1769 = vmatpush1.xpose.msra.mxu0 0.0
    %1770 = vmatprep.subr.mxu0 0.0
    %1771 = vmatpush1.xpose.msra.mxu0 0.0
    %1772 = vmatprep.subr.mxu0 0.0
    %1773 = vmatpush1.xpose.msra.mxu0 0.0
    %1774 = vmatprep.subr.mxu0 0.0
    %1775 = vmatpush1.xpose.msra.mxu0 %v1744
    %1776 = vmatprep.subr.mxu0 0.0
    %1777 = vmatpush1.xpose.msra.mxu0 %v1742
    %1778 = vmatprep.subr.mxu0 0.0
    %1779 = vmatpush2.xpose.msra.mxu0 0.0
    %1780 = vmatprep.subr.mxu0 0.0
    %1781 = vmatpush2.xpose.msra.mxu0 0.0
    %1782 = vmatprep.subr.mxu0 0.0
    %1783 = vmatpush2.xpose.msra.mxu0 0.0
    %1784 = vmatprep.subr.mxu0 0.0
    %1785 = vmatpush2.xpose.msra.mxu0 0.0
    %1786 = vmatprep.subr.mxu0 0.0
    %1787 = vmatpush2.xpose.msra.mxu0 0.0
    %1788 = vmatprep.subr.mxu0 0.0
    %1789 = vmatpush2.xpose.msra.mxu0 0.0
    %1790 = vmatprep.subr.mxu0 0.0
    %1791 = vmatpush2.xpose.msra.mxu0 0.0
    %1792 = vmatprep.subr.mxu0 0.0
    %1793 = vmatpush2.xpose.msra.mxu0 0.0
    %1794 = vmatprep.subr.mxu0 0.0
    %1795 = vmatpush2.xpose.msra.mxu0 0.0
    %1796 = vmatprep.subr.mxu0 0.0
    %1797 = vmatpush2.xpose.msra.mxu0 0.0
    %1798 = vmatprep.subr.mxu0 0.0
    %1799 = vmatpush2.xpose.msra.mxu0 0.0
    %1800 = vmatprep.subr.mxu0 0.0
    %1801 = vmatpush2.xpose.msra.mxu0 0.0
    %1802 = vmatprep.subr.mxu0 0.0
    %1803 = vmatpush2.xpose.msra.mxu0 0.0
    %1804 = vmatprep.subr.mxu0 0.0
    %1805 = vmatpush2.xpose.msra.mxu0 0.0
    %1806 = vmatprep.subr.mxu0 0.0
    %1807 = vmatpush2.xpose.msra.mxu0 0.0
    %1808 = vmatprep.subr.mxu0 0.0
    %1809 = vmatpush2.xpose.msra.mxu0 0.0
    %1810 = vmatprep.mubr.f32.mxu0 0.0
    %1811 = vmatmul.mubr.f32.gmra.mxu0 %v1738
    %v1812 = vpop.f32.mrf.mxu0
    %v1813 = vadd.f32 0.0, %v1812
    %v1814 = vpop.f32.mrf.mxu0
    %1815 = vmatprep.mubr.f32.mxu0 0.0
    %1816 = vmatmul.mubr.f32.gmra.mxu0 %v1740
    %v1817 = vpop.f32.mrf.mxu0
    %v1818 = vadd.f32 0.0, %v1817
    %v1819 = vpop.f32.mrf.mxu0
    %1820 = vdwg.mxu0
    %1823 = vrot.lane.b32.xlu0 %v568, 96
    %v1824 = vpop.permute.xlu0 %1823
    %1825 = vrot.lane.b32.xlu0 %v570, 96
    %v1826 = vpop.permute.xlu0 %1825
    %v1827 = vsel %vm61, %v1824, 0
    %v1829 = vsel %vm61, %v1826, 0
    %v1831 = vsel %vm61, %v568, 0
    %v1833 = vsel %vm61, %v570, 0
    %1835 = vmatprep.subr.mxu0 0.0
    %1836 = vmatpush1.xpose.msra.mxu0 0.0
    %1837 = vmatprep.subr.mxu0 0.0
    %1838 = vmatpush1.xpose.msra.mxu0 0.0
    %1839 = vmatprep.subr.mxu0 0.0
    %1840 = vmatpush1.xpose.msra.mxu0 0.0
    %1841 = vmatprep.subr.mxu0 0.0
    %1842 = vmatpush1.xpose.msra.mxu0 0.0
    %1843 = vmatprep.subr.mxu0 0.0
    %1844 = vmatpush1.xpose.msra.mxu0 0.0
    %1845 = vmatprep.subr.mxu0 0.0
    %1846 = vmatpush1.xpose.msra.mxu0 0.0
    %1847 = vmatprep.subr.mxu0 0.0
    %1848 = vmatpush1.xpose.msra.mxu0 0.0
    %1849 = vmatprep.subr.mxu0 0.0
    %1850 = vmatpush1.xpose.msra.mxu0 0.0
    %1851 = vmatprep.subr.mxu0 0.0
    %1852 = vmatpush1.xpose.msra.mxu0 0.0
    %1853 = vmatprep.subr.mxu0 0.0
    %1854 = vmatpush1.xpose.msra.mxu0 0.0
    %1855 = vmatprep.subr.mxu0 0.0
    %1856 = vmatpush1.xpose.msra.mxu0 0.0
    %1857 = vmatprep.subr.mxu0 0.0
    %1858 = vmatpush1.xpose.msra.mxu0 0.0
    %1859 = vmatprep.subr.mxu0 0.0
    %1860 = vmatpush1.xpose.msra.mxu0 0.0
    %1861 = vmatprep.subr.mxu0 0.0
    %1862 = vmatpush1.xpose.msra.mxu0 0.0
    %1863 = vmatprep.subr.mxu0 0.0
    %1864 = vmatpush1.xpose.msra.mxu0 %v1833
    %1865 = vmatprep.subr.mxu0 0.0
    %1866 = vmatpush1.xpose.msra.mxu0 %v1831
    %1867 = vmatprep.subr.mxu0 0.0
    %1868 = vmatpush2.xpose.msra.mxu0 0.0
    %1869 = vmatprep.subr.mxu0 0.0
    %1870 = vmatpush2.xpose.msra.mxu0 0.0
    %1871 = vmatprep.subr.mxu0 0.0
    %1872 = vmatpush2.xpose.msra.mxu0 0.0
    %1873 = vmatprep.subr.mxu0 0.0
    %1874 = vmatpush2.xpose.msra.mxu0 0.0
    %1875 = vmatprep.subr.mxu0 0.0
    %1876 = vmatpush2.xpose.msra.mxu0 0.0
    %1877 = vmatprep.subr.mxu0 0.0
    %1878 = vmatpush2.xpose.msra.mxu0 0.0
    %1879 = vmatprep.subr.mxu0 0.0
    %1880 = vmatpush2.xpose.msra.mxu0 0.0
    %1881 = vmatprep.subr.mxu0 0.0
    %1882 = vmatpush2.xpose.msra.mxu0 0.0
    %1883 = vmatprep.subr.mxu0 0.0
    %1884 = vmatpush2.xpose.msra.mxu0 0.0
    %1885 = vmatprep.subr.mxu0 0.0
    %1886 = vmatpush2.xpose.msra.mxu0 0.0
    %1887 = vmatprep.subr.mxu0 0.0
    %1888 = vmatpush2.xpose.msra.mxu0 0.0
    %1889 = vmatprep.subr.mxu0 0.0
    %1890 = vmatpush2.xpose.msra.mxu0 0.0
    %1891 = vmatprep.subr.mxu0 0.0
    %1892 = vmatpush2.xpose.msra.mxu0 0.0
    %1893 = vmatprep.subr.mxu0 0.0
    %1894 = vmatpush2.xpose.msra.mxu0 0.0
    %1895 = vmatprep.subr.mxu0 0.0
    %1896 = vmatpush2.xpose.msra.mxu0 0.0
    %1897 = vmatprep.subr.mxu0 0.0
    %1898 = vmatpush2.xpose.msra.mxu0 0.0
    %1899 = vmatprep.mubr.f32.mxu0 0.0
    %1900 = vmatmul.mubr.f32.gmra.mxu0 %v1827
    %v1901 = vpop.f32.mrf.mxu0
    %v1902 = vadd.f32 0.0, %v1901
    %v1903 = vpop.f32.mrf.mxu0
    %1904 = vmatprep.mubr.f32.mxu0 0.0
    %1905 = vmatmul.mubr.f32.gmra.mxu0 %v1829
    %v1906 = vpop.f32.mrf.mxu0
    %v1907 = vadd.f32 0.0, %v1906
    %v1908 = vpop.f32.mrf.mxu0
    %1909 = vdwg.mxu0
    %1912 = vrot.lane.b32.xlu0 %v572, 96
    %v1913 = vpop.permute.xlu0 %1912
    %1914 = vrot.lane.b32.xlu0 %v574, 96
    %v1915 = vpop.permute.xlu0 %1914
    %v1916 = vsel %vm61, %v1913, 0
    %v1918 = vsel %vm61, %v1915, 0
    %v1920 = vsel %vm61, %v572, 0
    %v1922 = vsel %vm61, %v574, 0
    %1924 = vmatprep.subr.mxu0 0.0
    %1925 = vmatpush1.xpose.msra.mxu0 0.0
    %1926 = vmatprep.subr.mxu0 0.0
    %1927 = vmatpush1.xpose.msra.mxu0 0.0
    %1928 = vmatprep.subr.mxu0 0.0
    %1929 = vmatpush1.xpose.msra.mxu0 0.0
    %1930 = vmatprep.subr.mxu0 0.0
    %1931 = vmatpush1.xpose.msra.mxu0 0.0
    %1932 = vmatprep.subr.mxu0 0.0
    %1933 = vmatpush1.xpose.msra.mxu0 0.0
    %1934 = vmatprep.subr.mxu0 0.0
    %1935 = vmatpush1.xpose.msra.mxu0 0.0
    %1936 = vmatprep.subr.mxu0 0.0
    %1937 = vmatpush1.xpose.msra.mxu0 0.0
    %1938 = vmatprep.subr.mxu0 0.0
    %1939 = vmatpush1.xpose.msra.mxu0 0.0
    %1940 = vmatprep.subr.mxu0 0.0
    %1941 = vmatpush1.xpose.msra.mxu0 0.0
    %1942 = vmatprep.subr.mxu0 0.0
    %1943 = vmatpush1.xpose.msra.mxu0 0.0
    %1944 = vmatprep.subr.mxu0 0.0
    %1945 = vmatpush1.xpose.msra.mxu0 0.0
    %1946 = vmatprep.subr.mxu0 0.0
    %1947 = vmatpush1.xpose.msra.mxu0 0.0
    %1948 = vmatprep.subr.mxu0 0.0
    %1949 = vmatpush1.xpose.msra.mxu0 0.0
    %1950 = vmatprep.subr.mxu0 0.0
    %1951 = vmatpush1.xpose.msra.mxu0 0.0
    %1952 = vmatprep.subr.mxu0 0.0
    %1953 = vmatpush1.xpose.msra.mxu0 %v1922
    %1954 = vmatprep.subr.mxu0 0.0
    %1955 = vmatpush1.xpose.msra.mxu0 %v1920
    %1956 = vmatprep.subr.mxu0 0.0
    %1957 = vmatpush2.xpose.msra.mxu0 0.0
    %1958 = vmatprep.subr.mxu0 0.0
    %1959 = vmatpush2.xpose.msra.mxu0 0.0
    %1960 = vmatprep.subr.mxu0 0.0
    %1961 = vmatpush2.xpose.msra.mxu0 0.0
    %1962 = vmatprep.subr.mxu0 0.0
    %1963 = vmatpush2.xpose.msra.mxu0 0.0
    %1964 = vmatprep.subr.mxu0 0.0
    %1965 = vmatpush2.xpose.msra.mxu0 0.0
    %1966 = vmatprep.subr.mxu0 0.0
    %1967 = vmatpush2.xpose.msra.mxu0 0.0
    %1968 = vmatprep.subr.mxu0 0.0
    %1969 = vmatpush2.xpose.msra.mxu0 0.0
    %1970 = vmatprep.subr.mxu0 0.0
    %1971 = vmatpush2.xpose.msra.mxu0 0.0
    %1972 = vmatprep.subr.mxu0 0.0
    %1973 = vmatpush2.xpose.msra.mxu0 0.0
    %1974 = vmatprep.subr.mxu0 0.0
    %1975 = vmatpush2.xpose.msra.mxu0 0.0
    %1976 = vmatprep.subr.mxu0 0.0
    %1977 = vmatpush2.xpose.msra.mxu0 0.0
    %1978 = vmatprep.subr.mxu0 0.0
    %1979 = vmatpush2.xpose.msra.mxu0 0.0
    %1980 = vmatprep.subr.mxu0 0.0
    %1981 = vmatpush2.xpose.msra.mxu0 0.0
    %1982 = vmatprep.subr.mxu0 0.0
    %1983 = vmatpush2.xpose.msra.mxu0 0.0
    %1984 = vmatprep.subr.mxu0 0.0
    %1985 = vmatpush2.xpose.msra.mxu0 0.0
    %1986 = vmatprep.subr.mxu0 0.0
    %1987 = vmatpush2.xpose.msra.mxu0 0.0
    %1988 = vmatprep.mubr.f32.mxu0 0.0
    %1989 = vmatmul.mubr.f32.gmra.mxu0 %v1916
    %v1990 = vpop.f32.mrf.mxu0
    %v1991 = vadd.f32 0.0, %v1990
    %v1992 = vpop.f32.mrf.mxu0
    %1993 = vmatprep.mubr.f32.mxu0 0.0
    %1994 = vmatmul.mubr.f32.gmra.mxu0 %v1918
    %v1995 = vpop.f32.mrf.mxu0
    %v1996 = vadd.f32 0.0, %v1995
    %v1997 = vpop.f32.mrf.mxu0
    %1998 = vdwg.mxu0
    %v1999 = vcombine.low %v656, %v834
    %v2000 = vcombine.high %v656, %v834
    %v2002 = vunpack.c.l.s4 1983009808
    %v2003 = vunpack.c.0.s8 %v2002
    %v2004 = vlaneseq
    %v2005 = vshrl.u32 %v2004, 7
    %v2006 = vsub.s32 %v2003, %v2005
    %v2007 = vrot.slane %v1999, %v2006
    %v2009 = vunpack.c.l.s4 1983009808
    %v2010 = vunpack.c.0.s8 %v2009
    %v2011 = vlaneseq
    %v2012 = vshrl.u32 %v2011, 7
    %v2013 = vsub.s32 %v2010, %v2012
    %v2014 = vrot.slane %v2000, %v2013
    %v2015 = vcombine.low %v745, %v923
    %v2016 = vcombine.high %v745, %v923
    %v2018 = vunpack.c.l.s4 1983009808
    %v2019 = vunpack.c.0.s8 %v2018
    %v2020 = vlaneseq
    %v2021 = vshrl.u32 %v2020, 7
    %v2022 = vsub.s32 %v2019, %v2021
    %v2023 = vrot.slane %v2015, %v2022
    %v2025 = vunpack.c.l.s4 1983009808
    %v2026 = vunpack.c.0.s8 %v2025
    %v2027 = vlaneseq
    %v2028 = vshrl.u32 %v2027, 7
    %v2029 = vsub.s32 %v2026, %v2028
    %v2030 = vrot.slane %v2016, %v2029
    %v2031 = vcombine.low %v1012, %v1190
    %v2032 = vcombine.high %v1012, %v1190
    %v2034 = vunpack.c.l.s4 1983009808
    %v2035 = vunpack.c.0.s8 %v2034
    %v2036 = vlaneseq
    %v2037 = vshrl.u32 %v2036, 7
    %v2038 = vsub.s32 %v2035, %v2037
    %v2039 = vrot.slane %v2031, %v2038
    %v2041 = vunpack.c.l.s4 1983009808
    %v2042 = vunpack.c.0.s8 %v2041
    %v2043 = vlaneseq
    %v2044 = vshrl.u32 %v2043, 7
    %v2045 = vsub.s32 %v2042, %v2044
    %v2046 = vrot.slane %v2032, %v2045
    %v2047 = vcombine.low %v1101, %v1279
    %v2048 = vcombine.high %v1101, %v1279
    %v2050 = vunpack.c.l.s4 1983009808
    %v2051 = vunpack.c.0.s8 %v2050
    %v2052 = vlaneseq
    %v2053 = vshrl.u32 %v2052, 7
    %v2054 = vsub.s32 %v2051, %v2053
    %v2055 = vrot.slane %v2047, %v2054
    %v2057 = vunpack.c.l.s4 1983009808
    %v2058 = vunpack.c.0.s8 %v2057
    %v2059 = vlaneseq
    %v2060 = vshrl.u32 %v2059, 7
    %v2061 = vsub.s32 %v2058, %v2060
    %v2062 = vrot.slane %v2048, %v2061
    %v2063 = vcombine.low %v2007, %v2023
    %v2064 = vcombine.high %v2007, %v2023
    %v2066 = vunpack.c.l.s4 1934713408
    %v2067 = vunpack.c.0.s8 %v2066
    %v2068 = vlaneseq
    %v2069 = vshrl.u32 %v2068, 7
    %v2070 = vsub.s32 %v2067, %v2069
    %v2071 = vrot.slane %v2063, %v2070
    %v2073 = vunpack.c.l.s4 1934713408
    %v2074 = vunpack.c.0.s8 %v2073
    %v2075 = vlaneseq
    %v2076 = vshrl.u32 %v2075, 7
    %v2077 = vsub.s32 %v2074, %v2076
    %v2078 = vrot.slane %v2064, %v2077
    %v2079 = vcombine.low %v2014, %v2030
    %v2080 = vcombine.high %v2014, %v2030
    %v2082 = vunpack.c.l.s4 1934713408
    %v2083 = vunpack.c.0.s8 %v2082
    %v2084 = vlaneseq
    %v2085 = vshrl.u32 %v2084, 7
    %v2086 = vsub.s32 %v2083, %v2085
    %v2087 = vrot.slane %v2079, %v2086
    %v2089 = vunpack.c.l.s4 1934713408
    %v2090 = vunpack.c.0.s8 %v2089
    %v2091 = vlaneseq
    %v2092 = vshrl.u32 %v2091, 7
    %v2093 = vsub.s32 %v2090, %v2092
    %v2094 = vrot.slane %v2080, %v2093
    %v2095 = vcombine.low %v2039, %v2055
    %v2096 = vcombine.high %v2039, %v2055
    %v2098 = vunpack.c.l.s4 1934713408
    %v2099 = vunpack.c.0.s8 %v2098
    %v2100 = vlaneseq
    %v2101 = vshrl.u32 %v2100, 7
    %v2102 = vsub.s32 %v2099, %v2101
    %v2103 = vrot.slane %v2095, %v2102
    %v2105 = vunpack.c.l.s4 1934713408
    %v2106 = vunpack.c.0.s8 %v2105
    %v2107 = vlaneseq
    %v2108 = vshrl.u32 %v2107, 7
    %v2109 = vsub.s32 %v2106, %v2108
    %v2110 = vrot.slane %v2096, %v2109
    %v2111 = vcombine.low %v2046, %v2062
    %v2112 = vcombine.high %v2046, %v2062
    %v2114 = vunpack.c.l.s4 1934713408
    %v2115 = vunpack.c.0.s8 %v2114
    %v2116 = vlaneseq
    %v2117 = vshrl.u32 %v2116, 7
    %v2118 = vsub.s32 %v2115, %v2117
    %v2119 = vrot.slane %v2111, %v2118
    %v2121 = vunpack.c.l.s4 1934713408
    %v2122 = vunpack.c.0.s8 %v2121
    %v2123 = vlaneseq
    %v2124 = vshrl.u32 %v2123, 7
    %v2125 = vsub.s32 %v2122, %v2124
    %v2126 = vrot.slane %v2112, %v2125
    %v2127 = vcombine.low %v2071, %v2103
    %v2128 = vcombine.high %v2071, %v2103
    %v2129 = vcombine.low %v2078, %v2110
    %v2130 = vcombine.high %v2078, %v2110
    %v2131 = vcombine.low %v2087, %v2119
    %v2132 = vcombine.high %v2087, %v2119
    %v2133 = vcombine.low %v2094, %v2126
    %v2134 = vcombine.high %v2094, %v2126
    %v2135 = vcombine.low %v661, %v839
    %v2136 = vcombine.high %v661, %v839
    %v2138 = vunpack.c.l.s4 1983009808
    %v2139 = vunpack.c.0.s8 %v2138
    %v2140 = vlaneseq
    %v2141 = vshrl.u32 %v2140, 7
    %v2142 = vsub.s32 %v2139, %v2141
    %v2143 = vrot.slane %v2135, %v2142
    %v2145 = vunpack.c.l.s4 1983009808
    %v2146 = vunpack.c.0.s8 %v2145
    %v2147 = vlaneseq
    %v2148 = vshrl.u32 %v2147, 7
    %v2149 = vsub.s32 %v2146, %v2148
    %v2150 = vrot.slane %v2136, %v2149
    %v2151 = vcombine.low %v750, %v928
    %v2152 = vcombine.high %v750, %v928
    %v2154 = vunpack.c.l.s4 1983009808
    %v2155 = vunpack.c.0.s8 %v2154
    %v2156 = vlaneseq
    %v2157 = vshrl.u32 %v2156, 7
    %v2158 = vsub.s32 %v2155, %v2157
    %v2159 = vrot.slane %v2151, %v2158
    %v2161 = vunpack.c.l.s4 1983009808
    %v2162 = vunpack.c.0.s8 %v2161
    %v2163 = vlaneseq
    %v2164 = vshrl.u32 %v2163, 7
    %v2165 = vsub.s32 %v2162, %v2164
    %v2166 = vrot.slane %v2152, %v2165
    %v2167 = vcombine.low %v1017, %v1195
    %v2168 = vcombine.high %v1017, %v1195
    %v2170 = vunpack.c.l.s4 1983009808
    %v2171 = vunpack.c.0.s8 %v2170
    %v2172 = vlaneseq
    %v2173 = vshrl.u32 %v2172, 7
    %v2174 = vsub.s32 %v2171, %v2173
    %v2175 = vrot.slane %v2167, %v2174
    %v2177 = vunpack.c.l.s4 1983009808
    %v2178 = vunpack.c.0.s8 %v2177
    %v2179 = vlaneseq
    %v2180 = vshrl.u32 %v2179, 7
    %v2181 = vsub.s32 %v2178, %v2180
    %v2182 = vrot.slane %v2168, %v2181
    %v2183 = vcombine.low %v1106, %v1284
    %v2184 = vcombine.high %v1106, %v1284
    %v2186 = vunpack.c.l.s4 1983009808
    %v2187 = vunpack.c.0.s8 %v2186
    %v2188 = vlaneseq
    %v2189 = vshrl.u32 %v2188, 7
    %v2190 = vsub.s32 %v2187, %v2189
    %v2191 = vrot.slane %v2183, %v2190
    %v2193 = vunpack.c.l.s4 1983009808
    %v2194 = vunpack.c.0.s8 %v2193
    %v2195 = vlaneseq
    %v2196 = vshrl.u32 %v2195, 7
    %v2197 = vsub.s32 %v2194, %v2196
    %v2198 = vrot.slane %v2184, %v2197
    %v2199 = vcombine.low %v2143, %v2159
    %v2200 = vcombine.high %v2143, %v2159
    %v2202 = vunpack.c.l.s4 1934713408
    %v2203 = vunpack.c.0.s8 %v2202
    %v2204 = vlaneseq
    %v2205 = vshrl.u32 %v2204, 7
    %v2206 = vsub.s32 %v2203, %v2205
    %v2207 = vrot.slane %v2199, %v2206
    %v2209 = vunpack.c.l.s4 1934713408
    %v2210 = vunpack.c.0.s8 %v2209
    %v2211 = vlaneseq
    %v2212 = vshrl.u32 %v2211, 7
    %v2213 = vsub.s32 %v2210, %v2212
    %v2214 = vrot.slane %v2200, %v2213
    %v2215 = vcombine.low %v2150, %v2166
    %v2216 = vcombine.high %v2150, %v2166
    %v2218 = vunpack.c.l.s4 1934713408
    %v2219 = vunpack.c.0.s8 %v2218
    %v2220 = vlaneseq
    %v2221 = vshrl.u32 %v2220, 7
    %v2222 = vsub.s32 %v2219, %v2221
    %v2223 = vrot.slane %v2215, %v2222
    %v2225 = vunpack.c.l.s4 1934713408
    %v2226 = vunpack.c.0.s8 %v2225
    %v2227 = vlaneseq
    %v2228 = vshrl.u32 %v2227, 7
    %v2229 = vsub.s32 %v2226, %v2228
    %v2230 = vrot.slane %v2216, %v2229
    %v2231 = vcombine.low %v2175, %v2191
    %v2232 = vcombine.high %v2175, %v2191
    %v2234 = vunpack.c.l.s4 1934713408
    %v2235 = vunpack.c.0.s8 %v2234
    %v2236 = vlaneseq
    %v2237 = vshrl.u32 %v2236, 7
    %v2238 = vsub.s32 %v2235, %v2237
    %v2239 = vrot.slane %v2231, %v2238
    %v2241 = vunpack.c.l.s4 1934713408
    %v2242 = vunpack.c.0.s8 %v2241
    %v2243 = vlaneseq
    %v2244 = vshrl.u32 %v2243, 7
    %v2245 = vsub.s32 %v2242, %v2244
    %v2246 = vrot.slane %v2232, %v2245
    %v2247 = vcombine.low %v2182, %v2198
    %v2248 = vcombine.high %v2182, %v2198
    %v2250 = vunpack.c.l.s4 1934713408
    %v2251 = vunpack.c.0.s8 %v2250
    %v2252 = vlaneseq
    %v2253 = vshrl.u32 %v2252, 7
    %v2254 = vsub.s32 %v2251, %v2253
    %v2255 = vrot.slane %v2247, %v2254
    %v2257 = vunpack.c.l.s4 1934713408
    %v2258 = vunpack.c.0.s8 %v2257
    %v2259 = vlaneseq
    %v2260 = vshrl.u32 %v2259, 7
    %v2261 = vsub.s32 %v2258, %v2260
    %v2262 = vrot.slane %v2248, %v2261
    %v2263 = vcombine.low %v2207, %v2239
    %v2264 = vcombine.high %v2207, %v2239
    %v2265 = vcombine.low %v2214, %v2246
    %v2266 = vcombine.high %v2214, %v2246
    %v2267 = vcombine.low %v2223, %v2255
    %v2268 = vcombine.high %v2223, %v2255
    %v2269 = vcombine.low %v2230, %v2262
    %v2270 = vcombine.high %v2230, %v2262
    %v2271 = vcombine.low %v1368, %v1546
    %v2272 = vcombine.high %v1368, %v1546
    %v2274 = vunpack.c.l.s4 1983009808
    %v2275 = vunpack.c.0.s8 %v2274
    %v2276 = vlaneseq
    %v2277 = vshrl.u32 %v2276, 7
    %v2278 = vsub.s32 %v2275, %v2277
    %v2279 = vrot.slane %v2271, %v2278
    %v2281 = vunpack.c.l.s4 1983009808
    %v2282 = vunpack.c.0.s8 %v2281
    %v2283 = vlaneseq
    %v2284 = vshrl.u32 %v2283, 7
    %v2285 = vsub.s32 %v2282, %v2284
    %v2286 = vrot.slane %v2272, %v2285
    %v2287 = vcombine.low %v1457, %v1635
    %v2288 = vcombine.high %v1457, %v1635
    %v2290 = vunpack.c.l.s4 1983009808
    %v2291 = vunpack.c.0.s8 %v2290
    %v2292 = vlaneseq
    %v2293 = vshrl.u32 %v2292, 7
    %v2294 = vsub.s32 %v2291, %v2293
    %v2295 = vrot.slane %v2287, %v2294
    %v2297 = vunpack.c.l.s4 1983009808
    %v2298 = vunpack.c.0.s8 %v2297
    %v2299 = vlaneseq
    %v2300 = vshrl.u32 %v2299, 7
    %v2301 = vsub.s32 %v2298, %v2300
    %v2302 = vrot.slane %v2288, %v2301
    %v2303 = vcombine.low %v1724, %v1902
    %v2304 = vcombine.high %v1724, %v1902
    %v2306 = vunpack.c.l.s4 1983009808
    %v2307 = vunpack.c.0.s8 %v2306
    %v2308 = vlaneseq
    %v2309 = vshrl.u32 %v2308, 7
    %v2310 = vsub.s32 %v2307, %v2309
    %v2311 = vrot.slane %v2303, %v2310
    %v2313 = vunpack.c.l.s4 1983009808
    %v2314 = vunpack.c.0.s8 %v2313
    %v2315 = vlaneseq
    %v2316 = vshrl.u32 %v2315, 7
    %v2317 = vsub.s32 %v2314, %v2316
    %v2318 = vrot.slane %v2304, %v2317
    %v2319 = vcombine.low %v1813, %v1991
    %v2320 = vcombine.high %v1813, %v1991
    %v2322 = vunpack.c.l.s4 1983009808
    %v2323 = vunpack.c.0.s8 %v2322
    %v2324 = vlaneseq
    %v2325 = vshrl.u32 %v2324, 7
    %v2326 = vsub.s32 %v2323, %v2325
    %v2327 = vrot.slane %v2319, %v2326
    %v2329 = vunpack.c.l.s4 1983009808
    %v2330 = vunpack.c.0.s8 %v2329
    %v2331 = vlaneseq
    %v2332 = vshrl.u32 %v2331, 7
    %v2333 = vsub.s32 %v2330, %v2332
    %v2334 = vrot.slane %v2320, %v2333
    %v2335 = vcombine.low %v2279, %v2295
    %v2336 = vcombine.high %v2279, %v2295
    %v2338 = vunpack.c.l.s4 1934713408
    %v2339 = vunpack.c.0.s8 %v2338
    %v2340 = vlaneseq
    %v2341 = vshrl.u32 %v2340, 7
    %v2342 = vsub.s32 %v2339, %v2341
    %v2343 = vrot.slane %v2335, %v2342
    %v2345 = vunpack.c.l.s4 1934713408
    %v2346 = vunpack.c.0.s8 %v2345
    %v2347 = vlaneseq
    %v2348 = vshrl.u32 %v2347, 7
    %v2349 = vsub.s32 %v2346, %v2348
    %v2350 = vrot.slane %v2336, %v2349
    %v2351 = vcombine.low %v2286, %v2302
    %v2352 = vcombine.high %v2286, %v2302
    %v2354 = vunpack.c.l.s4 1934713408
    %v2355 = vunpack.c.0.s8 %v2354
    %v2356 = vlaneseq
    %v2357 = vshrl.u32 %v2356, 7
    %v2358 = vsub.s32 %v2355, %v2357
    %v2359 = vrot.slane %v2351, %v2358
    %v2361 = vunpack.c.l.s4 1934713408
    %v2362 = vunpack.c.0.s8 %v2361
    %v2363 = vlaneseq
    %v2364 = vshrl.u32 %v2363, 7
    %v2365 = vsub.s32 %v2362, %v2364
    %v2366 = vrot.slane %v2352, %v2365
    %v2367 = vcombine.low %v2311, %v2327
    %v2368 = vcombine.high %v2311, %v2327
    %v2370 = vunpack.c.l.s4 1934713408
    %v2371 = vunpack.c.0.s8 %v2370
    %v2372 = vlaneseq
    %v2373 = vshrl.u32 %v2372, 7
    %v2374 = vsub.s32 %v2371, %v2373
    %v2375 = vrot.slane %v2367, %v2374
    %v2377 = vunpack.c.l.s4 1934713408
    %v2378 = vunpack.c.0.s8 %v2377
    %v2379 = vlaneseq
    %v2380 = vshrl.u32 %v2379, 7
    %v2381 = vsub.s32 %v2378, %v2380
    %v2382 = vrot.slane %v2368, %v2381
    %v2383 = vcombine.low %v2318, %v2334
    %v2384 = vcombine.high %v2318, %v2334
    %v2386 = vunpack.c.l.s4 1934713408
    %v2387 = vunpack.c.0.s8 %v2386
    %v2388 = vlaneseq
    %v2389 = vshrl.u32 %v2388, 7
    %v2390 = vsub.s32 %v2387, %v2389
    %v2391 = vrot.slane %v2383, %v2390
    %v2393 = vunpack.c.l.s4 1934713408
    %v2394 = vunpack.c.0.s8 %v2393
    %v2395 = vlaneseq
    %v2396 = vshrl.u32 %v2395, 7
    %v2397 = vsub.s32 %v2394, %v2396
    %v2398 = vrot.slane %v2384, %v2397
    %v2399 = vcombine.low %v2343, %v2375
    %v2400 = vcombine.high %v2343, %v2375
    %v2401 = vcombine.low %v2350, %v2382
    %v2402 = vcombine.high %v2350, %v2382
    %v2403 = vcombine.low %v2359, %v2391
    %v2404 = vcombine.high %v2359, %v2391
    %v2405 = vcombine.low %v2366, %v2398
    %v2406 = vcombine.high %v2366, %v2398
    %v2407 = vcombine.low %v1373, %v1551
    %v2408 = vcombine.high %v1373, %v1551
    %v2410 = vunpack.c.l.s4 1983009808
    %v2411 = vunpack.c.0.s8 %v2410
    %v2412 = vlaneseq
    %v2413 = vshrl.u32 %v2412, 7
    %v2414 = vsub.s32 %v2411, %v2413
    %v2415 = vrot.slane %v2407, %v2414
    %v2417 = vunpack.c.l.s4 1983009808
    %v2418 = vunpack.c.0.s8 %v2417
    %v2419 = vlaneseq
    %v2420 = vshrl.u32 %v2419, 7
    %v2421 = vsub.s32 %v2418, %v2420
    %v2422 = vrot.slane %v2408, %v2421
    %v2423 = vcombine.low %v1462, %v1640
    %v2424 = vcombine.high %v1462, %v1640
    %v2426 = vunpack.c.l.s4 1983009808
    %v2427 = vunpack.c.0.s8 %v2426
    %v2428 = vlaneseq
    %v2429 = vshrl.u32 %v2428, 7
    %v2430 = vsub.s32 %v2427, %v2429
    %v2431 = vrot.slane %v2423, %v2430
    %v2433 = vunpack.c.l.s4 1983009808
    %v2434 = vunpack.c.0.s8 %v2433
    %v2435 = vlaneseq
    %v2436 = vshrl.u32 %v2435, 7
    %v2437 = vsub.s32 %v2434, %v2436
    %v2438 = vrot.slane %v2424, %v2437
    %v2439 = vcombine.low %v1729, %v1907
    %v2440 = vcombine.high %v1729, %v1907
    %v2442 = vunpack.c.l.s4 1983009808
    %v2443 = vunpack.c.0.s8 %v2442
    %v2444 = vlaneseq
    %v2445 = vshrl.u32 %v2444, 7
    %v2446 = vsub.s32 %v2443, %v2445
    %v2447 = vrot.slane %v2439, %v2446
    %v2449 = vunpack.c.l.s4 1983009808
    %v2450 = vunpack.c.0.s8 %v2449
    %v2451 = vlaneseq
    %v2452 = vshrl.u32 %v2451, 7
    %v2453 = vsub.s32 %v2450, %v2452
    %v2454 = vrot.slane %v2440, %v2453
    %v2455 = vcombine.low %v1818, %v1996
    %v2456 = vcombine.high %v1818, %v1996
    %v2458 = vunpack.c.l.s4 1983009808
    %v2459 = vunpack.c.0.s8 %v2458
    %v2460 = vlaneseq
    %v2461 = vshrl.u32 %v2460, 7
    %v2462 = vsub.s32 %v2459, %v2461
    %v2463 = vrot.slane %v2455, %v2462
    %v2465 = vunpack.c.l.s4 1983009808
    %v2466 = vunpack.c.0.s8 %v2465
    %v2467 = vlaneseq
    %v2468 = vshrl.u32 %v2467, 7
    %v2469 = vsub.s32 %v2466, %v2468
    %v2470 = vrot.slane %v2456, %v2469
    %v2471 = vcombine.low %v2415, %v2431
    %v2472 = vcombine.high %v2415, %v2431
    %v2474 = vunpack.c.l.s4 1934713408
    %v2475 = vunpack.c.0.s8 %v2474
    %v2476 = vlaneseq
    %v2477 = vshrl.u32 %v2476, 7
    %v2478 = vsub.s32 %v2475, %v2477
    %v2479 = vrot.slane %v2471, %v2478
    %v2481 = vunpack.c.l.s4 1934713408
    %v2482 = vunpack.c.0.s8 %v2481
    %v2483 = vlaneseq
    %v2484 = vshrl.u32 %v2483, 7
    %v2485 = vsub.s32 %v2482, %v2484
    %v2486 = vrot.slane %v2472, %v2485
    %v2487 = vcombine.low %v2422, %v2438
    %v2488 = vcombine.high %v2422, %v2438
    %v2490 = vunpack.c.l.s4 1934713408
    %v2491 = vunpack.c.0.s8 %v2490
    %v2492 = vlaneseq
    %v2493 = vshrl.u32 %v2492, 7
    %v2494 = vsub.s32 %v2491, %v2493
    %v2495 = vrot.slane %v2487, %v2494
    %v2497 = vunpack.c.l.s4 1934713408
    %v2498 = vunpack.c.0.s8 %v2497
    %v2499 = vlaneseq
    %v2500 = vshrl.u32 %v2499, 7
    %v2501 = vsub.s32 %v2498, %v2500
    %v2502 = vrot.slane %v2488, %v2501
    %v2503 = vcombine.low %v2447, %v2463
    %v2504 = vcombine.high %v2447, %v2463
    %v2506 = vunpack.c.l.s4 1934713408
    %v2507 = vunpack.c.0.s8 %v2506
    %v2508 = vlaneseq
    %v2509 = vshrl.u32 %v2508, 7
    %v2510 = vsub.s32 %v2507, %v2509
    %v2511 = vrot.slane %v2503, %v2510
    %v2513 = vunpack.c.l.s4 1934713408
    %v2514 = vunpack.c.0.s8 %v2513
    %v2515 = vlaneseq
    %v2516 = vshrl.u32 %v2515, 7
    %v2517 = vsub.s32 %v2514, %v2516
    %v2518 = vrot.slane %v2504, %v2517
    %v2519 = vcombine.low %v2454, %v2470
    %v2520 = vcombine.high %v2454, %v2470
    %v2522 = vunpack.c.l.s4 1934713408
    %v2523 = vunpack.c.0.s8 %v2522
    %v2524 = vlaneseq
    %v2525 = vshrl.u32 %v2524, 7
    %v2526 = vsub.s32 %v2523, %v2525
    %v2527 = vrot.slane %v2519, %v2526
    %v2529 = vunpack.c.l.s4 1934713408
    %v2530 = vunpack.c.0.s8 %v2529
    %v2531 = vlaneseq
    %v2532 = vshrl.u32 %v2531, 7
    %v2533 = vsub.s32 %v2530, %v2532
    %v2534 = vrot.slane %v2520, %v2533
    %v2535 = vcombine.low %v2479, %v2511
    %v2536 = vcombine.high %v2479, %v2511
    %v2537 = vcombine.low %v2486, %v2518
    %v2538 = vcombine.high %v2486, %v2518
    %v2539 = vcombine.low %v2495, %v2527
    %v2540 = vcombine.high %v2495, %v2527
    %v2541 = vcombine.low %v2502, %v2534
    %v2542 = vcombine.high %v2502, %v2534
    %2545 = vrot.lane.b32.xlu0 %v2128, 16
    %v2546 = vpop.permute.xlu0 %2545
    %2547 = vrot.lane.b32.xlu0 %v2400, 16
    %v2548 = vpop.permute.xlu0 %2547
    %2553 = vrot.lane.b32.xlu0 %v2129, 32
    %v2554 = vpop.permute.xlu0 %2553
    %2555 = vrot.lane.b32.xlu0 %v2401, 32
    %v2556 = vpop.permute.xlu0 %2555
    %2561 = vrot.lane.b32.xlu0 %v2130, 48
    %v2562 = vpop.permute.xlu0 %2561
    %2563 = vrot.lane.b32.xlu0 %v2402, 48
    %v2564 = vpop.permute.xlu0 %2563
    %2569 = vrot.lane.b32.xlu0 %v2131, 64
    %v2570 = vpop.permute.xlu0 %2569
    %2571 = vrot.lane.b32.xlu0 %v2403, 64
    %v2572 = vpop.permute.xlu0 %2571
    %2577 = vrot.lane.b32.xlu0 %v2132, 80
    %v2578 = vpop.permute.xlu0 %2577
    %2579 = vrot.lane.b32.xlu0 %v2404, 80
    %v2580 = vpop.permute.xlu0 %2579
    %2585 = vrot.lane.b32.xlu0 %v2133, 96
    %v2586 = vpop.permute.xlu0 %2585
    %2587 = vrot.lane.b32.xlu0 %v2405, 96
    %v2588 = vpop.permute.xlu0 %2587
    %2593 = vrot.lane.b32.xlu0 %v2134, 112
    %v2594 = vpop.permute.xlu0 %2593
    %2595 = vrot.lane.b32.xlu0 %v2406, 112
    %v2596 = vpop.permute.xlu0 %2595
    %2601 = vrot.lane.b32.xlu0 %v2264, 16
    %v2602 = vpop.permute.xlu0 %2601
    %2603 = vrot.lane.b32.xlu0 %v2536, 16
    %v2604 = vpop.permute.xlu0 %2603
    %2609 = vrot.lane.b32.xlu0 %v2265, 32
    %v2610 = vpop.permute.xlu0 %2609
    %2611 = vrot.lane.b32.xlu0 %v2537, 32
    %v2612 = vpop.permute.xlu0 %2611
    %2617 = vrot.lane.b32.xlu0 %v2266, 48
    %v2618 = vpop.permute.xlu0 %2617
    %2619 = vrot.lane.b32.xlu0 %v2538, 48
    %v2620 = vpop.permute.xlu0 %2619
    %2625 = vrot.lane.b32.xlu0 %v2267, 64
    %v2626 = vpop.permute.xlu0 %2625
    %2627 = vrot.lane.b32.xlu0 %v2539, 64
    %v2628 = vpop.permute.xlu0 %2627
    %2633 = vrot.lane.b32.xlu0 %v2268, 80
    %v2634 = vpop.permute.xlu0 %2633
    %2635 = vrot.lane.b32.xlu0 %v2540, 80
    %v2636 = vpop.permute.xlu0 %2635
    %2641 = vrot.lane.b32.xlu0 %v2269, 96
    %v2642 = vpop.permute.xlu0 %2641
    %2643 = vrot.lane.b32.xlu0 %v2541, 96
    %v2644 = vpop.permute.xlu0 %2643
    %2649 = vrot.lane.b32.xlu0 %v2270, 112
    %v2650 = vpop.permute.xlu0 %2649
    %2651 = vrot.lane.b32.xlu0 %v2542, 112
    %v2652 = vpop.permute.xlu0 %2651
    %vm2655 = vcmask 130048
    %v2656 = vsel %vm2655, %v2127, %v2546
    %v2657 = vsel %vm2655, %v2399, %v2548
    %v2658 = vsel %vm61, %v2656, %v2554
    %v2659 = vsel %vm61, %v2657, %v2556
    %vm2660 = vcmask 392192
    %v2661 = vsel %vm2660, %v2658, %v2562
    %v2662 = vsel %vm2660, %v2659, %v2564
    %vm2663 = vcmask 523264
    %v2664 = vsel %vm2663, %v2661, %v2570
    %v2665 = vsel %vm2663, %v2662, %v2572
    %vm2666 = vcmask 654336
    %v2667 = vsel %vm2666, %v2664, %v2578
    %v2668 = vsel %vm2666, %v2665, %v2580
    %vm2669 = vcmask 785408
    %v2670 = vsel %vm2669, %v2667, %v2586
    %v2671 = vsel %vm2669, %v2668, %v2588
    %vm2672 = vcmask 916480
    %v2673 = vsel %vm2672, %v2670, %v2594
    %v2674 = vsel %vm2672, %v2671, %v2596
    %v2675 = vsel %vm2655, %v2263, %v2602
    %v2676 = vsel %vm2655, %v2535, %v2604
    %v2677 = vsel %vm61, %v2675, %v2610
    %v2678 = vsel %vm61, %v2676, %v2612
    %v2679 = vsel %vm2660, %v2677, %v2618
    %v2680 = vsel %vm2660, %v2678, %v2620
    %v2681 = vsel %vm2663, %v2679, %v2626
    %v2682 = vsel %vm2663, %v2680, %v2628
    %v2683 = vsel %vm2666, %v2681, %v2634
    %v2684 = vsel %vm2666, %v2682, %v2636
    %v2685 = vsel %vm2669, %v2683, %v2642
    %v2686 = vsel %vm2669, %v2684, %v2644
    %v2687 = vsel %vm2672, %v2685, %v2650
    %v2688 = vsel %vm2672, %v2686, %v2652
    %v2689 = vmul.f32 %v2673, 0.13245323
    %v2690 = vmul.f32 %v2687, 0.13245323
    %v2691 = vmul.f32 %v2674, 0.13245323
    %v2692 = vmul.f32 %v2688, 0.13245323
    %v2693 = vld [vmem:[%s1] sm:$0x3]
    %v2694 = vlaneseq
    %v2695 = vshrl.u32 %v2694, 7
    %v2696 = vsub.s32 0, %v2695
    %v2697 = vrot.slane %v2693, %v2696
    %2699 = vbcast.lane.b32.xlu0 %v2697, 256
    %v2700 = vpop.permute.xlu0 %2699
    %v2701 = vlaneseq
    %v2702 = vshrl.u32 %v2701, 7
    %v2703 = vsub.s32 1, %v2702
    %v2704 = vrot.slane %v2693, %v2703
    %2706 = vbcast.lane.b32.xlu0 %v2704, 256
    %v2707 = vpop.permute.xlu0 %2706
    %v2708 = vadd.f32 %v2689, %v2700
    %v2709 = vadd.f32 %v2690, %v2700
    %v2710 = vadd.f32 %v2691, %v2707
    %v2711 = vadd.f32 %v2692, %v2707
    %v2712 = vrot.slane %v2708, 4
    %v2713 = vmax.f32 %v2708, %v2712
    %v2714 = vrot.slane %v2713, 2
    %v2715 = vmax.f32 %v2713, %v2714
    %v2716 = vrot.slane %v2715, 1
    %v2717 = vmax.f32 %v2715, %v2716
    %v2718 = vrot.slane %v2709, 4
    %v2719 = vmax.f32 %v2709, %v2718
    %v2720 = vrot.slane %v2719, 2
    %v2721 = vmax.f32 %v2719, %v2720
    %v2722 = vrot.slane %v2721, 1
    %v2723 = vmax.f32 %v2721, %v2722
    %v2724 = vrot.slane %v2710, 4
    %v2725 = vmax.f32 %v2710, %v2724
    %v2726 = vrot.slane %v2725, 2
    %v2727 = vmax.f32 %v2725, %v2726
    %v2728 = vrot.slane %v2727, 1
    %v2729 = vmax.f32 %v2727, %v2728
    %v2730 = vrot.slane %v2711, 4
    %v2731 = vmax.f32 %v2711, %v2730
    %v2732 = vrot.slane %v2731, 2
    %v2733 = vmax.f32 %v2731, %v2732
    %v2734 = vrot.slane %v2733, 1
    %v2735 = vmax.f32 %v2733, %v2734
    %v2736 = vsub.f32 %v2708, %v2717
    %v2737 = vsub.f32 %v2709, %v2723
    %v2738 = vsub.f32 %v2710, %v2729
    %v2739 = vsub.f32 %v2711, %v2735
    %v2740 = vmul.f32 %v2736, 1.442695
    %v2741 = vpow.pop %v2740
    %v2742 = vmul.f32 %v2737, 1.442695
    %v2743 = vpow.pop %v2742
    %v2744 = vmul.f32 %v2738, 1.442695
    %v2745 = vpow.pop %v2744
    %v2746 = vmul.f32 %v2739, 1.442695
    %v2747 = vpow.pop %v2746
    %v2748 = vrot.slane %v2741, 4
    %v2749 = vadd.f32 %v2741, %v2748
    %v2750 = vrot.slane %v2749, 2
    %v2751 = vadd.f32 %v2749, %v2750
    %v2752 = vrot.slane %v2751, 1
    %v2753 = vadd.f32 %v2751, %v2752
    %v2754 = vrot.slane %v2743, 4
    %v2755 = vadd.f32 %v2743, %v2754
    %v2756 = vrot.slane %v2755, 2
    %v2757 = vadd.f32 %v2755, %v2756
    %v2758 = vrot.slane %v2757, 1
    %v2759 = vadd.f32 %v2757, %v2758
    %v2760 = vrot.slane %v2745, 4
    %v2761 = vadd.f32 %v2745, %v2760
    %v2762 = vrot.slane %v2761, 2
    %v2763 = vadd.f32 %v2761, %v2762
    %v2764 = vrot.slane %v2763, 1
    %v2765 = vadd.f32 %v2763, %v2764
    %v2766 = vrot.slane %v2747, 4
    %v2767 = vadd.f32 %v2747, %v2766
    %v2768 = vrot.slane %v2767, 2
    %v2769 = vadd.f32 %v2767, %v2768
    %v2770 = vrot.slane %v2769, 1
    %v2771 = vadd.f32 %v2769, %v2770
    %v2772 = vrcp.pop %v2753
    %v2773 = vrcp.pop %v2759
    %v2774 = vrcp.pop %v2765
    %v2775 = vrcp.pop %v2771
    %v2776 = vmul.f32 %v2741, %v2772
    %v2777 = vmul.f32 %v2743, %v2773
    %v2778 = vmul.f32 %v2745, %v2774
    %v2779 = vmul.f32 %v2747, %v2775
    %v2780 = vsel %vm61, %v18, 0.0
    %2781 = vadd.xlane.f32.xlu0 %v2780
    %v2782 = vpop.xlane.xlu0 %2781
    %v2783 = vsel %vm61, %v19, 0.0
    %2784 = vadd.xlane.f32.xlu0 %v2783
    %v2785 = vpop.xlane.xlu0 %2784
    %v2786 = vsel %vm61, %v20, 0.0
    %2787 = vadd.xlane.f32.xlu0 %v2786
    %v2788 = vpop.xlane.xlu0 %2787
    %v2789 = vsel %vm61, %v21, 0.0
    %2790 = vadd.xlane.f32.xlu0 %v2789
    %v2791 = vpop.xlane.xlu0 %2790
    %v2792 = vsel %vm61, %v22, 0.0
    %2793 = vadd.xlane.f32.xlu0 %v2792
    %v2794 = vpop.xlane.xlu0 %2793
    %v2795 = vsel %vm61, %v23, 0.0
    %2796 = vadd.xlane.f32.xlu0 %v2795
    %v2797 = vpop.xlane.xlu0 %2796
    %v2798 = vsel %vm61, %v24, 0.0
    %2799 = vadd.xlane.f32.xlu0 %v2798
    %v2800 = vpop.xlane.xlu0 %2799
    %v2801 = vsel %vm61, %v25, 0.0
    %2802 = vadd.xlane.f32.xlu0 %v2801
    %v2803 = vpop.xlane.xlu0 %2802
    %v2804 = vsel %vm61, %v26, 0.0
    %2805 = vadd.xlane.f32.xlu0 %v2804
    %v2806 = vpop.xlane.xlu0 %2805
    %v2807 = vsel %vm61, %v27, 0.0
    %2808 = vadd.xlane.f32.xlu0 %v2807
    %v2809 = vpop.xlane.xlu0 %2808
    %v2810 = vsel %vm61, %v28, 0.0
    %2811 = vadd.xlane.f32.xlu0 %v2810
    %v2812 = vpop.xlane.xlu0 %2811
    %v2813 = vsel %vm61, %v29, 0.0
    %2814 = vadd.xlane.f32.xlu0 %v2813
    %v2815 = vpop.xlane.xlu0 %2814
    %v2816 = vsel %vm61, %v30, 0.0
    %2817 = vadd.xlane.f32.xlu0 %v2816
    %v2818 = vpop.xlane.xlu0 %2817
    %v2819 = vsel %vm61, %v31, 0.0
    %2820 = vadd.xlane.f32.xlu0 %v2819
    %v2821 = vpop.xlane.xlu0 %2820
    %v2822 = vsel %vm61, %v32, 0.0
    %2823 = vadd.xlane.f32.xlu0 %v2822
    %v2824 = vpop.xlane.xlu0 %2823
    %v2825 = vsel %vm61, %v33, 0.0
    %2826 = vadd.xlane.f32.xlu0 %v2825
    %v2827 = vpop.xlane.xlu0 %2826
    %v2828 = vsel %vm61, %v34, 0.0
    %2829 = vadd.xlane.f32.xlu0 %v2828
    %v2830 = vpop.xlane.xlu0 %2829
    %v2831 = vsel %vm61, %v35, 0.0
    %2832 = vadd.xlane.f32.xlu0 %v2831
    %v2833 = vpop.xlane.xlu0 %2832
    %v2834 = vsel %vm61, %v36, 0.0
    %2835 = vadd.xlane.f32.xlu0 %v2834
    %v2836 = vpop.xlane.xlu0 %2835
    %v2837 = vsel %vm61, %v37, 0.0
    %2838 = vadd.xlane.f32.xlu0 %v2837
    %v2839 = vpop.xlane.xlu0 %2838
    %v2840 = vsel %vm61, %v38, 0.0
    %2841 = vadd.xlane.f32.xlu0 %v2840
    %v2842 = vpop.xlane.xlu0 %2841
    %v2843 = vsel %vm61, %v39, 0.0
    %2844 = vadd.xlane.f32.xlu0 %v2843
    %v2845 = vpop.xlane.xlu0 %2844
    %v2846 = vsel %vm61, %v40, 0.0
    %2847 = vadd.xlane.f32.xlu0 %v2846
    %v2848 = vpop.xlane.xlu0 %2847
    %v2849 = vsel %vm61, %v41, 0.0
    %2850 = vadd.xlane.f32.xlu0 %v2849
    %v2851 = vpop.xlane.xlu0 %2850
    %v2852 = vsel %vm61, %v42, 0.0
    %2853 = vadd.xlane.f32.xlu0 %v2852
    %v2854 = vpop.xlane.xlu0 %2853
    %v2855 = vsel %vm61, %v43, 0.0
    %2856 = vadd.xlane.f32.xlu0 %v2855
    %v2857 = vpop.xlane.xlu0 %2856
    %v2858 = vsel %vm61, %v44, 0.0
    %2859 = vadd.xlane.f32.xlu0 %v2858
    %v2860 = vpop.xlane.xlu0 %2859
    %v2861 = vsel %vm61, %v45, 0.0
    %2862 = vadd.xlane.f32.xlu0 %v2861
    %v2863 = vpop.xlane.xlu0 %2862
    %v2864 = vsel %vm61, %v46, 0.0
    %2865 = vadd.xlane.f32.xlu0 %v2864
    %v2866 = vpop.xlane.xlu0 %2865
    %v2867 = vsel %vm61, %v47, 0.0
    %2868 = vadd.xlane.f32.xlu0 %v2867
    %v2869 = vpop.xlane.xlu0 %2868
    %v2870 = vsel %vm61, %v48, 0.0
    %2871 = vadd.xlane.f32.xlu0 %v2870
    %v2872 = vpop.xlane.xlu0 %2871
    %v2873 = vsel %vm61, %v49, 0.0
    %2874 = vadd.xlane.f32.xlu0 %v2873
    %v2875 = vpop.xlane.xlu0 %2874
    %v2876 = vcombine.low %v2782, %v2794
    %v2877 = vcombine.high %v2782, %v2794
    %v2879 = vunpack.c.l.s4 1983009808
    %v2880 = vunpack.c.0.s8 %v2879
    %v2881 = vlaneseq
    %v2882 = vshrl.u32 %v2881, 7
    %v2883 = vsub.s32 %v2880, %v2882
    %v2884 = vrot.slane %v2876, %v2883
    %v2886 = vunpack.c.l.s4 1983009808
    %v2887 = vunpack.c.0.s8 %v2886
    %v2888 = vlaneseq
    %v2889 = vshrl.u32 %v2888, 7
    %v2890 = vsub.s32 %v2887, %v2889
    %v2891 = vrot.slane %v2877, %v2890
    %v2892 = vcombine.low %v2788, %v2800
    %v2893 = vcombine.high %v2788, %v2800
    %v2895 = vunpack.c.l.s4 1983009808
    %v2896 = vunpack.c.0.s8 %v2895
    %v2897 = vlaneseq
    %v2898 = vshrl.u32 %v2897, 7
    %v2899 = vsub.s32 %v2896, %v2898
    %v2900 = vrot.slane %v2892, %v2899
    %v2902 = vunpack.c.l.s4 1983009808
    %v2903 = vunpack.c.0.s8 %v2902
    %v2904 = vlaneseq
    %v2905 = vshrl.u32 %v2904, 7
    %v2906 = vsub.s32 %v2903, %v2905
    %v2907 = vrot.slane %v2893, %v2906
    %v2908 = vcombine.low %v2806, %v2818
    %v2909 = vcombine.high %v2806, %v2818
    %v2911 = vunpack.c.l.s4 1983009808
    %v2912 = vunpack.c.0.s8 %v2911
    %v2913 = vlaneseq
    %v2914 = vshrl.u32 %v2913, 7
    %v2915 = vsub.s32 %v2912, %v2914
    %v2916 = vrot.slane %v2908, %v2915
    %v2918 = vunpack.c.l.s4 1983009808
    %v2919 = vunpack.c.0.s8 %v2918
    %v2920 = vlaneseq
    %v2921 = vshrl.u32 %v2920, 7
    %v2922 = vsub.s32 %v2919, %v2921
    %v2923 = vrot.slane %v2909, %v2922
    %v2924 = vcombine.low %v2812, %v2824
    %v2925 = vcombine.high %v2812, %v2824
    %v2927 = vunpack.c.l.s4 1983009808
    %v2928 = vunpack.c.0.s8 %v2927
    %v2929 = vlaneseq
    %v2930 = vshrl.u32 %v2929, 7
    %v2931 = vsub.s32 %v2928, %v2930
    %v2932 = vrot.slane %v2924, %v2931
    %v2934 = vunpack.c.l.s4 1983009808
    %v2935 = vunpack.c.0.s8 %v2934
    %v2936 = vlaneseq
    %v2937 = vshrl.u32 %v2936, 7
    %v2938 = vsub.s32 %v2935, %v2937
    %v2939 = vrot.slane %v2925, %v2938
    %v2940 = vcombine.low %v2884, %v2900
    %v2941 = vcombine.high %v2884, %v2900
    %v2943 = vunpack.c.l.s4 1934713408
    %v2944 = vunpack.c.0.s8 %v2943
    %v2945 = vlaneseq
    %v2946 = vshrl.u32 %v2945, 7
    %v2947 = vsub.s32 %v2944, %v2946
    %v2948 = vrot.slane %v2940, %v2947
    %v2950 = vunpack.c.l.s4 1934713408
    %v2951 = vunpack.c.0.s8 %v2950
    %v2952 = vlaneseq
    %v2953 = vshrl.u32 %v2952, 7
    %v2954 = vsub.s32 %v2951, %v2953
    %v2955 = vrot.slane %v2941, %v2954
    %v2956 = vcombine.low %v2891, %v2907
    %v2957 = vcombine.high %v2891, %v2907
    %v2959 = vunpack.c.l.s4 1934713408
    %v2960 = vunpack.c.0.s8 %v2959
    %v2961 = vlaneseq
    %v2962 = vshrl.u32 %v2961, 7
    %v2963 = vsub.s32 %v2960, %v2962
    %v2964 = vrot.slane %v2956, %v2963
    %v2966 = vunpack.c.l.s4 1934713408
    %v2967 = vunpack.c.0.s8 %v2966
    %v2968 = vlaneseq
    %v2969 = vshrl.u32 %v2968, 7
    %v2970 = vsub.s32 %v2967, %v2969
    %v2971 = vrot.slane %v2957, %v2970
    %v2972 = vcombine.low %v2916, %v2932
    %v2973 = vcombine.high %v2916, %v2932
    %v2975 = vunpack.c.l.s4 1934713408
    %v2976 = vunpack.c.0.s8 %v2975
    %v2977 = vlaneseq
    %v2978 = vshrl.u32 %v2977, 7
    %v2979 = vsub.s32 %v2976, %v2978
    %v2980 = vrot.slane %v2972, %v2979
    %v2982 = vunpack.c.l.s4 1934713408
    %v2983 = vunpack.c.0.s8 %v2982
    %v2984 = vlaneseq
    %v2985 = vshrl.u32 %v2984, 7
    %v2986 = vsub.s32 %v2983, %v2985
    %v2987 = vrot.slane %v2973, %v2986
    %v2988 = vcombine.low %v2923, %v2939
    %v2989 = vcombine.high %v2923, %v2939
    %v2991 = vunpack.c.l.s4 1934713408
    %v2992 = vunpack.c.0.s8 %v2991
    %v2993 = vlaneseq
    %v2994 = vshrl.u32 %v2993, 7
    %v2995 = vsub.s32 %v2992, %v2994
    %v2996 = vrot.slane %v2988, %v2995
    %v2998 = vunpack.c.l.s4 1934713408
    %v2999 = vunpack.c.0.s8 %v2998
    %v3000 = vlaneseq
    %v3001 = vshrl.u32 %v3000, 7
    %v3002 = vsub.s32 %v2999, %v3001
    %v3003 = vrot.slane %v2989, %v3002
    %v3004 = vcombine.low %v2948, %v2980
    %v3005 = vcombine.high %v2948, %v2980
    %v3006 = vcombine.low %v2955, %v2987
    %v3007 = vcombine.high %v2955, %v2987
    %v3008 = vcombine.low %v2964, %v2996
    %v3009 = vcombine.high %v2964, %v2996
    %v3010 = vcombine.low %v2971, %v3003
    %v3011 = vcombine.high %v2971, %v3003
    %v3012 = vcombine.low %v2785, %v2797
    %v3013 = vcombine.high %v2785, %v2797
    %v3015 = vunpack.c.l.s4 1983009808
    %v3016 = vunpack.c.0.s8 %v3015
    %v3017 = vlaneseq
    %v3018 = vshrl.u32 %v3017, 7
    %v3019 = vsub.s32 %v3016, %v3018
    %v3020 = vrot.slane %v3012, %v3019
    %v3022 = vunpack.c.l.s4 1983009808
    %v3023 = vunpack.c.0.s8 %v3022
    %v3024 = vlaneseq
    %v3025 = vshrl.u32 %v3024, 7
    %v3026 = vsub.s32 %v3023, %v3025
    %v3027 = vrot.slane %v3013, %v3026
    %v3028 = vcombine.low %v2791, %v2803
    %v3029 = vcombine.high %v2791, %v2803
    %v3031 = vunpack.c.l.s4 1983009808
    %v3032 = vunpack.c.0.s8 %v3031
    %v3033 = vlaneseq
    %v3034 = vshrl.u32 %v3033, 7
    %v3035 = vsub.s32 %v3032, %v3034
    %v3036 = vrot.slane %v3028, %v3035
    %v3038 = vunpack.c.l.s4 1983009808
    %v3039 = vunpack.c.0.s8 %v3038
    %v3040 = vlaneseq
    %v3041 = vshrl.u32 %v3040, 7
    %v3042 = vsub.s32 %v3039, %v3041
    %v3043 = vrot.slane %v3029, %v3042
    %v3044 = vcombine.low %v2809, %v2821
    %v3045 = vcombine.high %v2809, %v2821
    %v3047 = vunpack.c.l.s4 1983009808
    %v3048 = vunpack.c.0.s8 %v3047
    %v3049 = vlaneseq
    %v3050 = vshrl.u32 %v3049, 7
    %v3051 = vsub.s32 %v3048, %v3050
    %v3052 = vrot.slane %v3044, %v3051
    %v3054 = vunpack.c.l.s4 1983009808
    %v3055 = vunpack.c.0.s8 %v3054
    %v3056 = vlaneseq
    %v3057 = vshrl.u32 %v3056, 7
    %v3058 = vsub.s32 %v3055, %v3057
    %v3059 = vrot.slane %v3045, %v3058
    %v3060 = vcombine.low %v2815, %v2827
    %v3061 = vcombine.high %v2815, %v2827
    %v3063 = vunpack.c.l.s4 1983009808
    %v3064 = vunpack.c.0.s8 %v3063
    %v3065 = vlaneseq
    %v3066 = vshrl.u32 %v3065, 7
    %v3067 = vsub.s32 %v3064, %v3066
    %v3068 = vrot.slane %v3060, %v3067
    %v3070 = vunpack.c.l.s4 1983009808
    %v3071 = vunpack.c.0.s8 %v3070
    %v3072 = vlaneseq
    %v3073 = vshrl.u32 %v3072, 7
    %v3074 = vsub.s32 %v3071, %v3073
    %v3075 = vrot.slane %v3061, %v3074
    %v3076 = vcombine.low %v3020, %v3036
    %v3077 = vcombine.high %v3020, %v3036
    %v3079 = vunpack.c.l.s4 1934713408
    %v3080 = vunpack.c.0.s8 %v3079
    %v3081 = vlaneseq
    %v3082 = vshrl.u32 %v3081, 7
    %v3083 = vsub.s32 %v3080, %v3082
    %v3084 = vrot.slane %v3076, %v3083
    %v3086 = vunpack.c.l.s4 1934713408
    %v3087 = vunpack.c.0.s8 %v3086
    %v3088 = vlaneseq
    %v3089 = vshrl.u32 %v3088, 7
    %v3090 = vsub.s32 %v3087, %v3089
    %v3091 = vrot.slane %v3077, %v3090
    %v3092 = vcombine.low %v3027, %v3043
    %v3093 = vcombine.high %v3027, %v3043
    %v3095 = vunpack.c.l.s4 1934713408
    %v3096 = vunpack.c.0.s8 %v3095
    %v3097 = vlaneseq
    %v3098 = vshrl.u32 %v3097, 7
    %v3099 = vsub.s32 %v3096, %v3098
    %v3100 = vrot.slane %v3092, %v3099
    %v3102 = vunpack.c.l.s4 1934713408
    %v3103 = vunpack.c.0.s8 %v3102
    %v3104 = vlaneseq
    %v3105 = vshrl.u32 %v3104, 7
    %v3106 = vsub.s32 %v3103, %v3105
    %v3107 = vrot.slane %v3093, %v3106
    %v3108 = vcombine.low %v3052, %v3068
    %v3109 = vcombine.high %v3052, %v3068
    %v3111 = vunpack.c.l.s4 1934713408
    %v3112 = vunpack.c.0.s8 %v3111
    %v3113 = vlaneseq
    %v3114 = vshrl.u32 %v3113, 7
    %v3115 = vsub.s32 %v3112, %v3114
    %v3116 = vrot.slane %v3108, %v3115
    %v3118 = vunpack.c.l.s4 1934713408
    %v3119 = vunpack.c.0.s8 %v3118
    %v3120 = vlaneseq
    %v3121 = vshrl.u32 %v3120, 7
    %v3122 = vsub.s32 %v3119, %v3121
    %v3123 = vrot.slane %v3109, %v3122
    %v3124 = vcombine.low %v3059, %v3075
    %v3125 = vcombine.high %v3059, %v3075
    %v3127 = vunpack.c.l.s4 1934713408
    %v3128 = vunpack.c.0.s8 %v3127
    %v3129 = vlaneseq
    %v3130 = vshrl.u32 %v3129, 7
    %v3131 = vsub.s32 %v3128, %v3130
    %v3132 = vrot.slane %v3124, %v3131
    %v3134 = vunpack.c.l.s4 1934713408
    %v3135 = vunpack.c.0.s8 %v3134
    %v3136 = vlaneseq
    %v3137 = vshrl.u32 %v3136, 7
    %v3138 = vsub.s32 %v3135, %v3137
    %v3139 = vrot.slane %v3125, %v3138
    %v3140 = vcombine.low %v3084, %v3116
    %v3141 = vcombine.high %v3084, %v3116
    %v3142 = vcombine.low %v3091, %v3123
    %v3143 = vcombine.high %v3091, %v3123
    %v3144 = vcombine.low %v3100, %v3132
    %v3145 = vcombine.high %v3100, %v3132
    %v3146 = vcombine.low %v3107, %v3139
    %v3147 = vcombine.high %v3107, %v3139
    %v3148 = vcombine.low %v2830, %v2842
    %v3149 = vcombine.high %v2830, %v2842
    %v3151 = vunpack.c.l.s4 1983009808
    %v3152 = vunpack.c.0.s8 %v3151
    %v3153 = vlaneseq
    %v3154 = vshrl.u32 %v3153, 7
    %v3155 = vsub.s32 %v3152, %v3154
    %v3156 = vrot.slane %v3148, %v3155
    %v3158 = vunpack.c.l.s4 1983009808
    %v3159 = vunpack.c.0.s8 %v3158
    %v3160 = vlaneseq
    %v3161 = vshrl.u32 %v3160, 7
    %v3162 = vsub.s32 %v3159, %v3161
    %v3163 = vrot.slane %v3149, %v3162
    %v3164 = vcombine.low %v2836, %v2848
    %v3165 = vcombine.high %v2836, %v2848
    %v3167 = vunpack.c.l.s4 1983009808
    %v3168 = vunpack.c.0.s8 %v3167
    %v3169 = vlaneseq
    %v3170 = vshrl.u32 %v3169, 7
    %v3171 = vsub.s32 %v3168, %v3170
    %v3172 = vrot.slane %v3164, %v3171
    %v3174 = vunpack.c.l.s4 1983009808
    %v3175 = vunpack.c.0.s8 %v3174
    %v3176 = vlaneseq
    %v3177 = vshrl.u32 %v3176, 7
    %v3178 = vsub.s32 %v3175, %v3177
    %v3179 = vrot.slane %v3165, %v3178
    %v3180 = vcombine.low %v2854, %v2866
    %v3181 = vcombine.high %v2854, %v2866
    %v3183 = vunpack.c.l.s4 1983009808
    %v3184 = vunpack.c.0.s8 %v3183
    %v3185 = vlaneseq
    %v3186 = vshrl.u32 %v3185, 7
    %v3187 = vsub.s32 %v3184, %v3186
    %v3188 = vrot.slane %v3180, %v3187
    %v3190 = vunpack.c.l.s4 1983009808
    %v3191 = vunpack.c.0.s8 %v3190
    %v3192 = vlaneseq
    %v3193 = vshrl.u32 %v3192, 7
    %v3194 = vsub.s32 %v3191, %v3193
    %v3195 = vrot.slane %v3181, %v3194
    %v3196 = vcombine.low %v2860, %v2872
    %v3197 = vcombine.high %v2860, %v2872
    %v3199 = vunpack.c.l.s4 1983009808
    %v3200 = vunpack.c.0.s8 %v3199
    %v3201 = vlaneseq
    %v3202 = vshrl.u32 %v3201, 7
    %v3203 = vsub.s32 %v3200, %v3202
    %v3204 = vrot.slane %v3196, %v3203
    %v3206 = vunpack.c.l.s4 1983009808
    %v3207 = vunpack.c.0.s8 %v3206
    %v3208 = vlaneseq
    %v3209 = vshrl.u32 %v3208, 7
    %v3210 = vsub.s32 %v3207, %v3209
    %v3211 = vrot.slane %v3197, %v3210
    %v3212 = vcombine.low %v3156, %v3172
    %v3213 = vcombine.high %v3156, %v3172
    %v3215 = vunpack.c.l.s4 1934713408
    %v3216 = vunpack.c.0.s8 %v3215
    %v3217 = vlaneseq
    %v3218 = vshrl.u32 %v3217, 7
    %v3219 = vsub.s32 %v3216, %v3218
    %v3220 = vrot.slane %v3212, %v3219
    %v3222 = vunpack.c.l.s4 1934713408
    %v3223 = vunpack.c.0.s8 %v3222
    %v3224 = vlaneseq
    %v3225 = vshrl.u32 %v3224, 7
    %v3226 = vsub.s32 %v3223, %v3225
    %v3227 = vrot.slane %v3213, %v3226
    %v3228 = vcombine.low %v3163, %v3179
    %v3229 = vcombine.high %v3163, %v3179
    %v3231 = vunpack.c.l.s4 1934713408
    %v3232 = vunpack.c.0.s8 %v3231
    %v3233 = vlaneseq
    %v3234 = vshrl.u32 %v3233, 7
    %v3235 = vsub.s32 %v3232, %v3234
    %v3236 = vrot.slane %v3228, %v3235
    %v3238 = vunpack.c.l.s4 1934713408
    %v3239 = vunpack.c.0.s8 %v3238
    %v3240 = vlaneseq
    %v3241 = vshrl.u32 %v3240, 7
    %v3242 = vsub.s32 %v3239, %v3241
    %v3243 = vrot.slane %v3229, %v3242
    %v3244 = vcombine.low %v3188, %v3204
    %v3245 = vcombine.high %v3188, %v3204
    %v3247 = vunpack.c.l.s4 1934713408
    %v3248 = vunpack.c.0.s8 %v3247
    %v3249 = vlaneseq
    %v3250 = vshrl.u32 %v3249, 7
    %v3251 = vsub.s32 %v3248, %v3250
    %v3252 = vrot.slane %v3244, %v3251
    %v3254 = vunpack.c.l.s4 1934713408
    %v3255 = vunpack.c.0.s8 %v3254
    %v3256 = vlaneseq
    %v3257 = vshrl.u32 %v3256, 7
    %v3258 = vsub.s32 %v3255, %v3257
    %v3259 = vrot.slane %v3245, %v3258
    %v3260 = vcombine.low %v3195, %v3211
    %v3261 = vcombine.high %v3195, %v3211
    %v3263 = vunpack.c.l.s4 1934713408
    %v3264 = vunpack.c.0.s8 %v3263
    %v3265 = vlaneseq
    %v3266 = vshrl.u32 %v3265, 7
    %v3267 = vsub.s32 %v3264, %v3266
    %v3268 = vrot.slane %v3260, %v3267
    %v3270 = vunpack.c.l.s4 1934713408
    %v3271 = vunpack.c.0.s8 %v3270
    %v3272 = vlaneseq
    %v3273 = vshrl.u32 %v3272, 7
    %v3274 = vsub.s32 %v3271, %v3273
    %v3275 = vrot.slane %v3261, %v3274
    %v3276 = vcombine.low %v3220, %v3252
    %v3277 = vcombine.high %v3220, %v3252
    %v3278 = vcombine.low %v3227, %v3259
    %v3279 = vcombine.high %v3227, %v3259
    %v3280 = vcombine.low %v3236, %v3268
    %v3281 = vcombine.high %v3236, %v3268
    %v3282 = vcombine.low %v3243, %v3275
    %v3283 = vcombine.high %v3243, %v3275
    %v3284 = vcombine.low %v2833, %v2845
    %v3285 = vcombine.high %v2833, %v2845
    %v3287 = vunpack.c.l.s4 1983009808
    %v3288 = vunpack.c.0.s8 %v3287
    %v3289 = vlaneseq
    %v3290 = vshrl.u32 %v3289, 7
    %v3291 = vsub.s32 %v3288, %v3290
    %v3292 = vrot.slane %v3284, %v3291
    %v3294 = vunpack.c.l.s4 1983009808
    %v3295 = vunpack.c.0.s8 %v3294
    %v3296 = vlaneseq
    %v3297 = vshrl.u32 %v3296, 7
    %v3298 = vsub.s32 %v3295, %v3297
    %v3299 = vrot.slane %v3285, %v3298
    %v3300 = vcombine.low %v2839, %v2851
    %v3301 = vcombine.high %v2839, %v2851
    %v3303 = vunpack.c.l.s4 1983009808
    %v3304 = vunpack.c.0.s8 %v3303
    %v3305 = vlaneseq
    %v3306 = vshrl.u32 %v3305, 7
    %v3307 = vsub.s32 %v3304, %v3306
    %v3308 = vrot.slane %v3300, %v3307
    %v3310 = vunpack.c.l.s4 1983009808
    %v3311 = vunpack.c.0.s8 %v3310
    %v3312 = vlaneseq
    %v3313 = vshrl.u32 %v3312, 7
    %v3314 = vsub.s32 %v3311, %v3313
    %v3315 = vrot.slane %v3301, %v3314
    %v3316 = vcombine.low %v2857, %v2869
    %v3317 = vcombine.high %v2857, %v2869
    %v3319 = vunpack.c.l.s4 1983009808
    %v3320 = vunpack.c.0.s8 %v3319
    %v3321 = vlaneseq
    %v3322 = vshrl.u32 %v3321, 7
    %v3323 = vsub.s32 %v3320, %v3322
    %v3324 = vrot.slane %v3316, %v3323
    %v3326 = vunpack.c.l.s4 1983009808
    %v3327 = vunpack.c.0.s8 %v3326
    %v3328 = vlaneseq
    %v3329 = vshrl.u32 %v3328, 7
    %v3330 = vsub.s32 %v3327, %v3329
    %v3331 = vrot.slane %v3317, %v3330
    %v3332 = vcombine.low %v2863, %v2875
    %v3333 = vcombine.high %v2863, %v2875
    %v3335 = vunpack.c.l.s4 1983009808
    %v3336 = vunpack.c.0.s8 %v3335
    %v3337 = vlaneseq
    %v3338 = vshrl.u32 %v3337, 7
    %v3339 = vsub.s32 %v3336, %v3338
    %v3340 = vrot.slane %v3332, %v3339
    %v3342 = vunpack.c.l.s4 1983009808
    %v3343 = vunpack.c.0.s8 %v3342
    %v3344 = vlaneseq
    %v3345 = vshrl.u32 %v3344, 7
    %v3346 = vsub.s32 %v3343, %v3345
    %v3347 = vrot.slane %v3333, %v3346
    %v3348 = vcombine.low %v3292, %v3308
    %v3349 = vcombine.high %v3292, %v3308
    %v3351 = vunpack.c.l.s4 1934713408
    %v3352 = vunpack.c.0.s8 %v3351
    %v3353 = vlaneseq
    %v3354 = vshrl.u32 %v3353, 7
    %v3355 = vsub.s32 %v3352, %v3354
    %v3356 = vrot.slane %v3348, %v3355
    %v3358 = vunpack.c.l.s4 1934713408
    %v3359 = vunpack.c.0.s8 %v3358
    %v3360 = vlaneseq
    %v3361 = vshrl.u32 %v3360, 7
    %v3362 = vsub.s32 %v3359, %v3361
    %v3363 = vrot.slane %v3349, %v3362
    %v3364 = vcombine.low %v3299, %v3315
    %v3365 = vcombine.high %v3299, %v3315
    %v3367 = vunpack.c.l.s4 1934713408
    %v3368 = vunpack.c.0.s8 %v3367
    %v3369 = vlaneseq
    %v3370 = vshrl.u32 %v3369, 7
    %v3371 = vsub.s32 %v3368, %v3370
    %v3372 = vrot.slane %v3364, %v3371
    %v3374 = vunpack.c.l.s4 1934713408
    %v3375 = vunpack.c.0.s8 %v3374
    %v3376 = vlaneseq
    %v3377 = vshrl.u32 %v3376, 7
    %v3378 = vsub.s32 %v3375, %v3377
    %v3379 = vrot.slane %v3365, %v3378
    %v3380 = vcombine.low %v3324, %v3340
    %v3381 = vcombine.high %v3324, %v3340
    %v3383 = vunpack.c.l.s4 1934713408
    %v3384 = vunpack.c.0.s8 %v3383
    %v3385 = vlaneseq
    %v3386 = vshrl.u32 %v3385, 7
    %v3387 = vsub.s32 %v3384, %v3386
    %v3388 = vrot.slane %v3380, %v3387
    %v3390 = vunpack.c.l.s4 1934713408
    %v3391 = vunpack.c.0.s8 %v3390
    %v3392 = vlaneseq
    %v3393 = vshrl.u32 %v3392, 7
    %v3394 = vsub.s32 %v3391, %v3393
    %v3395 = vrot.slane %v3381, %v3394
    %v3396 = vcombine.low %v3331, %v3347
    %v3397 = vcombine.high %v3331, %v3347
    %v3399 = vunpack.c.l.s4 1934713408
    %v3400 = vunpack.c.0.s8 %v3399
    %v3401 = vlaneseq
    %v3402 = vshrl.u32 %v3401, 7
    %v3403 = vsub.s32 %v3400, %v3402
    %v3404 = vrot.slane %v3396, %v3403
    %v3406 = vunpack.c.l.s4 1934713408
    %v3407 = vunpack.c.0.s8 %v3406
    %v3408 = vlaneseq
    %v3409 = vshrl.u32 %v3408, 7
    %v3410 = vsub.s32 %v3407, %v3409
    %v3411 = vrot.slane %v3397, %v3410
    %v3412 = vcombine.low %v3356, %v3388
    %v3413 = vcombine.high %v3356, %v3388
    %v3414 = vcombine.low %v3363, %v3395
    %v3415 = vcombine.high %v3363, %v3395
    %v3416 = vcombine.low %v3372, %v3404
    %v3417 = vcombine.high %v3372, %v3404
    %v3418 = vcombine.low %v3379, %v3411
    %v3419 = vcombine.high %v3379, %v3411
    %3422 = vrot.lane.b32.xlu0 %v3005, 16
    %v3423 = vpop.permute.xlu0 %3422
    %3424 = vrot.lane.b32.xlu0 %v3277, 16
    %v3425 = vpop.permute.xlu0 %3424
    %3430 = vrot.lane.b32.xlu0 %v3006, 32
    %v3431 = vpop.permute.xlu0 %3430
    %3432 = vrot.lane.b32.xlu0 %v3278, 32
    %v3433 = vpop.permute.xlu0 %3432
    %3438 = vrot.lane.b32.xlu0 %v3007, 48
    %v3439 = vpop.permute.xlu0 %3438
    %3440 = vrot.lane.b32.xlu0 %v3279, 48
    %v3441 = vpop.permute.xlu0 %3440
    %3446 = vrot.lane.b32.xlu0 %v3008, 64
    %v3447 = vpop.permute.xlu0 %3446
    %3448 = vrot.lane.b32.xlu0 %v3280, 64
    %v3449 = vpop.permute.xlu0 %3448
    %3454 = vrot.lane.b32.xlu0 %v3009, 80
    %v3455 = vpop.permute.xlu0 %3454
    %3456 = vrot.lane.b32.xlu0 %v3281, 80
    %v3457 = vpop.permute.xlu0 %3456
    %3462 = vrot.lane.b32.xlu0 %v3010, 96
    %v3463 = vpop.permute.xlu0 %3462
    %3464 = vrot.lane.b32.xlu0 %v3282, 96
    %v3465 = vpop.permute.xlu0 %3464
    %3470 = vrot.lane.b32.xlu0 %v3011, 112
    %v3471 = vpop.permute.xlu0 %3470
    %3472 = vrot.lane.b32.xlu0 %v3283, 112
    %v3473 = vpop.permute.xlu0 %3472
    %3478 = vrot.lane.b32.xlu0 %v3141, 16
    %v3479 = vpop.permute.xlu0 %3478
    %3480 = vrot.lane.b32.xlu0 %v3413, 16
    %v3481 = vpop.permute.xlu0 %3480
    %3486 = vrot.lane.b32.xlu0 %v3142, 32
    %v3487 = vpop.permute.xlu0 %3486
    %3488 = vrot.lane.b32.xlu0 %v3414, 32
    %v3489 = vpop.permute.xlu0 %3488
    %3494 = vrot.lane.b32.xlu0 %v3143, 48
    %v3495 = vpop.permute.xlu0 %3494
    %3496 = vrot.lane.b32.xlu0 %v3415, 48
    %v3497 = vpop.permute.xlu0 %3496
    %3502 = vrot.lane.b32.xlu0 %v3144, 64
    %v3503 = vpop.permute.xlu0 %3502
    %3504 = vrot.lane.b32.xlu0 %v3416, 64
    %v3505 = vpop.permute.xlu0 %3504
    %3510 = vrot.lane.b32.xlu0 %v3145, 80
    %v3511 = vpop.permute.xlu0 %3510
    %3512 = vrot.lane.b32.xlu0 %v3417, 80
    %v3513 = vpop.permute.xlu0 %3512
    %3518 = vrot.lane.b32.xlu0 %v3146, 96
    %v3519 = vpop.permute.xlu0 %3518
    %3520 = vrot.lane.b32.xlu0 %v3418, 96
    %v3521 = vpop.permute.xlu0 %3520
    %3526 = vrot.lane.b32.xlu0 %v3147, 112
    %v3527 = vpop.permute.xlu0 %3526
    %3528 = vrot.lane.b32.xlu0 %v3419, 112
    %v3529 = vpop.permute.xlu0 %3528
    %v3532 = vsel %vm2655, %v3004, %v3423
    %v3533 = vsel %vm2655, %v3276, %v3425
    %v3534 = vsel %vm61, %v3532, %v3431
    %v3535 = vsel %vm61, %v3533, %v3433
    %v3536 = vsel %vm2660, %v3534, %v3439
    %v3537 = vsel %vm2660, %v3535, %v3441
    %v3538 = vsel %vm2663, %v3536, %v3447
    %v3539 = vsel %vm2663, %v3537, %v3449
    %v3540 = vsel %vm2666, %v3538, %v3455
    %v3541 = vsel %vm2666, %v3539, %v3457
    %v3542 = vsel %vm2669, %v3540, %v3463
    %v3543 = vsel %vm2669, %v3541, %v3465
    %v3544 = vsel %vm2672, %v3542, %v3471
    %v3545 = vsel %vm2672, %v3543, %v3473
    %v3546 = vsel %vm2655, %v3140, %v3479
    %v3547 = vsel %vm2655, %v3412, %v3481
    %v3548 = vsel %vm61, %v3546, %v3487
    %v3549 = vsel %vm61, %v3547, %v3489
    %v3550 = vsel %vm2660, %v3548, %v3495
    %v3551 = vsel %vm2660, %v3549, %v3497
    %v3552 = vsel %vm2663, %v3550, %v3503
    %v3553 = vsel %vm2663, %v3551, %v3505
    %v3554 = vsel %vm2666, %v3552, %v3511
    %v3555 = vsel %vm2666, %v3553, %v3513
    %v3556 = vsel %vm2669, %v3554, %v3519
    %v3557 = vsel %vm2669, %v3555, %v3521
    %v3558 = vsel %vm2672, %v3556, %v3527
    %v3559 = vsel %vm2672, %v3557, %v3529
    %v3560 = vmul.f32 %v2776, %v3544
    %v3561 = vmul.f32 %v2777, %v3558
    %v3562 = vmul.f32 %v2778, %v3545
    %v3563 = vmul.f32 %v2779, %v3559
    %3566 = vrot.lane.b32.xlu0 %v3560, 112
    %v3567 = vpop.permute.xlu0 %3566
    %3568 = vrot.lane.b32.xlu0 %v3562, 112
    %v3569 = vpop.permute.xlu0 %3568
    %3572 = vrot.lane.b32.xlu0 %v3560, 96
    %v3573 = vpop.permute.xlu0 %3572
    %3574 = vrot.lane.b32.xlu0 %v3562, 96
    %v3575 = vpop.permute.xlu0 %3574
    %3578 = vrot.lane.b32.xlu0 %v3560, 80
    %v3579 = vpop.permute.xlu0 %3578
    %3580 = vrot.lane.b32.xlu0 %v3562, 80
    %v3581 = vpop.permute.xlu0 %3580
    %3584 = vrot.lane.b32.xlu0 %v3560, 64
    %v3585 = vpop.permute.xlu0 %3584
    %3586 = vrot.lane.b32.xlu0 %v3562, 64
    %v3587 = vpop.permute.xlu0 %3586
    %3590 = vrot.lane.b32.xlu0 %v3560, 48
    %v3591 = vpop.permute.xlu0 %3590
    %3592 = vrot.lane.b32.xlu0 %v3562, 48
    %v3593 = vpop.permute.xlu0 %3592
    %3596 = vrot.lane.b32.xlu0 %v3560, 32
    %v3597 = vpop.permute.xlu0 %3596
    %3598 = vrot.lane.b32.xlu0 %v3562, 32
    %v3599 = vpop.permute.xlu0 %3598
    %3602 = vrot.lane.b32.xlu0 %v3560, 16
    %v3603 = vpop.permute.xlu0 %3602
    %3604 = vrot.lane.b32.xlu0 %v3562, 16
    %v3605 = vpop.permute.xlu0 %3604
    %3610 = vrot.lane.b32.xlu0 %v3561, 112
    %v3611 = vpop.permute.xlu0 %3610
    %3612 = vrot.lane.b32.xlu0 %v3563, 112
    %v3613 = vpop.permute.xlu0 %3612
    %3616 = vrot.lane.b32.xlu0 %v3561, 96
    %v3617 = vpop.permute.xlu0 %3616
    %3618 = vrot.lane.b32.xlu0 %v3563, 96
    %v3619 = vpop.permute.xlu0 %3618
    %3622 = vrot.lane.b32.xlu0 %v3561, 80
    %v3623 = vpop.permute.xlu0 %3622
    %3624 = vrot.lane.b32.xlu0 %v3563, 80
    %v3625 = vpop.permute.xlu0 %3624
    %3628 = vrot.lane.b32.xlu0 %v3561, 64
    %v3629 = vpop.permute.xlu0 %3628
    %3630 = vrot.lane.b32.xlu0 %v3563, 64
    %v3631 = vpop.permute.xlu0 %3630
    %3634 = vrot.lane.b32.xlu0 %v3561, 48
    %v3635 = vpop.permute.xlu0 %3634
    %3636 = vrot.lane.b32.xlu0 %v3563, 48
    %v3637 = vpop.permute.xlu0 %3636
    %3640 = vrot.lane.b32.xlu0 %v3561, 32
    %v3641 = vpop.permute.xlu0 %3640
    %3642 = vrot.lane.b32.xlu0 %v3563, 32
    %v3643 = vpop.permute.xlu0 %3642
    %3646 = vrot.lane.b32.xlu0 %v3561, 16
    %v3647 = vpop.permute.xlu0 %3646
    %3648 = vrot.lane.b32.xlu0 %v3563, 16
    %v3649 = vpop.permute.xlu0 %3648
    %v3652 = vcombine.low %v3560, %v3573
    %v3653 = vcombine.high %v3560, %v3573
    %v3655 = vunpack.c.l.s4 1983009808
    %v3656 = vunpack.c.0.s8 %v3655
    %v3657 = vlaneseq
    %v3658 = vshrl.u32 %v3657, 7
    %v3659 = vsub.s32 %v3656, %v3658
    %v3660 = vrot.slane %v3652, %v3659
    %v3662 = vunpack.c.l.s4 1983009808
    %v3663 = vunpack.c.0.s8 %v3662
    %v3664 = vlaneseq
    %v3665 = vshrl.u32 %v3664, 7
    %v3666 = vsub.s32 %v3663, %v3665
    %v3667 = vrot.slane %v3653, %v3666
    %v3668 = vcombine.low %v3567, %v3579
    %v3669 = vcombine.high %v3567, %v3579
    %v3671 = vunpack.c.l.s4 1983009808
    %v3672 = vunpack.c.0.s8 %v3671
    %v3673 = vlaneseq
    %v3674 = vshrl.u32 %v3673, 7
    %v3675 = vsub.s32 %v3672, %v3674
    %v3676 = vrot.slane %v3668, %v3675
    %v3678 = vunpack.c.l.s4 1983009808
    %v3679 = vunpack.c.0.s8 %v3678
    %v3680 = vlaneseq
    %v3681 = vshrl.u32 %v3680, 7
    %v3682 = vsub.s32 %v3679, %v3681
    %v3683 = vrot.slane %v3669, %v3682
    %v3684 = vcombine.low %v3585, %v3597
    %v3685 = vcombine.high %v3585, %v3597
    %v3687 = vunpack.c.l.s4 1983009808
    %v3688 = vunpack.c.0.s8 %v3687
    %v3689 = vlaneseq
    %v3690 = vshrl.u32 %v3689, 7
    %v3691 = vsub.s32 %v3688, %v3690
    %v3692 = vrot.slane %v3684, %v3691
    %v3694 = vunpack.c.l.s4 1983009808
    %v3695 = vunpack.c.0.s8 %v3694
    %v3696 = vlaneseq
    %v3697 = vshrl.u32 %v3696, 7
    %v3698 = vsub.s32 %v3695, %v3697
    %v3699 = vrot.slane %v3685, %v3698
    %v3700 = vcombine.low %v3591, %v3603
    %v3701 = vcombine.high %v3591, %v3603
    %v3703 = vunpack.c.l.s4 1983009808
    %v3704 = vunpack.c.0.s8 %v3703
    %v3705 = vlaneseq
    %v3706 = vshrl.u32 %v3705, 7
    %v3707 = vsub.s32 %v3704, %v3706
    %v3708 = vrot.slane %v3700, %v3707
    %v3710 = vunpack.c.l.s4 1983009808
    %v3711 = vunpack.c.0.s8 %v3710
    %v3712 = vlaneseq
    %v3713 = vshrl.u32 %v3712, 7
    %v3714 = vsub.s32 %v3711, %v3713
    %v3715 = vrot.slane %v3701, %v3714
    %v3716 = vcombine.low %v3660, %v3676
    %v3717 = vcombine.high %v3660, %v3676
    %v3719 = vunpack.c.l.s4 1934713408
    %v3720 = vunpack.c.0.s8 %v3719
    %v3721 = vlaneseq
    %v3722 = vshrl.u32 %v3721, 7
    %v3723 = vsub.s32 %v3720, %v3722
    %v3724 = vrot.slane %v3716, %v3723
    %v3726 = vunpack.c.l.s4 1934713408
    %v3727 = vunpack.c.0.s8 %v3726
    %v3728 = vlaneseq
    %v3729 = vshrl.u32 %v3728, 7
    %v3730 = vsub.s32 %v3727, %v3729
    %v3731 = vrot.slane %v3717, %v3730
    %v3732 = vcombine.low %v3667, %v3683
    %v3733 = vcombine.high %v3667, %v3683
    %v3735 = vunpack.c.l.s4 1934713408
    %v3736 = vunpack.c.0.s8 %v3735
    %v3737 = vlaneseq
    %v3738 = vshrl.u32 %v3737, 7
    %v3739 = vsub.s32 %v3736, %v3738
    %v3740 = vrot.slane %v3732, %v3739
    %v3742 = vunpack.c.l.s4 1934713408
    %v3743 = vunpack.c.0.s8 %v3742
    %v3744 = vlaneseq
    %v3745 = vshrl.u32 %v3744, 7
    %v3746 = vsub.s32 %v3743, %v3745
    %v3747 = vrot.slane %v3733, %v3746
    %v3748 = vcombine.low %v3692, %v3708
    %v3749 = vcombine.high %v3692, %v3708
    %v3751 = vunpack.c.l.s4 1934713408
    %v3752 = vunpack.c.0.s8 %v3751
    %v3753 = vlaneseq
    %v3754 = vshrl.u32 %v3753, 7
    %v3755 = vsub.s32 %v3752, %v3754
    %v3756 = vrot.slane %v3748, %v3755
    %v3758 = vunpack.c.l.s4 1934713408
    %v3759 = vunpack.c.0.s8 %v3758
    %v3760 = vlaneseq
    %v3761 = vshrl.u32 %v3760, 7
    %v3762 = vsub.s32 %v3759, %v3761
    %v3763 = vrot.slane %v3749, %v3762
    %v3764 = vcombine.low %v3699, %v3715
    %v3765 = vcombine.high %v3699, %v3715
    %v3767 = vunpack.c.l.s4 1934713408
    %v3768 = vunpack.c.0.s8 %v3767
    %v3769 = vlaneseq
    %v3770 = vshrl.u32 %v3769, 7
    %v3771 = vsub.s32 %v3768, %v3770
    %v3772 = vrot.slane %v3764, %v3771
    %v3774 = vunpack.c.l.s4 1934713408
    %v3775 = vunpack.c.0.s8 %v3774
    %v3776 = vlaneseq
    %v3777 = vshrl.u32 %v3776, 7
    %v3778 = vsub.s32 %v3775, %v3777
    %v3779 = vrot.slane %v3765, %v3778
    %v3780 = vcombine.low %v3724, %v3756
    %v3781 = vcombine.high %v3724, %v3756
    %v3782 = vcombine.low %v3731, %v3763
    %v3783 = vcombine.high %v3731, %v3763
    %v3784 = vcombine.low %v3740, %v3772
    %v3785 = vcombine.high %v3740, %v3772
    %v3786 = vcombine.low %v3747, %v3779
    %v3787 = vcombine.high %v3747, %v3779
    %v3788 = vcombine.low %v3561, %v3617
    %v3789 = vcombine.high %v3561, %v3617
    %v3791 = vunpack.c.l.s4 1983009808
    %v3792 = vunpack.c.0.s8 %v3791
    %v3793 = vlaneseq
    %v3794 = vshrl.u32 %v3793, 7
    %v3795 = vsub.s32 %v3792, %v3794
    %v3796 = vrot.slane %v3788, %v3795
    %v3798 = vunpack.c.l.s4 1983009808
    %v3799 = vunpack.c.0.s8 %v3798
    %v3800 = vlaneseq
    %v3801 = vshrl.u32 %v3800, 7
    %v3802 = vsub.s32 %v3799, %v3801
    %v3803 = vrot.slane %v3789, %v3802
    %v3804 = vcombine.low %v3611, %v3623
    %v3805 = vcombine.high %v3611, %v3623
    %v3807 = vunpack.c.l.s4 1983009808
    %v3808 = vunpack.c.0.s8 %v3807
    %v3809 = vlaneseq
    %v3810 = vshrl.u32 %v3809, 7
    %v3811 = vsub.s32 %v3808, %v3810
    %v3812 = vrot.slane %v3804, %v3811
    %v3814 = vunpack.c.l.s4 1983009808
    %v3815 = vunpack.c.0.s8 %v3814
    %v3816 = vlaneseq
    %v3817 = vshrl.u32 %v3816, 7
    %v3818 = vsub.s32 %v3815, %v3817
    %v3819 = vrot.slane %v3805, %v3818
    %v3820 = vcombine.low %v3629, %v3641
    %v3821 = vcombine.high %v3629, %v3641
    %v3823 = vunpack.c.l.s4 1983009808
    %v3824 = vunpack.c.0.s8 %v3823
    %v3825 = vlaneseq
    %v3826 = vshrl.u32 %v3825, 7
    %v3827 = vsub.s32 %v3824, %v3826
    %v3828 = vrot.slane %v3820, %v3827
    %v3830 = vunpack.c.l.s4 1983009808
    %v3831 = vunpack.c.0.s8 %v3830
    %v3832 = vlaneseq
    %v3833 = vshrl.u32 %v3832, 7
    %v3834 = vsub.s32 %v3831, %v3833
    %v3835 = vrot.slane %v3821, %v3834
    %v3836 = vcombine.low %v3635, %v3647
    %v3837 = vcombine.high %v3635, %v3647
    %v3839 = vunpack.c.l.s4 1983009808
    %v3840 = vunpack.c.0.s8 %v3839
    %v3841 = vlaneseq
    %v3842 = vshrl.u32 %v3841, 7
    %v3843 = vsub.s32 %v3840, %v3842
    %v3844 = vrot.slane %v3836, %v3843
    %v3846 = vunpack.c.l.s4 1983009808
    %v3847 = vunpack.c.0.s8 %v3846
    %v3848 = vlaneseq
    %v3849 = vshrl.u32 %v3848, 7
    %v3850 = vsub.s32 %v3847, %v3849
    %v3851 = vrot.slane %v3837, %v3850
    %v3852 = vcombine.low %v3796, %v3812
    %v3853 = vcombine.high %v3796, %v3812
    %v3855 = vunpack.c.l.s4 1934713408
    %v3856 = vunpack.c.0.s8 %v3855
    %v3857 = vlaneseq
    %v3858 = vshrl.u32 %v3857, 7
    %v3859 = vsub.s32 %v3856, %v3858
    %v3860 = vrot.slane %v3852, %v3859
    %v3862 = vunpack.c.l.s4 1934713408
    %v3863 = vunpack.c.0.s8 %v3862
    %v3864 = vlaneseq
    %v3865 = vshrl.u32 %v3864, 7
    %v3866 = vsub.s32 %v3863, %v3865
    %v3867 = vrot.slane %v3853, %v3866
    %v3868 = vcombine.low %v3803, %v3819
    %v3869 = vcombine.high %v3803, %v3819
    %v3871 = vunpack.c.l.s4 1934713408
    %v3872 = vunpack.c.0.s8 %v3871
    %v3873 = vlaneseq
    %v3874 = vshrl.u32 %v3873, 7
    %v3875 = vsub.s32 %v3872, %v3874
    %v3876 = vrot.slane %v3868, %v3875
    %v3878 = vunpack.c.l.s4 1934713408
    %v3879 = vunpack.c.0.s8 %v3878
    %v3880 = vlaneseq
    %v3881 = vshrl.u32 %v3880, 7
    %v3882 = vsub.s32 %v3879, %v3881
    %v3883 = vrot.slane %v3869, %v3882
    %v3884 = vcombine.low %v3828, %v3844
    %v3885 = vcombine.high %v3828, %v3844
    %v3887 = vunpack.c.l.s4 1934713408
    %v3888 = vunpack.c.0.s8 %v3887
    %v3889 = vlaneseq
    %v3890 = vshrl.u32 %v3889, 7
    %v3891 = vsub.s32 %v3888, %v3890
    %v3892 = vrot.slane %v3884, %v3891
    %v3894 = vunpack.c.l.s4 1934713408
    %v3895 = vunpack.c.0.s8 %v3894
    %v3896 = vlaneseq
    %v3897 = vshrl.u32 %v3896, 7
    %v3898 = vsub.s32 %v3895, %v3897
    %v3899 = vrot.slane %v3885, %v3898
    %v3900 = vcombine.low %v3835, %v3851
    %v3901 = vcombine.high %v3835, %v3851
    %v3903 = vunpack.c.l.s4 1934713408
    %v3904 = vunpack.c.0.s8 %v3903
    %v3905 = vlaneseq
    %v3906 = vshrl.u32 %v3905, 7
    %v3907 = vsub.s32 %v3904, %v3906
    %v3908 = vrot.slane %v3900, %v3907
    %v3910 = vunpack.c.l.s4 1934713408
    %v3911 = vunpack.c.0.s8 %v3910
    %v3912 = vlaneseq
    %v3913 = vshrl.u32 %v3912, 7
    %v3914 = vsub.s32 %v3911, %v3913
    %v3915 = vrot.slane %v3901, %v3914
    %v3916 = vcombine.low %v3860, %v3892
    %v3917 = vcombine.high %v3860, %v3892
    %v3918 = vcombine.low %v3867, %v3899
    %v3919 = vcombine.high %v3867, %v3899
    %v3920 = vcombine.low %v3876, %v3908
    %v3921 = vcombine.high %v3876, %v3908
    %v3922 = vcombine.low %v3883, %v3915
    %v3923 = vcombine.high %v3883, %v3915
    %v3924 = vcombine.low %v3562, %v3575
    %v3925 = vcombine.high %v3562, %v3575
    %v3927 = vunpack.c.l.s4 1983009808
    %v3928 = vunpack.c.0.s8 %v3927
    %v3929 = vlaneseq
    %v3930 = vshrl.u32 %v3929, 7
    %v3931 = vsub.s32 %v3928, %v3930
    %v3932 = vrot.slane %v3924, %v3931
    %v3934 = vunpack.c.l.s4 1983009808
    %v3935 = vunpack.c.0.s8 %v3934
    %v3936 = vlaneseq
    %v3937 = vshrl.u32 %v3936, 7
    %v3938 = vsub.s32 %v3935, %v3937
    %v3939 = vrot.slane %v3925, %v3938
    %v3940 = vcombine.low %v3569, %v3581
    %v3941 = vcombine.high %v3569, %v3581
    %v3943 = vunpack.c.l.s4 1983009808
    %v3944 = vunpack.c.0.s8 %v3943
    %v3945 = vlaneseq
    %v3946 = vshrl.u32 %v3945, 7
    %v3947 = vsub.s32 %v3944, %v3946
    %v3948 = vrot.slane %v3940, %v3947
    %v3950 = vunpack.c.l.s4 1983009808
    %v3951 = vunpack.c.0.s8 %v3950
    %v3952 = vlaneseq
    %v3953 = vshrl.u32 %v3952, 7
    %v3954 = vsub.s32 %v3951, %v3953
    %v3955 = vrot.slane %v3941, %v3954
    %v3956 = vcombine.low %v3587, %v3599
    %v3957 = vcombine.high %v3587, %v3599
    %v3959 = vunpack.c.l.s4 1983009808
    %v3960 = vunpack.c.0.s8 %v3959
    %v3961 = vlaneseq
    %v3962 = vshrl.u32 %v3961, 7
    %v3963 = vsub.s32 %v3960, %v3962
    %v3964 = vrot.slane %v3956, %v3963
    %v3966 = vunpack.c.l.s4 1983009808
    %v3967 = vunpack.c.0.s8 %v3966
    %v3968 = vlaneseq
    %v3969 = vshrl.u32 %v3968, 7
    %v3970 = vsub.s32 %v3967, %v3969
    %v3971 = vrot.slane %v3957, %v3970
    %v3972 = vcombine.low %v3593, %v3605
    %v3973 = vcombine.high %v3593, %v3605
    %v3975 = vunpack.c.l.s4 1983009808
    %v3976 = vunpack.c.0.s8 %v3975
    %v3977 = vlaneseq
    %v3978 = vshrl.u32 %v3977, 7
    %v3979 = vsub.s32 %v3976, %v3978
    %v3980 = vrot.slane %v3972, %v3979
    %v3982 = vunpack.c.l.s4 1983009808
    %v3983 = vunpack.c.0.s8 %v3982
    %v3984 = vlaneseq
    %v3985 = vshrl.u32 %v3984, 7
    %v3986 = vsub.s32 %v3983, %v3985
    %v3987 = vrot.slane %v3973, %v3986
    %v3988 = vcombine.low %v3932, %v3948
    %v3989 = vcombine.high %v3932, %v3948
    %v3991 = vunpack.c.l.s4 1934713408
    %v3992 = vunpack.c.0.s8 %v3991
    %v3993 = vlaneseq
    %v3994 = vshrl.u32 %v3993, 7
    %v3995 = vsub.s32 %v3992, %v3994
    %v3996 = vrot.slane %v3988, %v3995
    %v3998 = vunpack.c.l.s4 1934713408
    %v3999 = vunpack.c.0.s8 %v3998
    %v4000 = vlaneseq
    %v4001 = vshrl.u32 %v4000, 7
    %v4002 = vsub.s32 %v3999, %v4001
    %v4003 = vrot.slane %v3989, %v4002
    %v4004 = vcombine.low %v3939, %v3955
    %v4005 = vcombine.high %v3939, %v3955
    %v4007 = vunpack.c.l.s4 1934713408
    %v4008 = vunpack.c.0.s8 %v4007
    %v4009 = vlaneseq
    %v4010 = vshrl.u32 %v4009, 7
    %v4011 = vsub.s32 %v4008, %v4010
    %v4012 = vrot.slane %v4004, %v4011
    %v4014 = vunpack.c.l.s4 1934713408
    %v4015 = vunpack.c.0.s8 %v4014
    %v4016 = vlaneseq
    %v4017 = vshrl.u32 %v4016, 7
    %v4018 = vsub.s32 %v4015, %v4017
    %v4019 = vrot.slane %v4005, %v4018
    %v4020 = vcombine.low %v3964, %v3980
    %v4021 = vcombine.high %v3964, %v3980
    %v4023 = vunpack.c.l.s4 1934713408
    %v4024 = vunpack.c.0.s8 %v4023
    %v4025 = vlaneseq
    %v4026 = vshrl.u32 %v4025, 7
    %v4027 = vsub.s32 %v4024, %v4026
    %v4028 = vrot.slane %v4020, %v4027
    %v4030 = vunpack.c.l.s4 1934713408
    %v4031 = vunpack.c.0.s8 %v4030
    %v4032 = vlaneseq
    %v4033 = vshrl.u32 %v4032, 7
    %v4034 = vsub.s32 %v4031, %v4033
    %v4035 = vrot.slane %v4021, %v4034
    %v4036 = vcombine.low %v3971, %v3987
    %v4037 = vcombine.high %v3971, %v3987
    %v4039 = vunpack.c.l.s4 1934713408
    %v4040 = vunpack.c.0.s8 %v4039
    %v4041 = vlaneseq
    %v4042 = vshrl.u32 %v4041, 7
    %v4043 = vsub.s32 %v4040, %v4042
    %v4044 = vrot.slane %v4036, %v4043
    %v4046 = vunpack.c.l.s4 1934713408
    %v4047 = vunpack.c.0.s8 %v4046
    %v4048 = vlaneseq
    %v4049 = vshrl.u32 %v4048, 7
    %v4050 = vsub.s32 %v4047, %v4049
    %v4051 = vrot.slane %v4037, %v4050
    %v4052 = vcombine.low %v3996, %v4028
    %v4053 = vcombine.high %v3996, %v4028
    %v4054 = vcombine.low %v4003, %v4035
    %v4055 = vcombine.high %v4003, %v4035
    %v4056 = vcombine.low %v4012, %v4044
    %v4057 = vcombine.high %v4012, %v4044
    %v4058 = vcombine.low %v4019, %v4051
    %v4059 = vcombine.high %v4019, %v4051
    %v4060 = vcombine.low %v3563, %v3619
    %v4061 = vcombine.high %v3563, %v3619
    %v4063 = vunpack.c.l.s4 1983009808
    %v4064 = vunpack.c.0.s8 %v4063
    %v4065 = vlaneseq
    %v4066 = vshrl.u32 %v4065, 7
    %v4067 = vsub.s32 %v4064, %v4066
    %v4068 = vrot.slane %v4060, %v4067
    %v4070 = vunpack.c.l.s4 1983009808
    %v4071 = vunpack.c.0.s8 %v4070
    %v4072 = vlaneseq
    %v4073 = vshrl.u32 %v4072, 7
    %v4074 = vsub.s32 %v4071, %v4073
    %v4075 = vrot.slane %v4061, %v4074
    %v4076 = vcombine.low %v3613, %v3625
    %v4077 = vcombine.high %v3613, %v3625
    %v4079 = vunpack.c.l.s4 1983009808
    %v4080 = vunpack.c.0.s8 %v4079
    %v4081 = vlaneseq
    %v4082 = vshrl.u32 %v4081, 7
    %v4083 = vsub.s32 %v4080, %v4082
    %v4084 = vrot.slane %v4076, %v4083
    %v4086 = vunpack.c.l.s4 1983009808
    %v4087 = vunpack.c.0.s8 %v4086
    %v4088 = vlaneseq
    %v4089 = vshrl.u32 %v4088, 7
    %v4090 = vsub.s32 %v4087, %v4089
    %v4091 = vrot.slane %v4077, %v4090
    %v4092 = vcombine.low %v3631, %v3643
    %v4093 = vcombine.high %v3631, %v3643
    %v4095 = vunpack.c.l.s4 1983009808
    %v4096 = vunpack.c.0.s8 %v4095
    %v4097 = vlaneseq
    %v4098 = vshrl.u32 %v4097, 7
    %v4099 = vsub.s32 %v4096, %v4098
    %v4100 = vrot.slane %v4092, %v4099
    %v4102 = vunpack.c.l.s4 1983009808
    %v4103 = vunpack.c.0.s8 %v4102
    %v4104 = vlaneseq
    %v4105 = vshrl.u32 %v4104, 7
    %v4106 = vsub.s32 %v4103, %v4105
    %v4107 = vrot.slane %v4093, %v4106
    %v4108 = vcombine.low %v3637, %v3649
    %v4109 = vcombine.high %v3637, %v3649
    %v4111 = vunpack.c.l.s4 1983009808
    %v4112 = vunpack.c.0.s8 %v4111
    %v4113 = vlaneseq
    %v4114 = vshrl.u32 %v4113, 7
    %v4115 = vsub.s32 %v4112, %v4114
    %v4116 = vrot.slane %v4108, %v4115
    %v4118 = vunpack.c.l.s4 1983009808
    %v4119 = vunpack.c.0.s8 %v4118
    %v4120 = vlaneseq
    %v4121 = vshrl.u32 %v4120, 7
    %v4122 = vsub.s32 %v4119, %v4121
    %v4123 = vrot.slane %v4109, %v4122
    %v4124 = vcombine.low %v4068, %v4084
    %v4125 = vcombine.high %v4068, %v4084
    %v4127 = vunpack.c.l.s4 1934713408
    %v4128 = vunpack.c.0.s8 %v4127
    %v4129 = vlaneseq
    %v4130 = vshrl.u32 %v4129, 7
    %v4131 = vsub.s32 %v4128, %v4130
    %v4132 = vrot.slane %v4124, %v4131
    %v4134 = vunpack.c.l.s4 1934713408
    %v4135 = vunpack.c.0.s8 %v4134
    %v4136 = vlaneseq
    %v4137 = vshrl.u32 %v4136, 7
    %v4138 = vsub.s32 %v4135, %v4137
    %v4139 = vrot.slane %v4125, %v4138
    %v4140 = vcombine.low %v4075, %v4091
    %v4141 = vcombine.high %v4075, %v4091
    %v4143 = vunpack.c.l.s4 1934713408
    %v4144 = vunpack.c.0.s8 %v4143
    %v4145 = vlaneseq
    %v4146 = vshrl.u32 %v4145, 7
    %v4147 = vsub.s32 %v4144, %v4146
    %v4148 = vrot.slane %v4140, %v4147
    %v4150 = vunpack.c.l.s4 1934713408
    %v4151 = vunpack.c.0.s8 %v4150
    %v4152 = vlaneseq
    %v4153 = vshrl.u32 %v4152, 7
    %v4154 = vsub.s32 %v4151, %v4153
    %v4155 = vrot.slane %v4141, %v4154
    %v4156 = vcombine.low %v4100, %v4116
    %v4157 = vcombine.high %v4100, %v4116
    %v4159 = vunpack.c.l.s4 1934713408
    %v4160 = vunpack.c.0.s8 %v4159
    %v4161 = vlaneseq
    %v4162 = vshrl.u32 %v4161, 7
    %v4163 = vsub.s32 %v4160, %v4162
    %v4164 = vrot.slane %v4156, %v4163
    %v4166 = vunpack.c.l.s4 1934713408
    %v4167 = vunpack.c.0.s8 %v4166
    %v4168 = vlaneseq
    %v4169 = vshrl.u32 %v4168, 7
    %v4170 = vsub.s32 %v4167, %v4169
    %v4171 = vrot.slane %v4157, %v4170
    %v4172 = vcombine.low %v4107, %v4123
    %v4173 = vcombine.high %v4107, %v4123
    %v4175 = vunpack.c.l.s4 1934713408
    %v4176 = vunpack.c.0.s8 %v4175
    %v4177 = vlaneseq
    %v4178 = vshrl.u32 %v4177, 7
    %v4179 = vsub.s32 %v4176, %v4178
    %v4180 = vrot.slane %v4172, %v4179
    %v4182 = vunpack.c.l.s4 1934713408
    %v4183 = vunpack.c.0.s8 %v4182
    %v4184 = vlaneseq
    %v4185 = vshrl.u32 %v4184, 7
    %v4186 = vsub.s32 %v4183, %v4185
    %v4187 = vrot.slane %v4173, %v4186
    %v4188 = vcombine.low %v4132, %v4164
    %v4189 = vcombine.high %v4132, %v4164
    %v4190 = vcombine.low %v4139, %v4171
    %v4191 = vcombine.high %v4139, %v4171
    %v4192 = vcombine.low %v4148, %v4180
    %v4193 = vcombine.high %v4148, %v4180
    %v4194 = vcombine.low %v4155, %v4187
    %v4195 = vcombine.high %v4155, %v4187
    %v4196 = vsel %vm2655, %v3780, 0.0
    %v4197 = vsel %vm2655, %v3916, 0.0
    %v4198 = vadd.f32 %v4196, %v4197
    %v4199 = vrot.slane %v4198, 4
    %v4200 = vadd.f32 %v4198, %v4199
    %v4201 = vrot.slane %v4200, 2
    %v4202 = vadd.f32 %v4200, %v4201
    %v4203 = vrot.slane %v4202, 1
    %v4204 = vadd.f32 %v4202, %v4203
    %v4205 = vsel %vm2655, %v3781, 0.0
    %v4206 = vsel %vm2655, %v3917, 0.0
    %v4207 = vadd.f32 %v4205, %v4206
    %v4208 = vrot.slane %v4207, 4
    %v4209 = vadd.f32 %v4207, %v4208
    %v4210 = vrot.slane %v4209, 2
    %v4211 = vadd.f32 %v4209, %v4210
    %v4212 = vrot.slane %v4211, 1
    %v4213 = vadd.f32 %v4211, %v4212
    %v4214 = vsel %vm2655, %v3782, 0.0
    %v4215 = vsel %vm2655, %v3918, 0.0
    %v4216 = vadd.f32 %v4214, %v4215
    %v4217 = vrot.slane %v4216, 4
    %v4218 = vadd.f32 %v4216, %v4217
    %v4219 = vrot.slane %v4218, 2
    %v4220 = vadd.f32 %v4218, %v4219
    %v4221 = vrot.slane %v4220, 1
    %v4222 = vadd.f32 %v4220, %v4221
    %v4223 = vsel %vm2655, %v3783, 0.0
    %v4224 = vsel %vm2655, %v3919, 0.0
    %v4225 = vadd.f32 %v4223, %v4224
    %v4226 = vrot.slane %v4225, 4
    %v4227 = vadd.f32 %v4225, %v4226
    %v4228 = vrot.slane %v4227, 2
    %v4229 = vadd.f32 %v4227, %v4228
    %v4230 = vrot.slane %v4229, 1
    %v4231 = vadd.f32 %v4229, %v4230
    %v4232 = vsel %vm2655, %v3784, 0.0
    %v4233 = vsel %vm2655, %v3920, 0.0
    %v4234 = vadd.f32 %v4232, %v4233
    %v4235 = vrot.slane %v4234, 4
    %v4236 = vadd.f32 %v4234, %v4235
    %v4237 = vrot.slane %v4236, 2
    %v4238 = vadd.f32 %v4236, %v4237
    %v4239 = vrot.slane %v4238, 1
    %v4240 = vadd.f32 %v4238, %v4239
    %v4241 = vsel %vm2655, %v3785, 0.0
    %v4242 = vsel %vm2655, %v3921, 0.0
    %v4243 = vadd.f32 %v4241, %v4242
    %v4244 = vrot.slane %v4243, 4
    %v4245 = vadd.f32 %v4243, %v4244
    %v4246 = vrot.slane %v4245, 2
    %v4247 = vadd.f32 %v4245, %v4246
    %v4248 = vrot.slane %v4247, 1
    %v4249 = vadd.f32 %v4247, %v4248
    %v4250 = vsel %vm2655, %v3786, 0.0
    %v4251 = vsel %vm2655, %v3922, 0.0
    %v4252 = vadd.f32 %v4250, %v4251
    %v4253 = vrot.slane %v4252, 4
    %v4254 = vadd.f32 %v4252, %v4253
    %v4255 = vrot.slane %v4254, 2
    %v4256 = vadd.f32 %v4254, %v4255
    %v4257 = vrot.slane %v4256, 1
    %v4258 = vadd.f32 %v4256, %v4257
    %v4259 = vsel %vm2655, %v3787, 0.0
    %v4260 = vsel %vm2655, %v3923, 0.0
    %v4261 = vadd.f32 %v4259, %v4260
    %v4262 = vrot.slane %v4261, 4
    %v4263 = vadd.f32 %v4261, %v4262
    %v4264 = vrot.slane %v4263, 2
    %v4265 = vadd.f32 %v4263, %v4264
    %v4266 = vrot.slane %v4265, 1
    %v4267 = vadd.f32 %v4265, %v4266
    %v4268 = vsel %vm2655, %v4052, 0.0
    %v4269 = vsel %vm2655, %v4188, 0.0
    %v4270 = vadd.f32 %v4268, %v4269
    %v4271 = vrot.slane %v4270, 4
    %v4272 = vadd.f32 %v4270, %v4271
    %v4273 = vrot.slane %v4272, 2
    %v4274 = vadd.f32 %v4272, %v4273
    %v4275 = vrot.slane %v4274, 1
    %v4276 = vadd.f32 %v4274, %v4275
    %v4277 = vsel %vm2655, %v4053, 0.0
    %v4278 = vsel %vm2655, %v4189, 0.0
    %v4279 = vadd.f32 %v4277, %v4278
    %v4280 = vrot.slane %v4279, 4
    %v4281 = vadd.f32 %v4279, %v4280
    %v4282 = vrot.slane %v4281, 2
    %v4283 = vadd.f32 %v4281, %v4282
    %v4284 = vrot.slane %v4283, 1
    %v4285 = vadd.f32 %v4283, %v4284
    %v4286 = vsel %vm2655, %v4054, 0.0
    %v4287 = vsel %vm2655, %v4190, 0.0
    %v4288 = vadd.f32 %v4286, %v4287
    %v4289 = vrot.slane %v4288, 4
    %v4290 = vadd.f32 %v4288, %v4289
    %v4291 = vrot.slane %v4290, 2
    %v4292 = vadd.f32 %v4290, %v4291
    %v4293 = vrot.slane %v4292, 1
    %v4294 = vadd.f32 %v4292, %v4293
    %v4295 = vsel %vm2655, %v4055, 0.0
    %v4296 = vsel %vm2655, %v4191, 0.0
    %v4297 = vadd.f32 %v4295, %v4296
    %v4298 = vrot.slane %v4297, 4
    %v4299 = vadd.f32 %v4297, %v4298
    %v4300 = vrot.slane %v4299, 2
    %v4301 = vadd.f32 %v4299, %v4300
    %v4302 = vrot.slane %v4301, 1
    %v4303 = vadd.f32 %v4301, %v4302
    %v4304 = vsel %vm2655, %v4056, 0.0
    %v4305 = vsel %vm2655, %v4192, 0.0
    %v4306 = vadd.f32 %v4304, %v4305
    %v4307 = vrot.slane %v4306, 4
    %v4308 = vadd.f32 %v4306, %v4307
    %v4309 = vrot.slane %v4308, 2
    %v4310 = vadd.f32 %v4308, %v4309
    %v4311 = vrot.slane %v4310, 1
    %v4312 = vadd.f32 %v4310, %v4311
    %v4313 = vsel %vm2655, %v4057, 0.0
    %v4314 = vsel %vm2655, %v4193, 0.0
    %v4315 = vadd.f32 %v4313, %v4314
    %v4316 = vrot.slane %v4315, 4
    %v4317 = vadd.f32 %v4315, %v4316
    %v4318 = vrot.slane %v4317, 2
    %v4319 = vadd.f32 %v4317, %v4318
    %v4320 = vrot.slane %v4319, 1
    %v4321 = vadd.f32 %v4319, %v4320
    %v4322 = vsel %vm2655, %v4058, 0.0
    %v4323 = vsel %vm2655, %v4194, 0.0
    %v4324 = vadd.f32 %v4322, %v4323
    %v4325 = vrot.slane %v4324, 4
    %v4326 = vadd.f32 %v4324, %v4325
    %v4327 = vrot.slane %v4326, 2
    %v4328 = vadd.f32 %v4326, %v4327
    %v4329 = vrot.slane %v4328, 1
    %v4330 = vadd.f32 %v4328, %v4329
    %v4331 = vsel %vm2655, %v4059, 0.0
    %v4332 = vsel %vm2655, %v4195, 0.0
    %v4333 = vadd.f32 %v4331, %v4332
    %v4334 = vrot.slane %v4333, 4
    %v4335 = vadd.f32 %v4333, %v4334
    %v4336 = vrot.slane %v4335, 2
    %v4337 = vadd.f32 %v4335, %v4336
    %v4338 = vrot.slane %v4337, 1
    %v4339 = vadd.f32 %v4337, %v4338
    %vm4356 = vcmask 1041409
    %v4357 = vsel %vm4356, %v4213, %v4204
    %vm4358 = vcmask 1042434
    %v4359 = vsel %vm4358, %v4222, %v4357
    %vm4360 = vcmask 1043459
    %v4361 = vsel %vm4360, %v4231, %v4359
    %vm4362 = vcmask 1044484
    %v4363 = vsel %vm4362, %v4240, %v4361
    %vm4364 = vcmask 1045509
    %v4365 = vsel %vm4364, %v4249, %v4363
    %vm4366 = vcmask 1046534
    %v4367 = vsel %vm4366, %v4258, %v4365
    %vm4368 = vcmask 1047559
    %v4369 = vsel %vm4368, %v4267, %v4367
    %v4370 = vsel %vm4356, %v4285, %v4276
    %v4371 = vsel %vm4358, %v4294, %v4370
    %v4372 = vsel %vm4360, %v4303, %v4371
    %v4373 = vsel %vm4362, %v4312, %v4372
    %v4374 = vsel %vm4364, %v4321, %v4373
    %v4375 = vsel %vm4366, %v4330, %v4374
    %v4376 = vsel %vm4368, %v4339, %v4375
    %v4379 = vcombine.high %v4369, 0.0
    %v4381 = vunpack.c.l.s4 1983009808
    %v4382 = vunpack.c.0.s8 %v4381
    %v4383 = vlaneseq
    %v4384 = vshrl.u32 %v4383, 7
    %v4385 = vsub.s32 %v4382, %v4384
    %v4386 = vrot.slane %v4369, %v4385
    %v4388 = vunpack.c.l.s4 1983009808
    %v4389 = vunpack.c.0.s8 %v4388
    %v4390 = vlaneseq
    %v4391 = vshrl.u32 %v4390, 7
    %v4392 = vsub.s32 %v4389, %v4391
    %v4393 = vrot.slane %v4379, %v4392
    %v4394 = vcombine.high %v4376, 0.0
    %v4396 = vunpack.c.l.s4 1983009808
    %v4397 = vunpack.c.0.s8 %v4396
    %v4398 = vlaneseq
    %v4399 = vshrl.u32 %v4398, 7
    %v4400 = vsub.s32 %v4397, %v4399
    %v4401 = vrot.slane %v4376, %v4400
    %v4403 = vunpack.c.l.s4 1983009808
    %v4404 = vunpack.c.0.s8 %v4403
    %v4405 = vlaneseq
    %v4406 = vshrl.u32 %v4405, 7
    %v4407 = vsub.s32 %v4404, %v4406
    %v4408 = vrot.slane %v4394, %v4407
    %v4409 = vcombine.low %v4386, %v4401
    %v4410 = vcombine.high %v4386, %v4401
    %v4412 = vunpack.c.l.s4 1934713408
    %v4413 = vunpack.c.0.s8 %v4412
    %v4414 = vlaneseq
    %v4415 = vshrl.u32 %v4414, 7
    %v4416 = vsub.s32 %v4413, %v4415
    %v4417 = vrot.slane %v4409, %v4416
    %v4419 = vunpack.c.l.s4 1934713408
    %v4420 = vunpack.c.0.s8 %v4419
    %v4421 = vlaneseq
    %v4422 = vshrl.u32 %v4421, 7
    %v4423 = vsub.s32 %v4420, %v4422
    %v4424 = vrot.slane %v4410, %v4423
    %v4425 = vcombine.low %v4393, %v4408
    %v4426 = vcombine.high %v4393, %v4408
    %v4428 = vunpack.c.l.s4 1934713408
    %v4429 = vunpack.c.0.s8 %v4428
    %v4430 = vlaneseq
    %v4431 = vshrl.u32 %v4430, 7
    %v4432 = vsub.s32 %v4429, %v4431
    %v4433 = vrot.slane %v4425, %v4432
    %v4435 = vunpack.c.l.s4 1934713408
    %v4436 = vunpack.c.0.s8 %v4435
    %v4437 = vlaneseq
    %v4438 = vshrl.u32 %v4437, 7
    %v4439 = vsub.s32 %v4436, %v4438
    %v4440 = vrot.slane %v4426, %v4439
    %v4441 = vcombine.high %v4417, 0.0
    %v4442 = vcombine.high %v4424, 0.0
    %v4443 = vcombine.high %v4433, 0.0
    %v4444 = vcombine.high %v4440, 0.0
    %4446 = vrot.lane.b32.xlu0 %v4441, 16
    %v4447 = vpop.permute.xlu0 %4446
    %4450 = vrot.lane.b32.xlu0 %v4424, 32
    %v4451 = vpop.permute.xlu0 %4450
    %4454 = vrot.lane.b32.xlu0 %v4442, 48
    %v4455 = vpop.permute.xlu0 %4454
    %4458 = vrot.lane.b32.xlu0 %v4433, 64
    %v4459 = vpop.permute.xlu0 %4458
    %4462 = vrot.lane.b32.xlu0 %v4443, 80
    %v4463 = vpop.permute.xlu0 %4462
    %4466 = vrot.lane.b32.xlu0 %v4440, 96
    %v4467 = vpop.permute.xlu0 %4466
    %4470 = vrot.lane.b32.xlu0 %v4444, 112
    %v4471 = vpop.permute.xlu0 %4470
    %v4473 = vsel %vm2655, %v4417, %v4447
    %v4474 = vsel %vm61, %v4473, %v4451
    %v4475 = vsel %vm2660, %v4474, %v4455
    %v4476 = vsel %vm2663, %v4475, %v4459
    %v4477 = vsel %vm2666, %v4476, %v4463
    %v4478 = vsel %vm2669, %v4477, %v4467
    %v4479 = vsel %vm2672, %v4478, %v4471
    %4480 = vst [vmem:[#allocation2] sm:$0x3] %v4479
    // Predicated region
    $region18: #{tpu_custom_call.1} parent=1 // pred_check
      _
    $region19: #{tpu_custom_call.1} parent=1 // pred_check_branch
      %4482 = sbr.rel (0) target = $region21
    $region20: #{tpu_custom_call.1} parent=1 // pred_region
      %s4484 = ssub.s32 32, 32
      %4485 = vsyncadd [#allocation3], %s4484
      %s4487 = sshll.u32 [#allocation2], 4
      %s4488 = int_to_ptr.vmem [resolvable:$true] %s4487
      %4490 = dma.vmem_to_hbm [thread:$0]  %s4488, 32, %s4, [#allocation3]
    $region21: #{tpu_custom_call.1} parent=1 // pred_fallthru
      _
    // Predicated region
    $region22: #{tpu_custom_call.1} parent=1 // pred_check
      _
    $region23: #{tpu_custom_call.1} parent=1 // pred_check_branch
      %4492 = sbr.rel (0) target = $region25
    $region24: #{tpu_custom_call.1} parent=1 // pred_region
      %4493 = dma.done [#allocation3], 32
    $region25: #{tpu_custom_call.1} parent=1 // pred_fallthru
      _
    %4494 = vsyncpa [#allocation3], 1

</llo_original>
